<compile_context>
chip_gen: v5e
topology: v5e:2x2
jax: 0.10.0
libtpu: 0.0.40
codegen_flags: <defaults>
</compile_context>

<pallas_src>
import functools

import jax
import jax.numpy as jnp
from jax import lax
from jax.experimental import pallas as pl
from jax.experimental.pallas import tpu as pltpu

EPS = 1e-5  # PyTorch InstanceNorm2d default eps


def _instance_norm(a, axis):
  """Two-pass per-channel normalization over `axis` (f32 in, f32 out)."""
  mean = jnp.mean(a, axis=axis, keepdims=True)
  d = a - mean
  var = jnp.mean(d * d, axis=axis, keepdims=True)
  return d * lax.rsqrt(var + EPS)


# ----------------------------- conv helpers ---------------------------------
# ap is a reflection-padded activation tile (H+2, W+2, Cin) in the MXU dtype.
# "_sc" variants return (H*W, Cout)  (spatial on sublanes -> free reshape to
#       (H, W, C) for the next reflection pad).
# "_cs" variants return (Cout, H*W)  (spatial on lanes -> lane-dense stores).

def _conv3x3_taps_sc(ap, w_tap, H, W):
  """9 accumulating MXU dots; w_tap: (9, Cin, Cout). No lane-axis concats."""
  cin = ap.shape[-1]
  acc = None
  for t in range(9):
    kh, kw = divmod(t, 3)
    tap = ap[kh:kh + H, kw:kw + W, :].reshape(H * W, cin)
    p = jnp.dot(tap, w_tap[t], preferred_element_type=jnp.float32)
    acc = p if acc is None else acc + p
  return acc


def _conv3x3_taps_cs(ap, w_tap, H, W):
  """9 accumulating MXU dots, lane-dense output; w_tap: (9, Cout, Cin)."""
  cin = ap.shape[-1]
  dn = (((1,), (1,)), ((), ()))          # contract Cin of both operands
  acc = None
  for t in range(9):
    kh, kw = divmod(t, 3)
    tap = ap[kh:kh + H, kw:kw + W, :].reshape(H * W, cin)
    p = lax.dot_general(w_tap[t], tap, dn, preferred_element_type=jnp.float32)
    acc = p if acc is None else acc + p
  return acc


def _im2col_slab(ap, H, W):
  """(H*W, 9*Cin) im2col slab; lane concats are free iff Cin % 128 == 0."""
  cin = ap.shape[-1]
  cols = jnp.concatenate(
      [ap[:, 0:W, :], ap[:, 1:W + 1, :], ap[:, 2:W + 2, :]], axis=2)
  slab = jnp.concatenate([cols[0:H], cols[1:H + 1], cols[2:H + 2]], axis=2)
  return slab.reshape(H * W, 9 * cin)


def _conv3x3_concat_sc(ap, w_flat, H, W):
  """Single big-K matmul; w_flat: (9*Cin, Cout) -> (H*W, Cout)."""
  return jnp.dot(_im2col_slab(ap, H, W), w_flat,
                 preferred_element_type=jnp.float32)


def _conv3x3_concat_cs(ap, w_flat_t, H, W):
  """Single big-K matmul, lane-dense; w_flat_t: (Cout, 9*Cin) -> (Cout, H*W)."""
  dn = (((1,), (1,)), ((), ()))
  return lax.dot_general(w_flat_t, _im2col_slab(ap, H, W), dn,
                         preferred_element_type=jnp.float32)


# --------------------------------- kernel -----------------------------------
def residual_block_kernel(xp_ref, xcf_ref, w1_ref, w2_ref, o_ref,
                          *, H, W, lane_concat):
  mm = xp_ref.dtype
  ap = xp_ref[0]                                   # (H+2, W+2, C), MXU dtype

  # conv1 -> (H*W, C) f32 (spatial on sublanes; bias cancels under IN)
  if lane_concat:
    h = _conv3x3_concat_sc(ap, w1_ref[...], H, W)
  else:
    h = _conv3x3_taps_sc(ap, w1_ref[...], H, W)

  # InstanceNorm over spatial (axis 0) + ReLU, then ONE cast to the MXU dtype
  h = jnp.maximum(_instance_norm(h, axis=0), 0.0)
  C = h.shape[-1]
  h3 = h.astype(mm).reshape(H, W, C)

  # reflection-pad the intermediate (axis 0 = major, axis 1 = sublane concats;
  # no lane-axis concatenation involved)
  hp = jnp.concatenate([h3[1:2], h3, h3[H - 2:H - 1]], axis=0)
  hp = jnp.concatenate([hp[:, 1:2, :], hp, hp[:, W - 2:W - 1, :]], axis=1)

  # conv2 -> (C, H*W) f32: weight-stationary, spatial axis on lanes
  if lane_concat:
    h2 = _conv3x3_concat_cs(hp, w2_ref[...], H, W)
  else:
    h2 = _conv3x3_taps_cs(hp, w2_ref[...], H, W)
  h2 = _instance_norm(h2, axis=1)

  # residual add from the channels-first f32 view of x; lane-dense store
  o_ref[0] = (xcf_ref[0].astype(jnp.float32) + h2).astype(o_ref.dtype)


# -------------------------------- wrapper ------------------------------------
def _vmem_limit_bytes(H, W, C, x_bytes, mm_bytes):
  pad = (H + 2) * (W + 2) * C
  hw = H * W * C
  est = (2 * pad * mm_bytes            # double-buffered padded input block
         + 2 * hw * x_bytes            # double-buffered channels-first x block
         + 2 * hw * x_bytes            # double-buffered output block
         + 4 * 9 * C * C * mm_bytes    # two weight operands, double-buffered
         + 3 * pad * mm_bytes          # padded intermediate + concat temps
         + 9 * hw * mm_bytes           # live tap slices / slab (worst case)
         + 6 * hw * 4)                 # h, h2, IN temporaries, residual (f32)
  est = 2 * est                        # headroom for compiler temporaries
  try:
    info = pltpu.get_tpu_info()
    cap = int(getattr(info, "vmem_capacity_bytes", 0)) or 128 * 1024 * 1024
  except Exception:                    # pragma: no cover - non-TPU fallback
    cap = 128 * 1024 * 1024
  return int(min(max(est, 32 * 1024 * 1024), int(0.85 * cap)))


def residual_block(x_nchw, w1, b1, w2, b2, *, matmul_dtype=jnp.bfloat16):
  """NCHW (PyTorch-layout) residual block. b1/b2 accepted for interface parity
  but are mathematically cancelled by InstanceNorm2d(affine=False)."""
  del b1, b2
  N, C, H, W = x_nchw.shape
  mm = jnp.dtype(matmul_dtype)
  lane_concat = (C % 128 == 0)

  # conv input: reflection-padded NHWC, cast to the MXU dtype once in HBM.
  x_nhwc = jnp.transpose(x_nchw, (0, 2, 3, 1))
  xp = jnp.pad(x_nhwc, ((0, 0), (1, 1), (1, 1), (0, 0)),
               mode="reflect").astype(mm)
  # residual / output-layout input: channels-first, spatial flattened on lanes.
  x_cf = x_nchw.reshape(N, C, H * W)

  if lane_concat:
    # (Cout, Cin, kh, kw) -> (9*Cin, Cout) and (Cout, 9*Cin), col order (kh,kw,cin)
    w1_k = jnp.transpose(w1, (2, 3, 1, 0)).reshape(9 * C, C).astype(mm)
    w2_k = jnp.transpose(w2, (0, 2, 3, 1)).reshape(C, 9 * C).astype(mm)
    w_specs = [pl.BlockSpec((9 * C, C), lambda n: (0, 0)),
               pl.BlockSpec((C, 9 * C), lambda n: (0, 0))]
  else:
    # per-tap weights: w1 (9, Cin, Cout); w2 (9, Cout, Cin)
    w1_k = jnp.transpose(w1, (2, 3, 1, 0)).reshape(9, C, C).astype(mm)
    w2_k = jnp.transpose(w2, (2, 3, 0, 1)).reshape(9, C, C).astype(mm)
    w_specs = [pl.BlockSpec((9, C, C), lambda n: (0, 0, 0)),
               pl.BlockSpec((9, C, C), lambda n: (0, 0, 0))]

  limit = _vmem_limit_bytes(H, W, C, x_nchw.dtype.itemsize, mm.itemsize)
  kernel = functools.partial(residual_block_kernel,
                             H=H, W=W, lane_concat=lane_concat)

  out = pl.pallas_call(
      kernel,
      out_shape=jax.ShapeDtypeStruct((N, C, H * W), x_nchw.dtype),
      grid_spec=pltpu.PrefetchScalarGridSpec(
          num_scalar_prefetch=0,
          grid=(N,),
          in_specs=[
              pl.BlockSpec((1, H + 2, W + 2, C), lambda n: (n, 0, 0, 0)),
              pl.BlockSpec((1, C, H * W), lambda n: (n, 0, 0)),
          ] + w_specs,
          out_specs=pl.BlockSpec((1, C, H * W), lambda n: (n, 0, 0)),
      ),
      compiler_params=pltpu.CompilerParams(
          dimension_semantics=("parallel",),
          vmem_limit_bytes=limit),
  )(xp, x_cf, w1_k, w2_k)
  # free reshape: the kernel already produced the NCHW layout (lane-dense).
  return out.reshape(N, C, H, W)


# ---------------- pure-JAX reference (for correctness check) ----------------
def _ref_instance_norm(x_nchw):
  mean = jnp.mean(x_nchw, axis=(2, 3), keepdims=True)
  var = jnp.mean((x_nchw - mean) ** 2, axis=(2, 3), keepdims=True)
  return (x_nchw - mean) * lax.rsqrt(var + EPS)


def _ref_conv_reflect(x_nchw, w, b):
  xp = jnp.pad(x_nchw, ((0, 0), (0, 0), (1, 1), (1, 1)), mode="reflect")
  y = lax.conv_general_dilated(
      xp, w, window_strides=(1, 1), padding="VALID",
      dimension_numbers=("NCHW", "OIHW", "NCHW"))
  return y + b[None, :, None, None]


def residual_block_ref(x, w1, b1, w2, b2):
  h = _ref_conv_reflect(x, w1, b1)
  h = jnp.maximum(_ref_instance_norm(h), 0.0)
  h = _ref_conv_reflect(h, w2, b2)
  h = _ref_instance_norm(h)
  return x + h


if __name__ == "__main__":
  key = jax.random.PRNGKey(0)
  N, C, H, W = 2, 4, 16, 16

  k_x, k_w1, k_b1, k_w2, k_b2 = jax.random.split(key, 5)
  x = jax.random.normal(k_x, (N, C, H, W), dtype=jnp.float32)
  w1 = jax.random.normal(k_w1, (C, C, 3, 3), dtype=jnp.float32) * 0.1
  b1 = jax.random.normal(k_b1, (C,), dtype=jnp.float32) * 0.1
  w2 = jax.random.normal(k_w2, (C, C, 3, 3), dtype=jnp.float32) * 0.1
  b2 = jax.random.normal(k_b2, (C,), dtype=jnp.float32) * 0.1

  ref = residual_block_ref(x, w1, b1, w2, b2)

  # f32 MXU path: tight check against the f32 reference (also validates that
  # dropping the conv biases is exact under InstanceNorm).
  out_f32 = jax.block_until_ready(
      jax.jit(functools.partial(residual_block, matmul_dtype=jnp.float32))(
          x, w1, b1, w2, b2))
  assert out_f32.shape == (N, C, H, W)
  err32 = float(jnp.max(jnp.abs(out_f32 - ref)))
  assert jnp.allclose(out_f32, ref, atol=1e-4, rtol=1e-4), err32

  # Default bf16-MXU path: looser tolerance appropriate for bf16 matmul inputs.
  out_bf16 = jax.block_until_ready(
      jax.jit(residual_block)(x, w1, b1, w2, b2))
  errbf = float(jnp.max(jnp.abs(out_bf16 - ref)))
  assert jnp.allclose(out_bf16, ref, atol=7.5e-2, rtol=5e-2), errbf

  print("KERNEL_OK")
</pallas_src>

<mosaic_0001>
module attributes {stable_mosaic.version = 11 : i64} {
  func.func @residual_block_kernel(%arg0: i32, %arg1: memref<1x18x18x4xf32, #tpu.memory_space<vmem>>, %arg2: memref<1x4x256xf32, #tpu.memory_space<vmem>>, %arg3: memref<9x4x4xf32, #tpu.memory_space<vmem>>, %arg4: memref<9x4x4xf32, #tpu.memory_space<vmem>>, %arg5: memref<1x4x256xf32, #tpu.memory_space<vmem>>) attributes {dimension_semantics = [#tpu.dimension_semantics<parallel>], iteration_bounds = array<i64: 2>, scalar_prefetch = 0 : i64, scratch_operands = 0 : i64, tpu.core_type = #tpu.core_type<tc>, window_params = [{transform_indices = @transform_0, window_bounds = array<i64: 1, 18, 18, 4>}, {transform_indices = @transform_1, window_bounds = array<i64: 1, 4, 256>}, {pipeline_mode = #tpu.pipeline_mode<synchronous>, transform_indices = @transform_2, window_bounds = array<i64: 9, 4, 4>}, {pipeline_mode = #tpu.pipeline_mode<synchronous>, transform_indices = @transform_3, window_bounds = array<i64: 9, 4, 4>}, {transform_indices = @transform_4, window_bounds = array<i64: 1, 4, 256>}]} {
    %c0 = arith.constant 0 : index
    %c0_0 = arith.constant 0 : index
    %c0_1 = arith.constant 0 : index
    %c0_2 = arith.constant 0 : index
    %0 = vector.load %arg1[%c0, %c0_0, %c0_1, %c0_2] : memref<1x18x18x4xf32, #tpu.memory_space<vmem>>, vector<1x18x18x4xf32>
    %1 = vector.shape_cast %0 : vector<1x18x18x4xf32> to vector<18x18x4xf32>
    %c0_3 = arith.constant 0 : index
    %c0_4 = arith.constant 0 : index
    %c0_5 = arith.constant 0 : index
    %2 = vector.load %arg3[%c0_3, %c0_4, %c0_5] : memref<9x4x4xf32, #tpu.memory_space<vmem>>, vector<9x4x4xf32>
    %3 = vector.extract_strided_slice %1 {offsets = [0, 0, 0], sizes = [16, 16, 4], strides = [1, 1, 1]} : vector<18x18x4xf32> to vector<16x16x4xf32>
    %4 = vector.shape_cast %3 : vector<16x16x4xf32> to vector<256x4xf32>
    %5 = vector.extract_strided_slice %2 {offsets = [0, 0, 0], sizes = [1, 4, 4], strides = [1, 1, 1]} : vector<9x4x4xf32> to vector<1x4x4xf32>
    %6 = vector.shape_cast %5 : vector<1x4x4xf32> to vector<4x4xf32>
    %cst = arith.constant dense<0.000000e+00> : vector<256x4xf32>
    %7 = tpu.matmul %4, %6, %cst {dimension_numbers = #tpu.dot_dimension_numbers<[1], [0], [0], [1], [0, 0, 1, 1], [], []>} : vector<256x4xf32>, vector<4x4xf32>, vector<256x4xf32> -> vector<256x4xf32>
    %8 = vector.extract_strided_slice %1 {offsets = [0, 1, 0], sizes = [16, 16, 4], strides = [1, 1, 1]} : vector<18x18x4xf32> to vector<16x16x4xf32>
    %9 = vector.shape_cast %8 : vector<16x16x4xf32> to vector<256x4xf32>
    %10 = vector.extract_strided_slice %2 {offsets = [1, 0, 0], sizes = [1, 4, 4], strides = [1, 1, 1]} : vector<9x4x4xf32> to vector<1x4x4xf32>
    %11 = vector.shape_cast %10 : vector<1x4x4xf32> to vector<4x4xf32>
    %cst_6 = arith.constant dense<0.000000e+00> : vector<256x4xf32>
    %12 = tpu.matmul %9, %11, %cst_6 {dimension_numbers = #tpu.dot_dimension_numbers<[1], [0], [0], [1], [0, 0, 1, 1], [], []>} : vector<256x4xf32>, vector<4x4xf32>, vector<256x4xf32> -> vector<256x4xf32>
    %13 = arith.addf %7, %12 : vector<256x4xf32>
    %14 = vector.extract_strided_slice %1 {offsets = [0, 2, 0], sizes = [16, 16, 4], strides = [1, 1, 1]} : vector<18x18x4xf32> to vector<16x16x4xf32>
    %15 = vector.shape_cast %14 : vector<16x16x4xf32> to vector<256x4xf32>
    %16 = vector.extract_strided_slice %2 {offsets = [2, 0, 0], sizes = [1, 4, 4], strides = [1, 1, 1]} : vector<9x4x4xf32> to vector<1x4x4xf32>
    %17 = vector.shape_cast %16 : vector<1x4x4xf32> to vector<4x4xf32>
    %cst_7 = arith.constant dense<0.000000e+00> : vector<256x4xf32>
    %18 = tpu.matmul %15, %17, %cst_7 {dimension_numbers = #tpu.dot_dimension_numbers<[1], [0], [0], [1], [0, 0, 1, 1], [], []>} : vector<256x4xf32>, vector<4x4xf32>, vector<256x4xf32> -> vector<256x4xf32>
    %19 = arith.addf %13, %18 : vector<256x4xf32>
    %20 = vector.extract_strided_slice %1 {offsets = [1, 0, 0], sizes = [16, 16, 4], strides = [1, 1, 1]} : vector<18x18x4xf32> to vector<16x16x4xf32>
    %21 = vector.shape_cast %20 : vector<16x16x4xf32> to vector<256x4xf32>
    %22 = vector.extract_strided_slice %2 {offsets = [3, 0, 0], sizes = [1, 4, 4], strides = [1, 1, 1]} : vector<9x4x4xf32> to vector<1x4x4xf32>
    %23 = vector.shape_cast %22 : vector<1x4x4xf32> to vector<4x4xf32>
    %cst_8 = arith.constant dense<0.000000e+00> : vector<256x4xf32>
    %24 = tpu.matmul %21, %23, %cst_8 {dimension_numbers = #tpu.dot_dimension_numbers<[1], [0], [0], [1], [0, 0, 1, 1], [], []>} : vector<256x4xf32>, vector<4x4xf32>, vector<256x4xf32> -> vector<256x4xf32>
    %25 = arith.addf %19, %24 : vector<256x4xf32>
    %26 = vector.extract_strided_slice %1 {offsets = [1, 1, 0], sizes = [16, 16, 4], strides = [1, 1, 1]} : vector<18x18x4xf32> to vector<16x16x4xf32>
    %27 = vector.shape_cast %26 : vector<16x16x4xf32> to vector<256x4xf32>
    %28 = vector.extract_strided_slice %2 {offsets = [4, 0, 0], sizes = [1, 4, 4], strides = [1, 1, 1]} : vector<9x4x4xf32> to vector<1x4x4xf32>
    %29 = vector.shape_cast %28 : vector<1x4x4xf32> to vector<4x4xf32>
    %cst_9 = arith.constant dense<0.000000e+00> : vector<256x4xf32>
    %30 = tpu.matmul %27, %29, %cst_9 {dimension_numbers = #tpu.dot_dimension_numbers<[1], [0], [0], [1], [0, 0, 1, 1], [], []>} : vector<256x4xf32>, vector<4x4xf32>, vector<256x4xf32> -> vector<256x4xf32>
    %31 = arith.addf %25, %30 : vector<256x4xf32>
    %32 = vector.extract_strided_slice %1 {offsets = [1, 2, 0], sizes = [16, 16, 4], strides = [1, 1, 1]} : vector<18x18x4xf32> to vector<16x16x4xf32>
    %33 = vector.shape_cast %32 : vector<16x16x4xf32> to vector<256x4xf32>
    %34 = vector.extract_strided_slice %2 {offsets = [5, 0, 0], sizes = [1, 4, 4], strides = [1, 1, 1]} : vector<9x4x4xf32> to vector<1x4x4xf32>
    %35 = vector.shape_cast %34 : vector<1x4x4xf32> to vector<4x4xf32>
    %cst_10 = arith.constant dense<0.000000e+00> : vector<256x4xf32>
    %36 = tpu.matmul %33, %35, %cst_10 {dimension_numbers = #tpu.dot_dimension_numbers<[1], [0], [0], [1], [0, 0, 1, 1], [], []>} : vector<256x4xf32>, vector<4x4xf32>, vector<256x4xf32> -> vector<256x4xf32>
    %37 = arith.addf %31, %36 : vector<256x4xf32>
    %38 = vector.extract_strided_slice %1 {offsets = [2, 0, 0], sizes = [16, 16, 4], strides = [1, 1, 1]} : vector<18x18x4xf32> to vector<16x16x4xf32>
    %39 = vector.shape_cast %38 : vector<16x16x4xf32> to vector<256x4xf32>
    %40 = vector.extract_strided_slice %2 {offsets = [6, 0, 0], sizes = [1, 4, 4], strides = [1, 1, 1]} : vector<9x4x4xf32> to vector<1x4x4xf32>
    %41 = vector.shape_cast %40 : vector<1x4x4xf32> to vector<4x4xf32>
    %cst_11 = arith.constant dense<0.000000e+00> : vector<256x4xf32>
    %42 = tpu.matmul %39, %41, %cst_11 {dimension_numbers = #tpu.dot_dimension_numbers<[1], [0], [0], [1], [0, 0, 1, 1], [], []>} : vector<256x4xf32>, vector<4x4xf32>, vector<256x4xf32> -> vector<256x4xf32>
    %43 = arith.addf %37, %42 : vector<256x4xf32>
    %44 = vector.extract_strided_slice %1 {offsets = [2, 1, 0], sizes = [16, 16, 4], strides = [1, 1, 1]} : vector<18x18x4xf32> to vector<16x16x4xf32>
    %45 = vector.shape_cast %44 : vector<16x16x4xf32> to vector<256x4xf32>
    %46 = vector.extract_strided_slice %2 {offsets = [7, 0, 0], sizes = [1, 4, 4], strides = [1, 1, 1]} : vector<9x4x4xf32> to vector<1x4x4xf32>
    %47 = vector.shape_cast %46 : vector<1x4x4xf32> to vector<4x4xf32>
    %cst_12 = arith.constant dense<0.000000e+00> : vector<256x4xf32>
    %48 = tpu.matmul %45, %47, %cst_12 {dimension_numbers = #tpu.dot_dimension_numbers<[1], [0], [0], [1], [0, 0, 1, 1], [], []>} : vector<256x4xf32>, vector<4x4xf32>, vector<256x4xf32> -> vector<256x4xf32>
    %49 = arith.addf %43, %48 : vector<256x4xf32>
    %50 = vector.extract_strided_slice %1 {offsets = [2, 2, 0], sizes = [16, 16, 4], strides = [1, 1, 1]} : vector<18x18x4xf32> to vector<16x16x4xf32>
    %51 = vector.shape_cast %50 : vector<16x16x4xf32> to vector<256x4xf32>
    %52 = vector.extract_strided_slice %2 {offsets = [8, 0, 0], sizes = [1, 4, 4], strides = [1, 1, 1]} : vector<9x4x4xf32> to vector<1x4x4xf32>
    %53 = vector.shape_cast %52 : vector<1x4x4xf32> to vector<4x4xf32>
    %cst_13 = arith.constant dense<0.000000e+00> : vector<256x4xf32>
    %54 = tpu.matmul %51, %53, %cst_13 {dimension_numbers = #tpu.dot_dimension_numbers<[1], [0], [0], [1], [0, 0, 1, 1], [], []>} : vector<256x4xf32>, vector<4x4xf32>, vector<256x4xf32> -> vector<256x4xf32>
    %55 = arith.addf %49, %54 : vector<256x4xf32>
    %cst_14 = arith.constant dense<0.000000e+00> : vector<4xf32>
    %56 = vector.multi_reduction <add>, %55, %cst_14 [0] : vector<256x4xf32> to vector<4xf32>
    %57 = vector.shape_cast %56 : vector<4xf32> to vector<1x4xf32>
    %cst_15 = arith.constant 2.560000e+02 : f32
    %58 = vector.broadcast %cst_15 : f32 to vector<1x4xf32>
    %59 = arith.divf %57, %58 : vector<1x4xf32>
    %60 = vector.broadcast %59 : vector<1x4xf32> to vector<256x4xf32>
    %61 = arith.subf %55, %60 : vector<256x4xf32>
    %62 = arith.mulf %61, %61 : vector<256x4xf32>
    %cst_16 = arith.constant dense<0.000000e+00> : vector<4xf32>
    %63 = vector.multi_reduction <add>, %62, %cst_16 [0] : vector<256x4xf32> to vector<4xf32>
    %64 = vector.shape_cast %63 : vector<4xf32> to vector<1x4xf32>
    %cst_17 = arith.constant 2.560000e+02 : f32
    %65 = vector.broadcast %cst_17 : f32 to vector<1x4xf32>
    %66 = arith.divf %64, %65 : vector<1x4xf32>
    %cst_18 = arith.constant 9.99999974E-6 : f32
    %67 = vector.broadcast %cst_18 : f32 to vector<1x4xf32>
    %68 = arith.addf %66, %67 : vector<1x4xf32>
    %69 = math.rsqrt %68 : vector<1x4xf32>
    %70 = vector.broadcast %69 : vector<1x4xf32> to vector<256x4xf32>
    %71 = arith.mulf %61, %70 : vector<256x4xf32>
    %cst_19 = arith.constant 0.000000e+00 : f32
    %72 = vector.broadcast %cst_19 : f32 to vector<256x4xf32>
    %73 = arith.maximumf %71, %72 : vector<256x4xf32>
    %74 = vector.shape_cast %73 : vector<256x4xf32> to vector<16x16x4xf32>
    %75 = vector.extract_strided_slice %74 {offsets = [1, 0, 0], sizes = [1, 16, 4], strides = [1, 1, 1]} : vector<16x16x4xf32> to vector<1x16x4xf32>
    %76 = vector.extract_strided_slice %74 {offsets = [14, 0, 0], sizes = [1, 16, 4], strides = [1, 1, 1]} : vector<16x16x4xf32> to vector<1x16x4xf32>
    %77 = tpu.concatenate %75, %74, %76 in 0 : vector<1x16x4xf32>, vector<16x16x4xf32>, vector<1x16x4xf32> -> vector<18x16x4xf32>
    %78 = vector.extract_strided_slice %77 {offsets = [0, 1, 0], sizes = [18, 1, 4], strides = [1, 1, 1]} : vector<18x16x4xf32> to vector<18x1x4xf32>
    %79 = vector.extract_strided_slice %77 {offsets = [0, 14, 0], sizes = [18, 1, 4], strides = [1, 1, 1]} : vector<18x16x4xf32> to vector<18x1x4xf32>
    %80 = tpu.concatenate %78, %77, %79 in 1 : vector<18x1x4xf32>, vector<18x16x4xf32>, vector<18x1x4xf32> -> vector<18x18x4xf32>
    %c0_20 = arith.constant 0 : index
    %c0_21 = arith.constant 0 : index
    %c0_22 = arith.constant 0 : index
    %81 = vector.load %arg4[%c0_20, %c0_21, %c0_22] : memref<9x4x4xf32, #tpu.memory_space<vmem>>, vector<9x4x4xf32>
    %82 = vector.extract_strided_slice %80 {offsets = [0, 0, 0], sizes = [16, 16, 4], strides = [1, 1, 1]} : vector<18x18x4xf32> to vector<16x16x4xf32>
    %83 = vector.shape_cast %82 : vector<16x16x4xf32> to vector<256x4xf32>
    %84 = vector.extract_strided_slice %81 {offsets = [0, 0, 0], sizes = [1, 4, 4], strides = [1, 1, 1]} : vector<9x4x4xf32> to vector<1x4x4xf32>
    %85 = vector.shape_cast %84 : vector<1x4x4xf32> to vector<4x4xf32>
    %cst_23 = arith.constant dense<0.000000e+00> : vector<4x256xf32>
    %86 = tpu.matmul %85, %83, %cst_23 {dimension_numbers = #tpu.dot_dimension_numbers<[1], [1], [0], [0], [0, 0, 1, 0], [], []>} : vector<4x4xf32>, vector<256x4xf32>, vector<4x256xf32> -> vector<4x256xf32>
    %87 = vector.extract_strided_slice %80 {offsets = [0, 1, 0], sizes = [16, 16, 4], strides = [1, 1, 1]} : vector<18x18x4xf32> to vector<16x16x4xf32>
    %88 = vector.shape_cast %87 : vector<16x16x4xf32> to vector<256x4xf32>
    %89 = vector.extract_strided_slice %81 {offsets = [1, 0, 0], sizes = [1, 4, 4], strides = [1, 1, 1]} : vector<9x4x4xf32> to vector<1x4x4xf32>
    %90 = vector.shape_cast %89 : vector<1x4x4xf32> to vector<4x4xf32>
    %cst_24 = arith.constant dense<0.000000e+00> : vector<4x256xf32>
    %91 = tpu.matmul %90, %88, %cst_24 {dimension_numbers = #tpu.dot_dimension_numbers<[1], [1], [0], [0], [0, 0, 1, 0], [], []>} : vector<4x4xf32>, vector<256x4xf32>, vector<4x256xf32> -> vector<4x256xf32>
    %92 = arith.addf %86, %91 : vector<4x256xf32>
    %93 = vector.extract_strided_slice %80 {offsets = [0, 2, 0], sizes = [16, 16, 4], strides = [1, 1, 1]} : vector<18x18x4xf32> to vector<16x16x4xf32>
    %94 = vector.shape_cast %93 : vector<16x16x4xf32> to vector<256x4xf32>
    %95 = vector.extract_strided_slice %81 {offsets = [2, 0, 0], sizes = [1, 4, 4], strides = [1, 1, 1]} : vector<9x4x4xf32> to vector<1x4x4xf32>
    %96 = vector.shape_cast %95 : vector<1x4x4xf32> to vector<4x4xf32>
    %cst_25 = arith.constant dense<0.000000e+00> : vector<4x256xf32>
    %97 = tpu.matmul %96, %94, %cst_25 {dimension_numbers = #tpu.dot_dimension_numbers<[1], [1], [0], [0], [0, 0, 1, 0], [], []>} : vector<4x4xf32>, vector<256x4xf32>, vector<4x256xf32> -> vector<4x256xf32>
    %98 = arith.addf %92, %97 : vector<4x256xf32>
    %99 = vector.extract_strided_slice %80 {offsets = [1, 0, 0], sizes = [16, 16, 4], strides = [1, 1, 1]} : vector<18x18x4xf32> to vector<16x16x4xf32>
    %100 = vector.shape_cast %99 : vector<16x16x4xf32> to vector<256x4xf32>
    %101 = vector.extract_strided_slice %81 {offsets = [3, 0, 0], sizes = [1, 4, 4], strides = [1, 1, 1]} : vector<9x4x4xf32> to vector<1x4x4xf32>
    %102 = vector.shape_cast %101 : vector<1x4x4xf32> to vector<4x4xf32>
    %cst_26 = arith.constant dense<0.000000e+00> : vector<4x256xf32>
    %103 = tpu.matmul %102, %100, %cst_26 {dimension_numbers = #tpu.dot_dimension_numbers<[1], [1], [0], [0], [0, 0, 1, 0], [], []>} : vector<4x4xf32>, vector<256x4xf32>, vector<4x256xf32> -> vector<4x256xf32>
    %104 = arith.addf %98, %103 : vector<4x256xf32>
    %105 = vector.extract_strided_slice %80 {offsets = [1, 1, 0], sizes = [16, 16, 4], strides = [1, 1, 1]} : vector<18x18x4xf32> to vector<16x16x4xf32>
    %106 = vector.shape_cast %105 : vector<16x16x4xf32> to vector<256x4xf32>
    %107 = vector.extract_strided_slice %81 {offsets = [4, 0, 0], sizes = [1, 4, 4], strides = [1, 1, 1]} : vector<9x4x4xf32> to vector<1x4x4xf32>
    %108 = vector.shape_cast %107 : vector<1x4x4xf32> to vector<4x4xf32>
    %cst_27 = arith.constant dense<0.000000e+00> : vector<4x256xf32>
    %109 = tpu.matmul %108, %106, %cst_27 {dimension_numbers = #tpu.dot_dimension_numbers<[1], [1], [0], [0], [0, 0, 1, 0], [], []>} : vector<4x4xf32>, vector<256x4xf32>, vector<4x256xf32> -> vector<4x256xf32>
    %110 = arith.addf %104, %109 : vector<4x256xf32>
    %111 = vector.extract_strided_slice %80 {offsets = [1, 2, 0], sizes = [16, 16, 4], strides = [1, 1, 1]} : vector<18x18x4xf32> to vector<16x16x4xf32>
    %112 = vector.shape_cast %111 : vector<16x16x4xf32> to vector<256x4xf32>
    %113 = vector.extract_strided_slice %81 {offsets = [5, 0, 0], sizes = [1, 4, 4], strides = [1, 1, 1]} : vector<9x4x4xf32> to vector<1x4x4xf32>
    %114 = vector.shape_cast %113 : vector<1x4x4xf32> to vector<4x4xf32>
    %cst_28 = arith.constant dense<0.000000e+00> : vector<4x256xf32>
    %115 = tpu.matmul %114, %112, %cst_28 {dimension_numbers = #tpu.dot_dimension_numbers<[1], [1], [0], [0], [0, 0, 1, 0], [], []>} : vector<4x4xf32>, vector<256x4xf32>, vector<4x256xf32> -> vector<4x256xf32>
    %116 = arith.addf %110, %115 : vector<4x256xf32>
    %117 = vector.extract_strided_slice %80 {offsets = [2, 0, 0], sizes = [16, 16, 4], strides = [1, 1, 1]} : vector<18x18x4xf32> to vector<16x16x4xf32>
    %118 = vector.shape_cast %117 : vector<16x16x4xf32> to vector<256x4xf32>
    %119 = vector.extract_strided_slice %81 {offsets = [6, 0, 0], sizes = [1, 4, 4], strides = [1, 1, 1]} : vector<9x4x4xf32> to vector<1x4x4xf32>
    %120 = vector.shape_cast %119 : vector<1x4x4xf32> to vector<4x4xf32>
    %cst_29 = arith.constant dense<0.000000e+00> : vector<4x256xf32>
    %121 = tpu.matmul %120, %118, %cst_29 {dimension_numbers = #tpu.dot_dimension_numbers<[1], [1], [0], [0], [0, 0, 1, 0], [], []>} : vector<4x4xf32>, vector<256x4xf32>, vector<4x256xf32> -> vector<4x256xf32>
    %122 = arith.addf %116, %121 : vector<4x256xf32>
    %123 = vector.extract_strided_slice %80 {offsets = [2, 1, 0], sizes = [16, 16, 4], strides = [1, 1, 1]} : vector<18x18x4xf32> to vector<16x16x4xf32>
    %124 = vector.shape_cast %123 : vector<16x16x4xf32> to vector<256x4xf32>
    %125 = vector.extract_strided_slice %81 {offsets = [7, 0, 0], sizes = [1, 4, 4], strides = [1, 1, 1]} : vector<9x4x4xf32> to vector<1x4x4xf32>
    %126 = vector.shape_cast %125 : vector<1x4x4xf32> to vector<4x4xf32>
    %cst_30 = arith.constant dense<0.000000e+00> : vector<4x256xf32>
    %127 = tpu.matmul %126, %124, %cst_30 {dimension_numbers = #tpu.dot_dimension_numbers<[1], [1], [0], [0], [0, 0, 1, 0], [], []>} : vector<4x4xf32>, vector<256x4xf32>, vector<4x256xf32> -> vector<4x256xf32>
    %128 = arith.addf %122, %127 : vector<4x256xf32>
    %129 = vector.extract_strided_slice %80 {offsets = [2, 2, 0], sizes = [16, 16, 4], strides = [1, 1, 1]} : vector<18x18x4xf32> to vector<16x16x4xf32>
    %130 = vector.shape_cast %129 : vector<16x16x4xf32> to vector<256x4xf32>
    %131 = vector.extract_strided_slice %81 {offsets = [8, 0, 0], sizes = [1, 4, 4], strides = [1, 1, 1]} : vector<9x4x4xf32> to vector<1x4x4xf32>
    %132 = vector.shape_cast %131 : vector<1x4x4xf32> to vector<4x4xf32>
    %cst_31 = arith.constant dense<0.000000e+00> : vector<4x256xf32>
    %133 = tpu.matmul %132, %130, %cst_31 {dimension_numbers = #tpu.dot_dimension_numbers<[1], [1], [0], [0], [0, 0, 1, 0], [], []>} : vector<4x4xf32>, vector<256x4xf32>, vector<4x256xf32> -> vector<4x256xf32>
    %134 = arith.addf %128, %133 : vector<4x256xf32>
    %cst_32 = arith.constant dense<0.000000e+00> : vector<4xf32>
    %135 = vector.multi_reduction <add>, %134, %cst_32 [1] : vector<4x256xf32> to vector<4xf32>
    %136 = vector.shape_cast %135 : vector<4xf32> to vector<4x1xf32>
    %cst_33 = arith.constant 2.560000e+02 : f32
    %137 = vector.broadcast %cst_33 : f32 to vector<4x1xf32>
    %138 = arith.divf %136, %137 : vector<4x1xf32>
    %139 = vector.broadcast %138 : vector<4x1xf32> to vector<4x256xf32>
    %140 = arith.subf %134, %139 : vector<4x256xf32>
    %141 = arith.mulf %140, %140 : vector<4x256xf32>
    %cst_34 = arith.constant dense<0.000000e+00> : vector<4xf32>
    %142 = vector.multi_reduction <add>, %141, %cst_34 [1] : vector<4x256xf32> to vector<4xf32>
    %143 = vector.shape_cast %142 : vector<4xf32> to vector<4x1xf32>
    %cst_35 = arith.constant 2.560000e+02 : f32
    %144 = vector.broadcast %cst_35 : f32 to vector<4x1xf32>
    %145 = arith.divf %143, %144 : vector<4x1xf32>
    %cst_36 = arith.constant 9.99999974E-6 : f32
    %146 = vector.broadcast %cst_36 : f32 to vector<4x1xf32>
    %147 = arith.addf %145, %146 : vector<4x1xf32>
    %148 = math.rsqrt %147 : vector<4x1xf32>
    %149 = vector.broadcast %148 : vector<4x1xf32> to vector<4x256xf32>
    %150 = arith.mulf %140, %149 : vector<4x256xf32>
    %c0_37 = arith.constant 0 : index
    %c0_38 = arith.constant 0 : index
    %c0_39 = arith.constant 0 : index
    %151 = vector.load %arg2[%c0_37, %c0_38, %c0_39] : memref<1x4x256xf32, #tpu.memory_space<vmem>>, vector<1x4x256xf32>
    %152 = vector.shape_cast %151 : vector<1x4x256xf32> to vector<4x256xf32>
    %153 = arith.addf %152, %150 : vector<4x256xf32>
    %c0_40 = arith.constant 0 : index
    %c0_41 = arith.constant 0 : index
    %c0_42 = arith.constant 0 : index
    %154 = vector.load %arg5[%c0_40, %c0_41, %c0_42] : memref<1x4x256xf32, #tpu.memory_space<vmem>>, vector<1x4x256xf32>
    %155 = vector.shape_cast %154 : vector<1x4x256xf32> to vector<4x256xf32>
    %156 = vector.shape_cast %153 : vector<4x256xf32> to vector<1x4x256xf32>
    tpu.vector_store %arg5[%c0_40, %c0_41, %c0_42], %156 {strides = array<i32>} : memref<1x4x256xf32, #tpu.memory_space<vmem>>, vector<1x4x256xf32>,
    return
  }
  func.func @transform_0(%arg0: i32) -> (i32, i32, i32, i32) {
    %c0_i32 = arith.constant 0 : i32
    %c0_i32_0 = arith.constant 0 : i32
    %c0_i32_1 = arith.constant 0 : i32
    %c0_i32_2 = arith.constant 0 : i32
    return %arg0, %c0_i32, %c0_i32_0, %c0_i32_1 : i32, i32, i32, i32
  }
  func.func @transform_1(%arg0: i32) -> (i32, i32, i32) {
    %c0_i32 = arith.constant 0 : i32
    %c0_i32_0 = arith.constant 0 : i32
    %c0_i32_1 = arith.constant 0 : i32
    return %arg0, %c0_i32, %c0_i32_0 : i32, i32, i32
  }
  func.func @transform_2(%arg0: i32) -> (i32, i32, i32) {
    %c0_i32 = arith.constant 0 : i32
    %c0_i32_0 = arith.constant 0 : i32
    %c0_i32_1 = arith.constant 0 : i32
    %c0_i32_2 = arith.constant 0 : i32
    return %c0_i32, %c0_i32_0, %c0_i32_1 : i32, i32, i32
  }
  func.func @transform_3(%arg0: i32) -> (i32, i32, i32) {
    %c0_i32 = arith.constant 0 : i32
    %c0_i32_0 = arith.constant 0 : i32
    %c0_i32_1 = arith.constant 0 : i32
    %c0_i32_2 = arith.constant 0 : i32
    return %c0_i32, %c0_i32_0, %c0_i32_1 : i32, i32, i32
  }
  func.func @transform_4(%arg0: i32) -> (i32, i32, i32) {
    %c0_i32 = arith.constant 0 : i32
    %c0_i32_0 = arith.constant 0 : i32
    %c0_i32_1 = arith.constant 0 : i32
    return %arg0, %c0_i32, %c0_i32_0 : i32, i32, i32
  }
}

</mosaic_0001>

<llo_original>
// kernel: residual_block.1
$region0: #{residual_block.1}
  #allocation0 [shape = 'u32[]', space=smem, size = 0x4, offset = 0x4, fixed_abs, tag = 'smem constant byte address 0x4 - core index']
  #allocation1 [shape = 'u32[72,128]{1,0:T(1,128)}', space=vmem, size = 0x9000, scoped, tag = 'internal scratch']
  %s0 = inlined_call_operand.vmem [shape: f32[2,18,18,4], index: 0, kind: input, shape index: {}]
  %s1 = inlined_call_operand.vmem [shape: f32[2,4,256], index: 1, kind: input, shape index: {}]
  %s2 = inlined_call_operand.vmem [shape: f32[9,4,4], index: 2, kind: input, shape index: {}]
  %s3 = inlined_call_operand.vmem [shape: f32[9,4,4], index: 3, kind: input, shape index: {}]
  %s4 = inlined_call_operand.vmem [shape: f32[2,4,256], index: 4, kind: output, shape index: {}]
  %s5 = sld [smem:[#allocation0]]
  $region49: #{residual_block.1} parent=0
    _
  %s7 = ssub.s32 1, %s5
  %s8 = scalar_select 0, %s7, %s5
  loop: start=0, step=1, limit=4
  $region2: #{residual_block.1} parent=0 // loop_pre_header
    _
  $region3: #{residual_block.1} parent=0 // loop_header
    %s10 = sphi 0, %s14
    %p11 = scmp.ge.s32.totalorder %s10, 4
    %s20 = sphi 0, %s22
    %s23 = sphi 0, %s20
    %s24 = sphi 0, %s23
    %s40 = sphi 0, %s24
    %s46 = sphi 0, %s48
    %s49 = sphi 0, %s46
    %s50 = sphi 0, %s49
    %s66 = sphi 0, %s50
    %s70 = sphi 0, %s70
    %s72 = sphi 0, %s70
    %s73 = sphi 0, %s72
    %s87 = sphi 0, %s73
    %s91 = sphi 0, %s91
    %s93 = sphi 0, %s91
    %s94 = sphi 0, %s93
    %s108 = sphi 0, %s94
    %s114 = sphi 0, %s116
    %s117 = sphi 0, %s114
    %s118 = sphi 0, %s117
    %s134 = sphi 0, %s118
  $region4: #{residual_block.1} parent=0 // loop_header_branch
    %13 = sbr.rel (%p11) target = $region8
  $region5: #{residual_block.1} parent=0 // loop_body
    %s15 = ssub.s32 %s10, 1
    %s16 = ssub.s32 %s10, 2
    %s17 = sadd.s32 %s10, 1
    %s18 = ssub.s32 %s10, %s17
    %p19 = scmp.eq.s32.totalorder %s18, 0
    %s21 = sadd.s32 %s20, 1
    %s22 = scalar_select %p19, %s20, %s21
    %p25 = pneg %p19
    %p26 = scmp.eq.s32.totalorder %s10, 1
    %p27 = por %p25, %p26
    %p28 = scmp.ne.s32.totalorder %s20, %s23
    %p29 = scmp.eq.s32.totalorder %s10, 0
    %p30 = por %p28, %p29
    %p31 = scmp.ne.s32.totalorder %s20, %s23
    %p32 = scmp.eq.s32.totalorder %s15, 1
    %p33 = por %p31, %p32
    %p34 = scmp.ne.s32.totalorder %s23, %s24
    %p35 = scmp.eq.s32.totalorder %s15, 0
    %p36 = por %p34, %p35
    %p37 = scmp.ne.s32.totalorder %s23, %s24
    %p38 = scmp.eq.s32.totalorder %s16, 1
    %p39 = por %p37, %p38
    %p41 = scmp.ne.s32.totalorder %s24, %s40
    %p42 = scmp.eq.s32.totalorder %s16, 0
    %p43 = por %p41, %p42
    %s44 = ssub.s32 %s10, %s17
    %p45 = scmp.eq.s32.totalorder %s44, 0
    %s47 = sadd.s32 %s46, 1
    %s48 = scalar_select %p45, %s46, %s47
    %p51 = pneg %p45
    %p52 = scmp.eq.s32.totalorder %s10, 1
    %p53 = por %p51, %p52
    %p54 = scmp.ne.s32.totalorder %s46, %s49
    %p55 = scmp.eq.s32.totalorder %s10, 0
    %p56 = por %p54, %p55
    %p57 = scmp.ne.s32.totalorder %s46, %s49
    %p58 = scmp.eq.s32.totalorder %s15, 1
    %p59 = por %p57, %p58
    %p60 = scmp.ne.s32.totalorder %s49, %s50
    %p61 = scmp.eq.s32.totalorder %s15, 0
    %p62 = por %p60, %p61
    %p63 = scmp.ne.s32.totalorder %s49, %s50
    %p64 = scmp.eq.s32.totalorder %s16, 1
    %p65 = por %p63, %p64
    %p67 = scmp.ne.s32.totalorder %s50, %s66
    %p68 = scmp.eq.s32.totalorder %s16, 0
    %p69 = por %p67, %p68
    %s71 = sadd.s32 %s70, 1
    %p74 = scmp.eq.s32.totalorder %s10, 1
    %p75 = scmp.ne.s32.totalorder %s70, %s72
    %p76 = scmp.eq.s32.totalorder %s10, 0
    %p77 = por %p75, %p76
    %p78 = scmp.ne.s32.totalorder %s70, %s72
    %p79 = scmp.eq.s32.totalorder %s15, 1
    %p80 = por %p78, %p79
    %p81 = scmp.ne.s32.totalorder %s72, %s73
    %p82 = scmp.eq.s32.totalorder %s15, 0
    %p83 = por %p81, %p82
    %p84 = scmp.ne.s32.totalorder %s72, %s73
    %p85 = scmp.eq.s32.totalorder %s16, 1
    %p86 = por %p84, %p85
    %p88 = scmp.ne.s32.totalorder %s73, %s87
    %p89 = scmp.eq.s32.totalorder %s16, 0
    %p90 = por %p88, %p89
    %s92 = sadd.s32 %s91, 1
    %p95 = scmp.eq.s32.totalorder %s10, 1
    %p96 = scmp.ne.s32.totalorder %s91, %s93
    %p97 = scmp.eq.s32.totalorder %s10, 0
    %p98 = por %p96, %p97
    %p99 = scmp.ne.s32.totalorder %s91, %s93
    %p100 = scmp.eq.s32.totalorder %s15, 1
    %p101 = por %p99, %p100
    %p102 = scmp.ne.s32.totalorder %s93, %s94
    %p103 = scmp.eq.s32.totalorder %s15, 0
    %p104 = por %p102, %p103
    %p105 = scmp.ne.s32.totalorder %s93, %s94
    %p106 = scmp.eq.s32.totalorder %s16, 1
    %p107 = por %p105, %p106
    %p109 = scmp.ne.s32.totalorder %s94, %s108
    %p110 = scmp.eq.s32.totalorder %s16, 0
    %p111 = por %p109, %p110
    %s112 = ssub.s32 %s10, %s17
    %p113 = scmp.eq.s32.totalorder %s112, 0
    %s115 = sadd.s32 %s114, 1
    %s116 = scalar_select %p113, %s114, %s115
    %p119 = pneg %p113
    %p120 = scmp.eq.s32.totalorder %s10, 1
    %p121 = por %p119, %p120
    %p122 = scmp.ne.s32.totalorder %s114, %s117
    %p123 = scmp.eq.s32.totalorder %s10, 0
    %p124 = por %p122, %p123
    %p125 = scmp.ne.s32.totalorder %s114, %s117
    %p126 = scmp.eq.s32.totalorder %s15, 1
    %p127 = por %p125, %p126
    %p128 = scmp.ne.s32.totalorder %s117, %s118
    %p129 = scmp.eq.s32.totalorder %s15, 0
    %p130 = por %p128, %p129
    %p131 = scmp.ne.s32.totalorder %s117, %s118
    %p132 = scmp.eq.s32.totalorder %s16, 1
    %p133 = por %p131, %p132
    %p135 = scmp.ne.s32.totalorder %s118, %s134
    %p136 = scmp.eq.s32.totalorder %s16, 0
    %p137 = por %p135, %p136
    %p138 = scmp.le.s32.totalorder 1, %s10
    %p139 = scmp.lt.s32.totalorder %s10, 3
    %p140 = pnand %p138, %p139
    %p141 = pneg %p140
    // Predicated region
    $region9: #{residual_block.1} parent=5 // pred_check
      _
    $region10: #{residual_block.1} parent=5 // pred_check_branch
      %143 = sbr.rel (%p140) target = $region12
    $region11: #{residual_block.1} parent=5 // pred_region
      %s144 = ssub.s32 %s10, 1
      // Predicated region
      $region13: #{residual_block.1} parent=11 // pred_check
        %p145 = pneg %p83
      $region14: #{residual_block.1} parent=11 // pred_check_branch
        %147 = sbr.rel (%p145) target = $region16
      $region15: #{residual_block.1} parent=11 // pred_region
        _
      $region16: #{residual_block.1} parent=11 // pred_fallthru
        _
      // Predicated region
      $region17: #{residual_block.1} parent=11 // pred_check
        %p148 = pneg %p104
      $region18: #{residual_block.1} parent=11 // pred_check_branch
        %150 = sbr.rel (%p148) target = $region20
      $region19: #{residual_block.1} parent=11 // pred_region
        _
      $region20: #{residual_block.1} parent=11 // pred_fallthru
        _
    $region12: #{residual_block.1} parent=5 // pred_fallthru
      _
    %p151 = scmp.lt.s32.totalorder %s10, 2
    // Predicated region
    $region21: #{residual_block.1} parent=5 // pred_check
      %p152 = pneg %p151
    $region22: #{residual_block.1} parent=5 // pred_check_branch
      %154 = sbr.rel (%p152) target = $region24
    $region23: #{residual_block.1} parent=5 // pred_region
      // Predicated region
      $region25: #{residual_block.1} parent=23 // pred_check
        %p155 = pneg %p30
      $region26: #{residual_block.1} parent=23 // pred_check_branch
        %157 = sbr.rel (%p155) target = $region28
      $region27: #{residual_block.1} parent=23 // pred_region
        %p158 = scmp.lt.s32.totalorder %s10, 1
        %s159 = scalar_select %p158, %s10, 1
        %s160 = smul.addr %s159, 54
        %s161 = smul.addr %s160, 8
        %s162 = scalar_lea.vmem %s0, %s161
      $region28: #{residual_block.1} parent=23 // pred_fallthru
        _
      // Predicated region
      $region29: #{residual_block.1} parent=23 // pred_check
        %p163 = pneg %p56
      $region30: #{residual_block.1} parent=23 // pred_check_branch
        %165 = sbr.rel (%p163) target = $region32
      $region31: #{residual_block.1} parent=23 // pred_region
        %p166 = scmp.lt.s32.totalorder %s10, 1
        %s167 = scalar_select %p166, %s10, 1
        %s168 = smul.addr %s167, 2
        %s169 = smul.addr %s168, 4
        %s170 = scalar_lea.vmem %s1, %s169
      $region32: #{residual_block.1} parent=23 // pred_fallthru
        _
    $region24: #{residual_block.1} parent=5 // pred_fallthru
      _
    %p171 = scmp.le.s32.totalorder 1, %s10
    %p172 = scmp.lt.s32.totalorder %s10, 3
    %p173 = pnand %p171, %p172
    %p174 = pneg %p173
    // Predicated region
    $region33: #{residual_block.1} parent=5 // pred_check
      _
    $region34: #{residual_block.1} parent=5 // pred_check_branch
      %176 = sbr.rel (%p173) target = $region36
    $region35: #{residual_block.1} parent=5 // pred_region
      %s177 = ssub.s32 %s10, 1
      %p178 = scmp.lt.s32.totalorder %s15, 1
      %s179 = scalar_select %p178, %s15, 1
      %s180 = smul.addr %s179, 54
      %s181 = smul.addr %s180, 8
      %s182 = scalar_lea.vmem %s0, %s181
      %p183 = pneg %p36
      %p184 = pneg %p33
      %p185 = scmp.lt.s32.totalorder %s15, 1
      %s186 = scalar_select %p185, %s15, 1
      %s187 = smul.addr %s186, 2
      %s188 = smul.addr %s187, 4
      %s189 = scalar_lea.vmem %s1, %s188
      %p190 = pneg %p62
      %p191 = pneg %p59
      %p192 = pneg %p83
      %p193 = pneg %p80
      %p194 = pneg %p104
      %p195 = pneg %p101
      %p196 = pneg %p130
      %p197 = pneg %p127
      %p198 = scmp.lt.s32.totalorder %s15, 1
      %s199 = scalar_select %p198, %s15, 1
      %s200 = smul.addr %s199, 2
      %s201 = smul.addr %s200, 4
      %s202 = scalar_lea.vmem %s4, %s201
      %p203 = scmp.lt.s32.totalorder %s15, 1
      %s204 = scalar_select %p203, %s15, 1
      %s205 = smul.addr %s204, 54
      %s206 = smul.addr %s205, 8
      %s207 = scalar_lea.vmem %s0, %s206
      %p208 = scmp.lt.s32.totalorder %s15, 1
      %s209 = scalar_select %p208, %s15, 1
      %s210 = smul.addr %s209, 2
      %s211 = smul.addr %s210, 4
      %s212 = scalar_lea.vmem %s1, %s211
      %p213 = scmp.lt.s32.totalorder %s15, 1
      %s214 = scalar_select %p213, %s15, 1
      %s215 = smul.addr %s214, 2
      %s216 = smul.addr %s215, 4
      %s217 = scalar_lea.vmem %s4, %s216
      %v218 = vld [vmem:[%s207] sm:$0xff]
      %v219 = vld [vmem:[%s207 + $0x8] sm:$0xff]
      %v220 = vld [vmem:[%s207 + $0x10] sm:$0x3]
      %v221 = vld [vmem:[%s207 + $0x18] sm:$0xff]
      %v222 = vld [vmem:[%s207 + $0x20] sm:$0xff]
      %v223 = vld [vmem:[%s207 + $0x28] sm:$0x3]
      %v224 = vld [vmem:[%s207 + $0x30] sm:$0xff]
      %v225 = vld [vmem:[%s207 + $0x38] sm:$0xff]
      %v226 = vld [vmem:[%s207 + $0x40] sm:$0x3]
      %v227 = vld [vmem:[%s207 + $0x48] sm:$0xff]
      %v228 = vld [vmem:[%s207 + $0x50] sm:$0xff]
      %v229 = vld [vmem:[%s207 + $0x58] sm:$0x3]
      %v230 = vld [vmem:[%s207 + $0x60] sm:$0xff]
      %v231 = vld [vmem:[%s207 + $0x68] sm:$0xff]
      %v232 = vld [vmem:[%s207 + $0x70] sm:$0x3]
      %v233 = vld [vmem:[%s207 + $0x78] sm:$0xff]
      %v234 = vld [vmem:[%s207 + $0x80] sm:$0xff]
      %v235 = vld [vmem:[%s207 + $0x88] sm:$0x3]
      %v236 = vld [vmem:[%s207 + $0x90] sm:$0xff]
      %v237 = vld [vmem:[%s207 + $0x98] sm:$0xff]
      %v238 = vld [vmem:[%s207 + $0xa0] sm:$0x3]
      %v239 = vld [vmem:[%s207 + $0xa8] sm:$0xff]
      %v240 = vld [vmem:[%s207 + $0xb0] sm:$0xff]
      %v241 = vld [vmem:[%s207 + $0xb8] sm:$0x3]
      %v242 = vld [vmem:[%s207 + $0xc0] sm:$0xff]
      %v243 = vld [vmem:[%s207 + $0xc8] sm:$0xff]
      %v244 = vld [vmem:[%s207 + $0xd0] sm:$0x3]
      %v245 = vld [vmem:[%s207 + $0xd8] sm:$0xff]
      %v246 = vld [vmem:[%s207 + $0xe0] sm:$0xff]
      %v247 = vld [vmem:[%s207 + $0xe8] sm:$0x3]
      %v248 = vld [vmem:[%s207 + $0xf0] sm:$0xff]
      %v249 = vld [vmem:[%s207 + $0xf8] sm:$0xff]
      %v250 = vld [vmem:[%s207 + $0x100] sm:$0x3]
      %v251 = vld [vmem:[%s207 + $0x108] sm:$0xff]
      %v252 = vld [vmem:[%s207 + $0x110] sm:$0xff]
      %v253 = vld [vmem:[%s207 + $0x118] sm:$0x3]
      %v254 = vld [vmem:[%s207 + $0x120] sm:$0xff]
      %v255 = vld [vmem:[%s207 + $0x128] sm:$0xff]
      %v256 = vld [vmem:[%s207 + $0x130] sm:$0x3]
      %v257 = vld [vmem:[%s207 + $0x138] sm:$0xff]
      %v258 = vld [vmem:[%s207 + $0x140] sm:$0xff]
      %v259 = vld [vmem:[%s207 + $0x148] sm:$0x3]
      %v260 = vld [vmem:[%s207 + $0x150] sm:$0xff]
      %v261 = vld [vmem:[%s207 + $0x158] sm:$0xff]
      %v262 = vld [vmem:[%s207 + $0x160] sm:$0x3]
      %v263 = vld [vmem:[%s207 + $0x168] sm:$0xff]
      %v264 = vld [vmem:[%s207 + $0x170] sm:$0xff]
      %v265 = vld [vmem:[%s207 + $0x178] sm:$0x3]
      %v266 = vld [vmem:[%s207 + $0x180] sm:$0xff]
      %v267 = vld [vmem:[%s207 + $0x188] sm:$0xff]
      %v268 = vld [vmem:[%s207 + $0x190] sm:$0x3]
      %v269 = vld [vmem:[%s207 + $0x198] sm:$0xff]
      %v270 = vld [vmem:[%s207 + $0x1a0] sm:$0xff]
      %v271 = vld [vmem:[%s207 + $0x1a8] sm:$0x3]
      %v272 = vld [vmem:[%s2] sm:$0xf]
      %v273 = vld [vmem:[%s2 + $0x4] sm:$0xf]
      %v274 = vld [vmem:[%s2 + $0x8] sm:$0xf]
      %v275 = vld [vmem:[%s2 + $0xc] sm:$0xf]
      %v276 = vld [vmem:[%s2 + $0x10] sm:$0xf]
      %v277 = vld [vmem:[%s2 + $0x14] sm:$0xf]
      %v278 = vld [vmem:[%s2 + $0x18] sm:$0xf]
      %v279 = vld [vmem:[%s2 + $0x1c] sm:$0xf]
      %v280 = vld [vmem:[%s2 + $0x20] sm:$0xf]
      %vm329 = vcmask 1046528
      %v330 = vrot.slane %v218, 1
      %v331 = vrot.slane %v219, 1
      %v332 = vsel %vm329, %v330, %v331
      %v333 = vrot.slane %v220, 1
      %v334 = vsel %vm329, %v331, %v333
      %v335 = vrot.slane %v221, 1
      %v336 = vrot.slane %v222, 1
      %v337 = vsel %vm329, %v335, %v336
      %v338 = vrot.slane %v223, 1
      %v339 = vsel %vm329, %v336, %v338
      %v340 = vrot.slane %v224, 1
      %v341 = vrot.slane %v225, 1
      %v342 = vsel %vm329, %v340, %v341
      %v343 = vrot.slane %v226, 1
      %v344 = vsel %vm329, %v341, %v343
      %v345 = vrot.slane %v227, 1
      %v346 = vrot.slane %v228, 1
      %v347 = vsel %vm329, %v345, %v346
      %v348 = vrot.slane %v229, 1
      %v349 = vsel %vm329, %v346, %v348
      %v350 = vrot.slane %v230, 1
      %v351 = vrot.slane %v231, 1
      %v352 = vsel %vm329, %v350, %v351
      %v353 = vrot.slane %v232, 1
      %v354 = vsel %vm329, %v351, %v353
      %v355 = vrot.slane %v233, 1
      %v356 = vrot.slane %v234, 1
      %v357 = vsel %vm329, %v355, %v356
      %v358 = vrot.slane %v235, 1
      %v359 = vsel %vm329, %v356, %v358
      %v360 = vrot.slane %v236, 1
      %v361 = vrot.slane %v237, 1
      %v362 = vsel %vm329, %v360, %v361
      %v363 = vrot.slane %v238, 1
      %v364 = vsel %vm329, %v361, %v363
      %v365 = vrot.slane %v239, 1
      %v366 = vrot.slane %v240, 1
      %v367 = vsel %vm329, %v365, %v366
      %v368 = vrot.slane %v241, 1
      %v369 = vsel %vm329, %v366, %v368
      %v370 = vrot.slane %v242, 1
      %v371 = vrot.slane %v243, 1
      %v372 = vsel %vm329, %v370, %v371
      %v373 = vrot.slane %v244, 1
      %v374 = vsel %vm329, %v371, %v373
      %v375 = vrot.slane %v245, 1
      %v376 = vrot.slane %v246, 1
      %v377 = vsel %vm329, %v375, %v376
      %v378 = vrot.slane %v247, 1
      %v379 = vsel %vm329, %v376, %v378
      %v380 = vrot.slane %v248, 1
      %v381 = vrot.slane %v249, 1
      %v382 = vsel %vm329, %v380, %v381
      %v383 = vrot.slane %v250, 1
      %v384 = vsel %vm329, %v381, %v383
      %v385 = vrot.slane %v251, 1
      %v386 = vrot.slane %v252, 1
      %v387 = vsel %vm329, %v385, %v386
      %v388 = vrot.slane %v253, 1
      %v389 = vsel %vm329, %v386, %v388
      %v390 = vrot.slane %v254, 1
      %v391 = vrot.slane %v255, 1
      %v392 = vsel %vm329, %v390, %v391
      %v393 = vrot.slane %v256, 1
      %v394 = vsel %vm329, %v391, %v393
      %v395 = vrot.slane %v257, 1
      %v396 = vrot.slane %v258, 1
      %v397 = vsel %vm329, %v395, %v396
      %v398 = vrot.slane %v259, 1
      %v399 = vsel %vm329, %v396, %v398
      %v400 = vrot.slane %v260, 1
      %v401 = vrot.slane %v261, 1
      %v402 = vsel %vm329, %v400, %v401
      %v403 = vrot.slane %v262, 1
      %v404 = vsel %vm329, %v401, %v403
      %v405 = vrot.slane %v263, 1
      %v406 = vrot.slane %v264, 1
      %v407 = vsel %vm329, %v405, %v406
      %v408 = vrot.slane %v265, 1
      %v409 = vsel %vm329, %v406, %v408
      %vm410 = vcmask 31744
      %v411 = vsel %vm410, %v332, 0
      %v413 = vsel %vm410, %v334, 0
      %v415 = vsel %vm410, %v337, 0
      %v417 = vsel %vm410, %v339, 0
      %v419 = vsel %vm410, %v342, 0
      %v421 = vsel %vm410, %v344, 0
      %v423 = vsel %vm410, %v347, 0
      %v425 = vsel %vm410, %v349, 0
      %v427 = vsel %vm410, %v352, 0
      %v429 = vsel %vm410, %v354, 0
      %v431 = vsel %vm410, %v357, 0
      %v433 = vsel %vm410, %v359, 0
      %v435 = vsel %vm410, %v362, 0
      %v437 = vsel %vm410, %v364, 0
      %v439 = vsel %vm410, %v367, 0
      %v441 = vsel %vm410, %v369, 0
      %v443 = vsel %vm410, %v372, 0
      %v445 = vsel %vm410, %v374, 0
      %v447 = vsel %vm410, %v377, 0
      %v449 = vsel %vm410, %v379, 0
      %v451 = vsel %vm410, %v382, 0
      %v453 = vsel %vm410, %v384, 0
      %v455 = vsel %vm410, %v387, 0
      %v457 = vsel %vm410, %v389, 0
      %v459 = vsel %vm410, %v392, 0
      %v461 = vsel %vm410, %v394, 0
      %v463 = vsel %vm410, %v397, 0
      %v465 = vsel %vm410, %v399, 0
      %v467 = vsel %vm410, %v402, 0
      %v469 = vsel %vm410, %v404, 0
      %v471 = vsel %vm410, %v407, 0
      %v473 = vsel %vm410, %v409, 0
      %vm475 = vcmask 1043456
      %v477 = vsel %vm475, %v273, 0
      %479 = vmatpush.msra.mxu0 0.0
      %480 = vmatpush.msra.mxu0 0.0
      %481 = vmatpush.msra.mxu0 0.0
      %482 = vmatpush.msra.mxu0 0.0
      %483 = vmatpush.msra.mxu0 0.0
      %484 = vmatpush.msra.mxu0 0.0
      %485 = vmatpush.msra.mxu0 0.0
      %486 = vmatpush.msra.mxu0 0.0
      %487 = vmatpush.msra.mxu0 0.0
      %488 = vmatpush.msra.mxu0 0.0
      %489 = vmatpush.msra.mxu0 0.0
      %490 = vmatpush.msra.mxu0 0.0
      %491 = vmatpush.msra.mxu0 0.0
      %492 = vmatpush.msra.mxu0 0.0
      %493 = vmatpush.msra.mxu0 0.0
      %494 = vmatpush.msra.mxu0 %v477
      %495 = vmatmul.f32.gmra.mxu0 %v411
      %v496 = vpop.f32.mrf.mxu0
      %v497 = vadd.f32 0.0, %v496
      %498 = vmatmul.f32.gmra.mxu0 %v413
      %v499 = vpop.f32.mrf.mxu0
      %v500 = vadd.f32 0.0, %v499
      %501 = vmatmul.f32.gmra.mxu0 %v415
      %v502 = vpop.f32.mrf.mxu0
      %v503 = vadd.f32 0.0, %v502
      %504 = vmatmul.f32.gmra.mxu0 %v417
      %v505 = vpop.f32.mrf.mxu0
      %v506 = vadd.f32 0.0, %v505
      %507 = vmatmul.f32.gmra.mxu0 %v419
      %v508 = vpop.f32.mrf.mxu0
      %v509 = vadd.f32 0.0, %v508
      %510 = vmatmul.f32.gmra.mxu0 %v421
      %v511 = vpop.f32.mrf.mxu0
      %v512 = vadd.f32 0.0, %v511
      %513 = vmatmul.f32.gmra.mxu0 %v423
      %v514 = vpop.f32.mrf.mxu0
      %v515 = vadd.f32 0.0, %v514
      %516 = vmatmul.f32.gmra.mxu0 %v425
      %v517 = vpop.f32.mrf.mxu0
      %v518 = vadd.f32 0.0, %v517
      %519 = vmatmul.f32.gmra.mxu0 %v427
      %v520 = vpop.f32.mrf.mxu0
      %v521 = vadd.f32 0.0, %v520
      %522 = vmatmul.f32.gmra.mxu0 %v429
      %v523 = vpop.f32.mrf.mxu0
      %v524 = vadd.f32 0.0, %v523
      %525 = vmatmul.f32.gmra.mxu0 %v431
      %v526 = vpop.f32.mrf.mxu0
      %v527 = vadd.f32 0.0, %v526
      %528 = vmatmul.f32.gmra.mxu0 %v433
      %v529 = vpop.f32.mrf.mxu0
      %v530 = vadd.f32 0.0, %v529
      %531 = vmatmul.f32.gmra.mxu0 %v435
      %v532 = vpop.f32.mrf.mxu0
      %v533 = vadd.f32 0.0, %v532
      %534 = vmatmul.f32.gmra.mxu0 %v437
      %v535 = vpop.f32.mrf.mxu0
      %v536 = vadd.f32 0.0, %v535
      %537 = vmatmul.f32.gmra.mxu0 %v439
      %v538 = vpop.f32.mrf.mxu0
      %v539 = vadd.f32 0.0, %v538
      %540 = vmatmul.f32.gmra.mxu0 %v441
      %v541 = vpop.f32.mrf.mxu0
      %v542 = vadd.f32 0.0, %v541
      %543 = vmatmul.f32.gmra.mxu0 %v443
      %v544 = vpop.f32.mrf.mxu0
      %v545 = vadd.f32 0.0, %v544
      %546 = vmatmul.f32.gmra.mxu0 %v445
      %v547 = vpop.f32.mrf.mxu0
      %v548 = vadd.f32 0.0, %v547
      %549 = vmatmul.f32.gmra.mxu0 %v447
      %v550 = vpop.f32.mrf.mxu0
      %v551 = vadd.f32 0.0, %v550
      %552 = vmatmul.f32.gmra.mxu0 %v449
      %v553 = vpop.f32.mrf.mxu0
      %v554 = vadd.f32 0.0, %v553
      %555 = vmatmul.f32.gmra.mxu0 %v451
      %v556 = vpop.f32.mrf.mxu0
      %v557 = vadd.f32 0.0, %v556
      %558 = vmatmul.f32.gmra.mxu0 %v453
      %v559 = vpop.f32.mrf.mxu0
      %v560 = vadd.f32 0.0, %v559
      %561 = vmatmul.f32.gmra.mxu0 %v455
      %v562 = vpop.f32.mrf.mxu0
      %v563 = vadd.f32 0.0, %v562
      %564 = vmatmul.f32.gmra.mxu0 %v457
      %v565 = vpop.f32.mrf.mxu0
      %v566 = vadd.f32 0.0, %v565
      %567 = vmatmul.f32.gmra.mxu0 %v459
      %v568 = vpop.f32.mrf.mxu0
      %v569 = vadd.f32 0.0, %v568
      %570 = vmatmul.f32.gmra.mxu0 %v461
      %v571 = vpop.f32.mrf.mxu0
      %v572 = vadd.f32 0.0, %v571
      %573 = vmatmul.f32.gmra.mxu0 %v463
      %v574 = vpop.f32.mrf.mxu0
      %v575 = vadd.f32 0.0, %v574
      %576 = vmatmul.f32.gmra.mxu0 %v465
      %v577 = vpop.f32.mrf.mxu0
      %v578 = vadd.f32 0.0, %v577
      %579 = vmatmul.f32.gmra.mxu0 %v467
      %v580 = vpop.f32.mrf.mxu0
      %v581 = vadd.f32 0.0, %v580
      %582 = vmatmul.f32.gmra.mxu0 %v469
      %v583 = vpop.f32.mrf.mxu0
      %v584 = vadd.f32 0.0, %v583
      %585 = vmatmul.f32.gmra.mxu0 %v471
      %v586 = vpop.f32.mrf.mxu0
      %v587 = vadd.f32 0.0, %v586
      %588 = vmatmul.f32.gmra.mxu0 %v473
      %v589 = vpop.f32.mrf.mxu0
      %v590 = vadd.f32 0.0, %v589
      %591 = vdwg.mxu0
      %v592 = vsel %vm410, %v218, 0
      %v594 = vsel %vm410, %v219, 0
      %v596 = vsel %vm410, %v221, 0
      %v598 = vsel %vm410, %v222, 0
      %v600 = vsel %vm410, %v224, 0
      %v602 = vsel %vm410, %v225, 0
      %v604 = vsel %vm410, %v227, 0
      %v606 = vsel %vm410, %v228, 0
      %v608 = vsel %vm410, %v230, 0
      %v610 = vsel %vm410, %v231, 0
      %v612 = vsel %vm410, %v233, 0
      %v614 = vsel %vm410, %v234, 0
      %v616 = vsel %vm410, %v236, 0
      %v618 = vsel %vm410, %v237, 0
      %v620 = vsel %vm410, %v239, 0
      %v622 = vsel %vm410, %v240, 0
      %v624 = vsel %vm410, %v242, 0
      %v626 = vsel %vm410, %v243, 0
      %v628 = vsel %vm410, %v245, 0
      %v630 = vsel %vm410, %v246, 0
      %v632 = vsel %vm410, %v248, 0
      %v634 = vsel %vm410, %v249, 0
      %v636 = vsel %vm410, %v251, 0
      %v638 = vsel %vm410, %v252, 0
      %v640 = vsel %vm410, %v254, 0
      %v642 = vsel %vm410, %v255, 0
      %v644 = vsel %vm410, %v257, 0
      %v646 = vsel %vm410, %v258, 0
      %v648 = vsel %vm410, %v260, 0
      %v650 = vsel %vm410, %v261, 0
      %v652 = vsel %vm410, %v263, 0
      %v654 = vsel %vm410, %v264, 0
      %v657 = vsel %vm475, %v272, 0
      %659 = vmatpush.msra.mxu0 0.0
      %660 = vmatpush.msra.mxu0 0.0
      %661 = vmatpush.msra.mxu0 0.0
      %662 = vmatpush.msra.mxu0 0.0
      %663 = vmatpush.msra.mxu0 0.0
      %664 = vmatpush.msra.mxu0 0.0
      %665 = vmatpush.msra.mxu0 0.0
      %666 = vmatpush.msra.mxu0 0.0
      %667 = vmatpush.msra.mxu0 0.0
      %668 = vmatpush.msra.mxu0 0.0
      %669 = vmatpush.msra.mxu0 0.0
      %670 = vmatpush.msra.mxu0 0.0
      %671 = vmatpush.msra.mxu0 0.0
      %672 = vmatpush.msra.mxu0 0.0
      %673 = vmatpush.msra.mxu0 0.0
      %674 = vmatpush.msra.mxu0 %v657
      %675 = vmatmul.f32.gmra.mxu0 %v592
      %v676 = vpop.f32.mrf.mxu0
      %v677 = vadd.f32 %v497, %v676
      %678 = vmatmul.f32.gmra.mxu0 %v594
      %v679 = vpop.f32.mrf.mxu0
      %v680 = vadd.f32 %v500, %v679
      %681 = vmatmul.f32.gmra.mxu0 %v596
      %v682 = vpop.f32.mrf.mxu0
      %v683 = vadd.f32 %v503, %v682
      %684 = vmatmul.f32.gmra.mxu0 %v598
      %v685 = vpop.f32.mrf.mxu0
      %v686 = vadd.f32 %v506, %v685
      %687 = vmatmul.f32.gmra.mxu0 %v600
      %v688 = vpop.f32.mrf.mxu0
      %v689 = vadd.f32 %v509, %v688
      %690 = vmatmul.f32.gmra.mxu0 %v602
      %v691 = vpop.f32.mrf.mxu0
      %v692 = vadd.f32 %v512, %v691
      %693 = vmatmul.f32.gmra.mxu0 %v604
      %v694 = vpop.f32.mrf.mxu0
      %v695 = vadd.f32 %v515, %v694
      %696 = vmatmul.f32.gmra.mxu0 %v606
      %v697 = vpop.f32.mrf.mxu0
      %v698 = vadd.f32 %v518, %v697
      %699 = vmatmul.f32.gmra.mxu0 %v608
      %v700 = vpop.f32.mrf.mxu0
      %v701 = vadd.f32 %v521, %v700
      %702 = vmatmul.f32.gmra.mxu0 %v610
      %v703 = vpop.f32.mrf.mxu0
      %v704 = vadd.f32 %v524, %v703
      %705 = vmatmul.f32.gmra.mxu0 %v612
      %v706 = vpop.f32.mrf.mxu0
      %v707 = vadd.f32 %v527, %v706
      %708 = vmatmul.f32.gmra.mxu0 %v614
      %v709 = vpop.f32.mrf.mxu0
      %v710 = vadd.f32 %v530, %v709
      %711 = vmatmul.f32.gmra.mxu0 %v616
      %v712 = vpop.f32.mrf.mxu0
      %v713 = vadd.f32 %v533, %v712
      %714 = vmatmul.f32.gmra.mxu0 %v618
      %v715 = vpop.f32.mrf.mxu0
      %v716 = vadd.f32 %v536, %v715
      %717 = vmatmul.f32.gmra.mxu0 %v620
      %v718 = vpop.f32.mrf.mxu0
      %v719 = vadd.f32 %v539, %v718
      %720 = vmatmul.f32.gmra.mxu0 %v622
      %v721 = vpop.f32.mrf.mxu0
      %v722 = vadd.f32 %v542, %v721
      %723 = vmatmul.f32.gmra.mxu0 %v624
      %v724 = vpop.f32.mrf.mxu0
      %v725 = vadd.f32 %v545, %v724
      %726 = vmatmul.f32.gmra.mxu0 %v626
      %v727 = vpop.f32.mrf.mxu0
      %v728 = vadd.f32 %v548, %v727
      %729 = vmatmul.f32.gmra.mxu0 %v628
      %v730 = vpop.f32.mrf.mxu0
      %v731 = vadd.f32 %v551, %v730
      %732 = vmatmul.f32.gmra.mxu0 %v630
      %v733 = vpop.f32.mrf.mxu0
      %v734 = vadd.f32 %v554, %v733
      %735 = vmatmul.f32.gmra.mxu0 %v632
      %v736 = vpop.f32.mrf.mxu0
      %v737 = vadd.f32 %v557, %v736
      %738 = vmatmul.f32.gmra.mxu0 %v634
      %v739 = vpop.f32.mrf.mxu0
      %v740 = vadd.f32 %v560, %v739
      %741 = vmatmul.f32.gmra.mxu0 %v636
      %v742 = vpop.f32.mrf.mxu0
      %v743 = vadd.f32 %v563, %v742
      %744 = vmatmul.f32.gmra.mxu0 %v638
      %v745 = vpop.f32.mrf.mxu0
      %v746 = vadd.f32 %v566, %v745
      %747 = vmatmul.f32.gmra.mxu0 %v640
      %v748 = vpop.f32.mrf.mxu0
      %v749 = vadd.f32 %v569, %v748
      %750 = vmatmul.f32.gmra.mxu0 %v642
      %v751 = vpop.f32.mrf.mxu0
      %v752 = vadd.f32 %v572, %v751
      %753 = vmatmul.f32.gmra.mxu0 %v644
      %v754 = vpop.f32.mrf.mxu0
      %v755 = vadd.f32 %v575, %v754
      %756 = vmatmul.f32.gmra.mxu0 %v646
      %v757 = vpop.f32.mrf.mxu0
      %v758 = vadd.f32 %v578, %v757
      %759 = vmatmul.f32.gmra.mxu0 %v648
      %v760 = vpop.f32.mrf.mxu0
      %v761 = vadd.f32 %v581, %v760
      %762 = vmatmul.f32.gmra.mxu0 %v650
      %v763 = vpop.f32.mrf.mxu0
      %v764 = vadd.f32 %v584, %v763
      %765 = vmatmul.f32.gmra.mxu0 %v652
      %v766 = vpop.f32.mrf.mxu0
      %v767 = vadd.f32 %v587, %v766
      %768 = vmatmul.f32.gmra.mxu0 %v654
      %v769 = vpop.f32.mrf.mxu0
      %v770 = vadd.f32 %v590, %v769
      %771 = vdwg.mxu0
      %vm772 = vcmask 1045504
      %v773 = vrot.slane %v218, 2
      %v774 = vrot.slane %v219, 2
      %v775 = vsel %vm772, %v773, %v774
      %v776 = vrot.slane %v220, 2
      %v777 = vsel %vm772, %v774, %v776
      %v778 = vrot.slane %v221, 2
      %v779 = vrot.slane %v222, 2
      %v780 = vsel %vm772, %v778, %v779
      %v781 = vrot.slane %v223, 2
      %v782 = vsel %vm772, %v779, %v781
      %v783 = vrot.slane %v224, 2
      %v784 = vrot.slane %v225, 2
      %v785 = vsel %vm772, %v783, %v784
      %v786 = vrot.slane %v226, 2
      %v787 = vsel %vm772, %v784, %v786
      %v788 = vrot.slane %v227, 2
      %v789 = vrot.slane %v228, 2
      %v790 = vsel %vm772, %v788, %v789
      %v791 = vrot.slane %v229, 2
      %v792 = vsel %vm772, %v789, %v791
      %v793 = vrot.slane %v230, 2
      %v794 = vrot.slane %v231, 2
      %v795 = vsel %vm772, %v793, %v794
      %v796 = vrot.slane %v232, 2
      %v797 = vsel %vm772, %v794, %v796
      %v798 = vrot.slane %v233, 2
      %v799 = vrot.slane %v234, 2
      %v800 = vsel %vm772, %v798, %v799
      %v801 = vrot.slane %v235, 2
      %v802 = vsel %vm772, %v799, %v801
      %v803 = vrot.slane %v236, 2
      %v804 = vrot.slane %v237, 2
      %v805 = vsel %vm772, %v803, %v804
      %v806 = vrot.slane %v238, 2
      %v807 = vsel %vm772, %v804, %v806
      %v808 = vrot.slane %v239, 2
      %v809 = vrot.slane %v240, 2
      %v810 = vsel %vm772, %v808, %v809
      %v811 = vrot.slane %v241, 2
      %v812 = vsel %vm772, %v809, %v811
      %v813 = vrot.slane %v242, 2
      %v814 = vrot.slane %v243, 2
      %v815 = vsel %vm772, %v813, %v814
      %v816 = vrot.slane %v244, 2
      %v817 = vsel %vm772, %v814, %v816
      %v818 = vrot.slane %v245, 2
      %v819 = vrot.slane %v246, 2
      %v820 = vsel %vm772, %v818, %v819
      %v821 = vrot.slane %v247, 2
      %v822 = vsel %vm772, %v819, %v821
      %v823 = vrot.slane %v248, 2
      %v824 = vrot.slane %v249, 2
      %v825 = vsel %vm772, %v823, %v824
      %v826 = vrot.slane %v250, 2
      %v827 = vsel %vm772, %v824, %v826
      %v828 = vrot.slane %v251, 2
      %v829 = vrot.slane %v252, 2
      %v830 = vsel %vm772, %v828, %v829
      %v831 = vrot.slane %v253, 2
      %v832 = vsel %vm772, %v829, %v831
      %v833 = vrot.slane %v254, 2
      %v834 = vrot.slane %v255, 2
      %v835 = vsel %vm772, %v833, %v834
      %v836 = vrot.slane %v256, 2
      %v837 = vsel %vm772, %v834, %v836
      %v838 = vrot.slane %v257, 2
      %v839 = vrot.slane %v258, 2
      %v840 = vsel %vm772, %v838, %v839
      %v841 = vrot.slane %v259, 2
      %v842 = vsel %vm772, %v839, %v841
      %v843 = vrot.slane %v260, 2
      %v844 = vrot.slane %v261, 2
      %v845 = vsel %vm772, %v843, %v844
      %v846 = vrot.slane %v262, 2
      %v847 = vsel %vm772, %v844, %v846
      %v848 = vrot.slane %v263, 2
      %v849 = vrot.slane %v264, 2
      %v850 = vsel %vm772, %v848, %v849
      %v851 = vrot.slane %v265, 2
      %v852 = vsel %vm772, %v849, %v851
      %v853 = vsel %vm410, %v775, 0
      %v855 = vsel %vm410, %v777, 0
      %v857 = vsel %vm410, %v780, 0
      %v859 = vsel %vm410, %v782, 0
      %v861 = vsel %vm410, %v785, 0
      %v863 = vsel %vm410, %v787, 0
      %v865 = vsel %vm410, %v790, 0
      %v867 = vsel %vm410, %v792, 0
      %v869 = vsel %vm410, %v795, 0
      %v871 = vsel %vm410, %v797, 0
      %v873 = vsel %vm410, %v800, 0
      %v875 = vsel %vm410, %v802, 0
      %v877 = vsel %vm410, %v805, 0
      %v879 = vsel %vm410, %v807, 0
      %v881 = vsel %vm410, %v810, 0
      %v883 = vsel %vm410, %v812, 0
      %v885 = vsel %vm410, %v815, 0
      %v887 = vsel %vm410, %v817, 0
      %v889 = vsel %vm410, %v820, 0
      %v891 = vsel %vm410, %v822, 0
      %v893 = vsel %vm410, %v825, 0
      %v895 = vsel %vm410, %v827, 0
      %v897 = vsel %vm410, %v830, 0
      %v899 = vsel %vm410, %v832, 0
      %v901 = vsel %vm410, %v835, 0
      %v903 = vsel %vm410, %v837, 0
      %v905 = vsel %vm410, %v840, 0
      %v907 = vsel %vm410, %v842, 0
      %v909 = vsel %vm410, %v845, 0
      %v911 = vsel %vm410, %v847, 0
      %v913 = vsel %vm410, %v850, 0
      %v915 = vsel %vm410, %v852, 0
      %v918 = vsel %vm475, %v274, 0
      %920 = vmatpush.msra.mxu0 0.0
      %921 = vmatpush.msra.mxu0 0.0
      %922 = vmatpush.msra.mxu0 0.0
      %923 = vmatpush.msra.mxu0 0.0
      %924 = vmatpush.msra.mxu0 0.0
      %925 = vmatpush.msra.mxu0 0.0
      %926 = vmatpush.msra.mxu0 0.0
      %927 = vmatpush.msra.mxu0 0.0
      %928 = vmatpush.msra.mxu0 0.0
      %929 = vmatpush.msra.mxu0 0.0
      %930 = vmatpush.msra.mxu0 0.0
      %931 = vmatpush.msra.mxu0 0.0
      %932 = vmatpush.msra.mxu0 0.0
      %933 = vmatpush.msra.mxu0 0.0
      %934 = vmatpush.msra.mxu0 0.0
      %935 = vmatpush.msra.mxu0 %v918
      %936 = vmatmul.f32.gmra.mxu0 %v853
      %v937 = vpop.f32.mrf.mxu0
      %v938 = vadd.f32 0.0, %v937
      %939 = vmatmul.f32.gmra.mxu0 %v855
      %v940 = vpop.f32.mrf.mxu0
      %v941 = vadd.f32 0.0, %v940
      %942 = vmatmul.f32.gmra.mxu0 %v857
      %v943 = vpop.f32.mrf.mxu0
      %v944 = vadd.f32 0.0, %v943
      %945 = vmatmul.f32.gmra.mxu0 %v859
      %v946 = vpop.f32.mrf.mxu0
      %v947 = vadd.f32 0.0, %v946
      %948 = vmatmul.f32.gmra.mxu0 %v861
      %v949 = vpop.f32.mrf.mxu0
      %v950 = vadd.f32 0.0, %v949
      %951 = vmatmul.f32.gmra.mxu0 %v863
      %v952 = vpop.f32.mrf.mxu0
      %v953 = vadd.f32 0.0, %v952
      %954 = vmatmul.f32.gmra.mxu0 %v865
      %v955 = vpop.f32.mrf.mxu0
      %v956 = vadd.f32 0.0, %v955
      %957 = vmatmul.f32.gmra.mxu0 %v867
      %v958 = vpop.f32.mrf.mxu0
      %v959 = vadd.f32 0.0, %v958
      %960 = vmatmul.f32.gmra.mxu0 %v869
      %v961 = vpop.f32.mrf.mxu0
      %v962 = vadd.f32 0.0, %v961
      %963 = vmatmul.f32.gmra.mxu0 %v871
      %v964 = vpop.f32.mrf.mxu0
      %v965 = vadd.f32 0.0, %v964
      %966 = vmatmul.f32.gmra.mxu0 %v873
      %v967 = vpop.f32.mrf.mxu0
      %v968 = vadd.f32 0.0, %v967
      %969 = vmatmul.f32.gmra.mxu0 %v875
      %v970 = vpop.f32.mrf.mxu0
      %v971 = vadd.f32 0.0, %v970
      %972 = vmatmul.f32.gmra.mxu0 %v877
      %v973 = vpop.f32.mrf.mxu0
      %v974 = vadd.f32 0.0, %v973
      %975 = vmatmul.f32.gmra.mxu0 %v879
      %v976 = vpop.f32.mrf.mxu0
      %v977 = vadd.f32 0.0, %v976
      %978 = vmatmul.f32.gmra.mxu0 %v881
      %v979 = vpop.f32.mrf.mxu0
      %v980 = vadd.f32 0.0, %v979
      %981 = vmatmul.f32.gmra.mxu0 %v883
      %v982 = vpop.f32.mrf.mxu0
      %v983 = vadd.f32 0.0, %v982
      %984 = vmatmul.f32.gmra.mxu0 %v885
      %v985 = vpop.f32.mrf.mxu0
      %v986 = vadd.f32 0.0, %v985
      %987 = vmatmul.f32.gmra.mxu0 %v887
      %v988 = vpop.f32.mrf.mxu0
      %v989 = vadd.f32 0.0, %v988
      %990 = vmatmul.f32.gmra.mxu0 %v889
      %v991 = vpop.f32.mrf.mxu0
      %v992 = vadd.f32 0.0, %v991
      %993 = vmatmul.f32.gmra.mxu0 %v891
      %v994 = vpop.f32.mrf.mxu0
      %v995 = vadd.f32 0.0, %v994
      %996 = vmatmul.f32.gmra.mxu0 %v893
      %v997 = vpop.f32.mrf.mxu0
      %v998 = vadd.f32 0.0, %v997
      %999 = vmatmul.f32.gmra.mxu0 %v895
      %v1000 = vpop.f32.mrf.mxu0
      %v1001 = vadd.f32 0.0, %v1000
      %1002 = vmatmul.f32.gmra.mxu0 %v897
      %v1003 = vpop.f32.mrf.mxu0
      %v1004 = vadd.f32 0.0, %v1003
      %1005 = vmatmul.f32.gmra.mxu0 %v899
      %v1006 = vpop.f32.mrf.mxu0
      %v1007 = vadd.f32 0.0, %v1006
      %1008 = vmatmul.f32.gmra.mxu0 %v901
      %v1009 = vpop.f32.mrf.mxu0
      %v1010 = vadd.f32 0.0, %v1009
      %1011 = vmatmul.f32.gmra.mxu0 %v903
      %v1012 = vpop.f32.mrf.mxu0
      %v1013 = vadd.f32 0.0, %v1012
      %1014 = vmatmul.f32.gmra.mxu0 %v905
      %v1015 = vpop.f32.mrf.mxu0
      %v1016 = vadd.f32 0.0, %v1015
      %1017 = vmatmul.f32.gmra.mxu0 %v907
      %v1018 = vpop.f32.mrf.mxu0
      %v1019 = vadd.f32 0.0, %v1018
      %1020 = vmatmul.f32.gmra.mxu0 %v909
      %v1021 = vpop.f32.mrf.mxu0
      %v1022 = vadd.f32 0.0, %v1021
      %1023 = vmatmul.f32.gmra.mxu0 %v911
      %v1024 = vpop.f32.mrf.mxu0
      %v1025 = vadd.f32 0.0, %v1024
      %1026 = vmatmul.f32.gmra.mxu0 %v913
      %v1027 = vpop.f32.mrf.mxu0
      %v1028 = vadd.f32 0.0, %v1027
      %1029 = vmatmul.f32.gmra.mxu0 %v915
      %v1030 = vpop.f32.mrf.mxu0
      %v1031 = vadd.f32 0.0, %v1030
      %1032 = vdwg.mxu0
      %v1033 = vadd.f32 %v677, %v938
      %v1034 = vadd.f32 %v680, %v941
      %v1035 = vadd.f32 %v683, %v944
      %v1036 = vadd.f32 %v686, %v947
      %v1037 = vadd.f32 %v689, %v950
      %v1038 = vadd.f32 %v692, %v953
      %v1039 = vadd.f32 %v695, %v956
      %v1040 = vadd.f32 %v698, %v959
      %v1041 = vadd.f32 %v701, %v962
      %v1042 = vadd.f32 %v704, %v965
      %v1043 = vadd.f32 %v707, %v968
      %v1044 = vadd.f32 %v710, %v971
      %v1045 = vadd.f32 %v713, %v974
      %v1046 = vadd.f32 %v716, %v977
      %v1047 = vadd.f32 %v719, %v980
      %v1048 = vadd.f32 %v722, %v983
      %v1049 = vadd.f32 %v725, %v986
      %v1050 = vadd.f32 %v728, %v989
      %v1051 = vadd.f32 %v731, %v992
      %v1052 = vadd.f32 %v734, %v995
      %v1053 = vadd.f32 %v737, %v998
      %v1054 = vadd.f32 %v740, %v1001
      %v1055 = vadd.f32 %v743, %v1004
      %v1056 = vadd.f32 %v746, %v1007
      %v1057 = vadd.f32 %v749, %v1010
      %v1058 = vadd.f32 %v752, %v1013
      %v1059 = vadd.f32 %v755, %v1016
      %v1060 = vadd.f32 %v758, %v1019
      %v1061 = vadd.f32 %v761, %v1022
      %v1062 = vadd.f32 %v764, %v1025
      %v1063 = vadd.f32 %v767, %v1028
      %v1064 = vadd.f32 %v770, %v1031
      %v1066 = vsel %vm410, %v266, 0
      %v1069 = vsel %vm410, %v267, 0
      %v1072 = vsel %vm475, %v275, 0
      %1074 = vmatpush.msra.mxu0 0.0
      %1075 = vmatpush.msra.mxu0 0.0
      %1076 = vmatpush.msra.mxu0 0.0
      %1077 = vmatpush.msra.mxu0 0.0
      %1078 = vmatpush.msra.mxu0 0.0
      %1079 = vmatpush.msra.mxu0 0.0
      %1080 = vmatpush.msra.mxu0 0.0
      %1081 = vmatpush.msra.mxu0 0.0
      %1082 = vmatpush.msra.mxu0 0.0
      %1083 = vmatpush.msra.mxu0 0.0
      %1084 = vmatpush.msra.mxu0 0.0
      %1085 = vmatpush.msra.mxu0 0.0
      %1086 = vmatpush.msra.mxu0 0.0
      %1087 = vmatpush.msra.mxu0 0.0
      %1088 = vmatpush.msra.mxu0 0.0
      %1089 = vmatpush.msra.mxu0 %v1072
      %1090 = vmatmul.f32.gmra.mxu0 %v596
      %v1091 = vpop.f32.mrf.mxu0
      %v1092 = vadd.f32 0.0, %v1091
      %1093 = vmatmul.f32.gmra.mxu0 %v598
      %v1094 = vpop.f32.mrf.mxu0
      %v1095 = vadd.f32 0.0, %v1094
      %1096 = vmatmul.f32.gmra.mxu0 %v600
      %v1097 = vpop.f32.mrf.mxu0
      %v1098 = vadd.f32 0.0, %v1097
      %1099 = vmatmul.f32.gmra.mxu0 %v602
      %v1100 = vpop.f32.mrf.mxu0
      %v1101 = vadd.f32 0.0, %v1100
      %1102 = vmatmul.f32.gmra.mxu0 %v604
      %v1103 = vpop.f32.mrf.mxu0
      %v1104 = vadd.f32 0.0, %v1103
      %1105 = vmatmul.f32.gmra.mxu0 %v606
      %v1106 = vpop.f32.mrf.mxu0
      %v1107 = vadd.f32 0.0, %v1106
      %1108 = vmatmul.f32.gmra.mxu0 %v608
      %v1109 = vpop.f32.mrf.mxu0
      %v1110 = vadd.f32 0.0, %v1109
      %1111 = vmatmul.f32.gmra.mxu0 %v610
      %v1112 = vpop.f32.mrf.mxu0
      %v1113 = vadd.f32 0.0, %v1112
      %1114 = vmatmul.f32.gmra.mxu0 %v612
      %v1115 = vpop.f32.mrf.mxu0
      %v1116 = vadd.f32 0.0, %v1115
      %1117 = vmatmul.f32.gmra.mxu0 %v614
      %v1118 = vpop.f32.mrf.mxu0
      %v1119 = vadd.f32 0.0, %v1118
      %1120 = vmatmul.f32.gmra.mxu0 %v616
      %v1121 = vpop.f32.mrf.mxu0
      %v1122 = vadd.f32 0.0, %v1121
      %1123 = vmatmul.f32.gmra.mxu0 %v618
      %v1124 = vpop.f32.mrf.mxu0
      %v1125 = vadd.f32 0.0, %v1124
      %1126 = vmatmul.f32.gmra.mxu0 %v620
      %v1127 = vpop.f32.mrf.mxu0
      %v1128 = vadd.f32 0.0, %v1127
      %1129 = vmatmul.f32.gmra.mxu0 %v622
      %v1130 = vpop.f32.mrf.mxu0
      %v1131 = vadd.f32 0.0, %v1130
      %1132 = vmatmul.f32.gmra.mxu0 %v624
      %v1133 = vpop.f32.mrf.mxu0
      %v1134 = vadd.f32 0.0, %v1133
      %1135 = vmatmul.f32.gmra.mxu0 %v626
      %v1136 = vpop.f32.mrf.mxu0
      %v1137 = vadd.f32 0.0, %v1136
      %1138 = vmatmul.f32.gmra.mxu0 %v628
      %v1139 = vpop.f32.mrf.mxu0
      %v1140 = vadd.f32 0.0, %v1139
      %1141 = vmatmul.f32.gmra.mxu0 %v630
      %v1142 = vpop.f32.mrf.mxu0
      %v1143 = vadd.f32 0.0, %v1142
      %1144 = vmatmul.f32.gmra.mxu0 %v632
      %v1145 = vpop.f32.mrf.mxu0
      %v1146 = vadd.f32 0.0, %v1145
      %1147 = vmatmul.f32.gmra.mxu0 %v634
      %v1148 = vpop.f32.mrf.mxu0
      %v1149 = vadd.f32 0.0, %v1148
      %1150 = vmatmul.f32.gmra.mxu0 %v636
      %v1151 = vpop.f32.mrf.mxu0
      %v1152 = vadd.f32 0.0, %v1151
      %1153 = vmatmul.f32.gmra.mxu0 %v638
      %v1154 = vpop.f32.mrf.mxu0
      %v1155 = vadd.f32 0.0, %v1154
      %1156 = vmatmul.f32.gmra.mxu0 %v640
      %v1157 = vpop.f32.mrf.mxu0
      %v1158 = vadd.f32 0.0, %v1157
      %1159 = vmatmul.f32.gmra.mxu0 %v642
      %v1160 = vpop.f32.mrf.mxu0
      %v1161 = vadd.f32 0.0, %v1160
      %1162 = vmatmul.f32.gmra.mxu0 %v644
      %v1163 = vpop.f32.mrf.mxu0
      %v1164 = vadd.f32 0.0, %v1163
      %1165 = vmatmul.f32.gmra.mxu0 %v646
      %v1166 = vpop.f32.mrf.mxu0
      %v1167 = vadd.f32 0.0, %v1166
      %1168 = vmatmul.f32.gmra.mxu0 %v648
      %v1169 = vpop.f32.mrf.mxu0
      %v1170 = vadd.f32 0.0, %v1169
      %1171 = vmatmul.f32.gmra.mxu0 %v650
      %v1172 = vpop.f32.mrf.mxu0
      %v1173 = vadd.f32 0.0, %v1172
      %1174 = vmatmul.f32.gmra.mxu0 %v652
      %v1175 = vpop.f32.mrf.mxu0
      %v1176 = vadd.f32 0.0, %v1175
      %1177 = vmatmul.f32.gmra.mxu0 %v654
      %v1178 = vpop.f32.mrf.mxu0
      %v1179 = vadd.f32 0.0, %v1178
      %1180 = vmatmul.f32.gmra.mxu0 %v1066
      %v1181 = vpop.f32.mrf.mxu0
      %v1182 = vadd.f32 0.0, %v1181
      %1183 = vmatmul.f32.gmra.mxu0 %v1069
      %v1184 = vpop.f32.mrf.mxu0
      %v1185 = vadd.f32 0.0, %v1184
      %1186 = vdwg.mxu0
      %v1187 = vadd.f32 %v1033, %v1092
      %v1188 = vadd.f32 %v1034, %v1095
      %v1189 = vadd.f32 %v1035, %v1098
      %v1190 = vadd.f32 %v1036, %v1101
      %v1191 = vadd.f32 %v1037, %v1104
      %v1192 = vadd.f32 %v1038, %v1107
      %v1193 = vadd.f32 %v1039, %v1110
      %v1194 = vadd.f32 %v1040, %v1113
      %v1195 = vadd.f32 %v1041, %v1116
      %v1196 = vadd.f32 %v1042, %v1119
      %v1197 = vadd.f32 %v1043, %v1122
      %v1198 = vadd.f32 %v1044, %v1125
      %v1199 = vadd.f32 %v1045, %v1128
      %v1200 = vadd.f32 %v1046, %v1131
      %v1201 = vadd.f32 %v1047, %v1134
      %v1202 = vadd.f32 %v1048, %v1137
      %v1203 = vadd.f32 %v1049, %v1140
      %v1204 = vadd.f32 %v1050, %v1143
      %v1205 = vadd.f32 %v1051, %v1146
      %v1206 = vadd.f32 %v1052, %v1149
      %v1207 = vadd.f32 %v1053, %v1152
      %v1208 = vadd.f32 %v1054, %v1155
      %v1209 = vadd.f32 %v1055, %v1158
      %v1210 = vadd.f32 %v1056, %v1161
      %v1211 = vadd.f32 %v1057, %v1164
      %v1212 = vadd.f32 %v1058, %v1167
      %v1213 = vadd.f32 %v1059, %v1170
      %v1214 = vadd.f32 %v1060, %v1173
      %v1215 = vadd.f32 %v1061, %v1176
      %v1216 = vadd.f32 %v1062, %v1179
      %v1217 = vadd.f32 %v1063, %v1182
      %v1218 = vadd.f32 %v1064, %v1185
      %v1220 = vrot.slane %v266, 1
      %v1221 = vrot.slane %v267, 1
      %v1222 = vsel %vm329, %v1220, %v1221
      %v1223 = vrot.slane %v268, 1
      %v1224 = vsel %vm329, %v1221, %v1223
      %v1225 = vsel %vm410, %v1222, 0
      %v1227 = vsel %vm410, %v1224, 0
      %v1230 = vsel %vm475, %v276, 0
      %1232 = vmatpush.msra.mxu0 0.0
      %1233 = vmatpush.msra.mxu0 0.0
      %1234 = vmatpush.msra.mxu0 0.0
      %1235 = vmatpush.msra.mxu0 0.0
      %1236 = vmatpush.msra.mxu0 0.0
      %1237 = vmatpush.msra.mxu0 0.0
      %1238 = vmatpush.msra.mxu0 0.0
      %1239 = vmatpush.msra.mxu0 0.0
      %1240 = vmatpush.msra.mxu0 0.0
      %1241 = vmatpush.msra.mxu0 0.0
      %1242 = vmatpush.msra.mxu0 0.0
      %1243 = vmatpush.msra.mxu0 0.0
      %1244 = vmatpush.msra.mxu0 0.0
      %1245 = vmatpush.msra.mxu0 0.0
      %1246 = vmatpush.msra.mxu0 0.0
      %1247 = vmatpush.msra.mxu0 %v1230
      %1248 = vmatmul.f32.gmra.mxu0 %v415
      %v1249 = vpop.f32.mrf.mxu0
      %v1250 = vadd.f32 0.0, %v1249
      %1251 = vmatmul.f32.gmra.mxu0 %v417
      %v1252 = vpop.f32.mrf.mxu0
      %v1253 = vadd.f32 0.0, %v1252
      %1254 = vmatmul.f32.gmra.mxu0 %v419
      %v1255 = vpop.f32.mrf.mxu0
      %v1256 = vadd.f32 0.0, %v1255
      %1257 = vmatmul.f32.gmra.mxu0 %v421
      %v1258 = vpop.f32.mrf.mxu0
      %v1259 = vadd.f32 0.0, %v1258
      %1260 = vmatmul.f32.gmra.mxu0 %v423
      %v1261 = vpop.f32.mrf.mxu0
      %v1262 = vadd.f32 0.0, %v1261
      %1263 = vmatmul.f32.gmra.mxu0 %v425
      %v1264 = vpop.f32.mrf.mxu0
      %v1265 = vadd.f32 0.0, %v1264
      %1266 = vmatmul.f32.gmra.mxu0 %v427
      %v1267 = vpop.f32.mrf.mxu0
      %v1268 = vadd.f32 0.0, %v1267
      %1269 = vmatmul.f32.gmra.mxu0 %v429
      %v1270 = vpop.f32.mrf.mxu0
      %v1271 = vadd.f32 0.0, %v1270
      %1272 = vmatmul.f32.gmra.mxu0 %v431
      %v1273 = vpop.f32.mrf.mxu0
      %v1274 = vadd.f32 0.0, %v1273
      %1275 = vmatmul.f32.gmra.mxu0 %v433
      %v1276 = vpop.f32.mrf.mxu0
      %v1277 = vadd.f32 0.0, %v1276
      %1278 = vmatmul.f32.gmra.mxu0 %v435
      %v1279 = vpop.f32.mrf.mxu0
      %v1280 = vadd.f32 0.0, %v1279
      %1281 = vmatmul.f32.gmra.mxu0 %v437
      %v1282 = vpop.f32.mrf.mxu0
      %v1283 = vadd.f32 0.0, %v1282
      %1284 = vmatmul.f32.gmra.mxu0 %v439
      %v1285 = vpop.f32.mrf.mxu0
      %v1286 = vadd.f32 0.0, %v1285
      %1287 = vmatmul.f32.gmra.mxu0 %v441
      %v1288 = vpop.f32.mrf.mxu0
      %v1289 = vadd.f32 0.0, %v1288
      %1290 = vmatmul.f32.gmra.mxu0 %v443
      %v1291 = vpop.f32.mrf.mxu0
      %v1292 = vadd.f32 0.0, %v1291
      %1293 = vmatmul.f32.gmra.mxu0 %v445
      %v1294 = vpop.f32.mrf.mxu0
      %v1295 = vadd.f32 0.0, %v1294
      %1296 = vmatmul.f32.gmra.mxu0 %v447
      %v1297 = vpop.f32.mrf.mxu0
      %v1298 = vadd.f32 0.0, %v1297
      %1299 = vmatmul.f32.gmra.mxu0 %v449
      %v1300 = vpop.f32.mrf.mxu0
      %v1301 = vadd.f32 0.0, %v1300
      %1302 = vmatmul.f32.gmra.mxu0 %v451
      %v1303 = vpop.f32.mrf.mxu0
      %v1304 = vadd.f32 0.0, %v1303
      %1305 = vmatmul.f32.gmra.mxu0 %v453
      %v1306 = vpop.f32.mrf.mxu0
      %v1307 = vadd.f32 0.0, %v1306
      %1308 = vmatmul.f32.gmra.mxu0 %v455
      %v1309 = vpop.f32.mrf.mxu0
      %v1310 = vadd.f32 0.0, %v1309
      %1311 = vmatmul.f32.gmra.mxu0 %v457
      %v1312 = vpop.f32.mrf.mxu0
      %v1313 = vadd.f32 0.0, %v1312
      %1314 = vmatmul.f32.gmra.mxu0 %v459
      %v1315 = vpop.f32.mrf.mxu0
      %v1316 = vadd.f32 0.0, %v1315
      %1317 = vmatmul.f32.gmra.mxu0 %v461
      %v1318 = vpop.f32.mrf.mxu0
      %v1319 = vadd.f32 0.0, %v1318
      %1320 = vmatmul.f32.gmra.mxu0 %v463
      %v1321 = vpop.f32.mrf.mxu0
      %v1322 = vadd.f32 0.0, %v1321
      %1323 = vmatmul.f32.gmra.mxu0 %v465
      %v1324 = vpop.f32.mrf.mxu0
      %v1325 = vadd.f32 0.0, %v1324
      %1326 = vmatmul.f32.gmra.mxu0 %v467
      %v1327 = vpop.f32.mrf.mxu0
      %v1328 = vadd.f32 0.0, %v1327
      %1329 = vmatmul.f32.gmra.mxu0 %v469
      %v1330 = vpop.f32.mrf.mxu0
      %v1331 = vadd.f32 0.0, %v1330
      %1332 = vmatmul.f32.gmra.mxu0 %v471
      %v1333 = vpop.f32.mrf.mxu0
      %v1334 = vadd.f32 0.0, %v1333
      %1335 = vmatmul.f32.gmra.mxu0 %v473
      %v1336 = vpop.f32.mrf.mxu0
      %v1337 = vadd.f32 0.0, %v1336
      %1338 = vmatmul.f32.gmra.mxu0 %v1225
      %v1339 = vpop.f32.mrf.mxu0
      %v1340 = vadd.f32 0.0, %v1339
      %1341 = vmatmul.f32.gmra.mxu0 %v1227
      %v1342 = vpop.f32.mrf.mxu0
      %v1343 = vadd.f32 0.0, %v1342
      %1344 = vdwg.mxu0
      %v1345 = vadd.f32 %v1187, %v1250
      %v1346 = vadd.f32 %v1188, %v1253
      %v1347 = vadd.f32 %v1189, %v1256
      %v1348 = vadd.f32 %v1190, %v1259
      %v1349 = vadd.f32 %v1191, %v1262
      %v1350 = vadd.f32 %v1192, %v1265
      %v1351 = vadd.f32 %v1193, %v1268
      %v1352 = vadd.f32 %v1194, %v1271
      %v1353 = vadd.f32 %v1195, %v1274
      %v1354 = vadd.f32 %v1196, %v1277
      %v1355 = vadd.f32 %v1197, %v1280
      %v1356 = vadd.f32 %v1198, %v1283
      %v1357 = vadd.f32 %v1199, %v1286
      %v1358 = vadd.f32 %v1200, %v1289
      %v1359 = vadd.f32 %v1201, %v1292
      %v1360 = vadd.f32 %v1202, %v1295
      %v1361 = vadd.f32 %v1203, %v1298
      %v1362 = vadd.f32 %v1204, %v1301
      %v1363 = vadd.f32 %v1205, %v1304
      %v1364 = vadd.f32 %v1206, %v1307
      %v1365 = vadd.f32 %v1207, %v1310
      %v1366 = vadd.f32 %v1208, %v1313
      %v1367 = vadd.f32 %v1209, %v1316
      %v1368 = vadd.f32 %v1210, %v1319
      %v1369 = vadd.f32 %v1211, %v1322
      %v1370 = vadd.f32 %v1212, %v1325
      %v1371 = vadd.f32 %v1213, %v1328
      %v1372 = vadd.f32 %v1214, %v1331
      %v1373 = vadd.f32 %v1215, %v1334
      %v1374 = vadd.f32 %v1216, %v1337
      %v1375 = vadd.f32 %v1217, %v1340
      %v1376 = vadd.f32 %v1218, %v1343
      %v1377 = vrot.slane %v266, 2
      %v1378 = vrot.slane %v267, 2
      %v1379 = vsel %vm772, %v1377, %v1378
      %v1380 = vrot.slane %v268, 2
      %v1381 = vsel %vm772, %v1378, %v1380
      %v1382 = vsel %vm410, %v1379, 0
      %v1384 = vsel %vm410, %v1381, 0
      %v1387 = vsel %vm475, %v277, 0
      %1389 = vmatpush.msra.mxu0 0.0
      %1390 = vmatpush.msra.mxu0 0.0
      %1391 = vmatpush.msra.mxu0 0.0
      %1392 = vmatpush.msra.mxu0 0.0
      %1393 = vmatpush.msra.mxu0 0.0
      %1394 = vmatpush.msra.mxu0 0.0
      %1395 = vmatpush.msra.mxu0 0.0
      %1396 = vmatpush.msra.mxu0 0.0
      %1397 = vmatpush.msra.mxu0 0.0
      %1398 = vmatpush.msra.mxu0 0.0
      %1399 = vmatpush.msra.mxu0 0.0
      %1400 = vmatpush.msra.mxu0 0.0
      %1401 = vmatpush.msra.mxu0 0.0
      %1402 = vmatpush.msra.mxu0 0.0
      %1403 = vmatpush.msra.mxu0 0.0
      %1404 = vmatpush.msra.mxu0 %v1387
      %1405 = vmatmul.f32.gmra.mxu0 %v857
      %v1406 = vpop.f32.mrf.mxu0
      %v1407 = vadd.f32 0.0, %v1406
      %1408 = vmatmul.f32.gmra.mxu0 %v859
      %v1409 = vpop.f32.mrf.mxu0
      %v1410 = vadd.f32 0.0, %v1409
      %1411 = vmatmul.f32.gmra.mxu0 %v861
      %v1412 = vpop.f32.mrf.mxu0
      %v1413 = vadd.f32 0.0, %v1412
      %1414 = vmatmul.f32.gmra.mxu0 %v863
      %v1415 = vpop.f32.mrf.mxu0
      %v1416 = vadd.f32 0.0, %v1415
      %1417 = vmatmul.f32.gmra.mxu0 %v865
      %v1418 = vpop.f32.mrf.mxu0
      %v1419 = vadd.f32 0.0, %v1418
      %1420 = vmatmul.f32.gmra.mxu0 %v867
      %v1421 = vpop.f32.mrf.mxu0
      %v1422 = vadd.f32 0.0, %v1421
      %1423 = vmatmul.f32.gmra.mxu0 %v869
      %v1424 = vpop.f32.mrf.mxu0
      %v1425 = vadd.f32 0.0, %v1424
      %1426 = vmatmul.f32.gmra.mxu0 %v871
      %v1427 = vpop.f32.mrf.mxu0
      %v1428 = vadd.f32 0.0, %v1427
      %1429 = vmatmul.f32.gmra.mxu0 %v873
      %v1430 = vpop.f32.mrf.mxu0
      %v1431 = vadd.f32 0.0, %v1430
      %1432 = vmatmul.f32.gmra.mxu0 %v875
      %v1433 = vpop.f32.mrf.mxu0
      %v1434 = vadd.f32 0.0, %v1433
      %1435 = vmatmul.f32.gmra.mxu0 %v877
      %v1436 = vpop.f32.mrf.mxu0
      %v1437 = vadd.f32 0.0, %v1436
      %1438 = vmatmul.f32.gmra.mxu0 %v879
      %v1439 = vpop.f32.mrf.mxu0
      %v1440 = vadd.f32 0.0, %v1439
      %1441 = vmatmul.f32.gmra.mxu0 %v881
      %v1442 = vpop.f32.mrf.mxu0
      %v1443 = vadd.f32 0.0, %v1442
      %1444 = vmatmul.f32.gmra.mxu0 %v883
      %v1445 = vpop.f32.mrf.mxu0
      %v1446 = vadd.f32 0.0, %v1445
      %1447 = vmatmul.f32.gmra.mxu0 %v885
      %v1448 = vpop.f32.mrf.mxu0
      %v1449 = vadd.f32 0.0, %v1448
      %1450 = vmatmul.f32.gmra.mxu0 %v887
      %v1451 = vpop.f32.mrf.mxu0
      %v1452 = vadd.f32 0.0, %v1451
      %1453 = vmatmul.f32.gmra.mxu0 %v889
      %v1454 = vpop.f32.mrf.mxu0
      %v1455 = vadd.f32 0.0, %v1454
      %1456 = vmatmul.f32.gmra.mxu0 %v891
      %v1457 = vpop.f32.mrf.mxu0
      %v1458 = vadd.f32 0.0, %v1457
      %1459 = vmatmul.f32.gmra.mxu0 %v893
      %v1460 = vpop.f32.mrf.mxu0
      %v1461 = vadd.f32 0.0, %v1460
      %1462 = vmatmul.f32.gmra.mxu0 %v895
      %v1463 = vpop.f32.mrf.mxu0
      %v1464 = vadd.f32 0.0, %v1463
      %1465 = vmatmul.f32.gmra.mxu0 %v897
      %v1466 = vpop.f32.mrf.mxu0
      %v1467 = vadd.f32 0.0, %v1466
      %1468 = vmatmul.f32.gmra.mxu0 %v899
      %v1469 = vpop.f32.mrf.mxu0
      %v1470 = vadd.f32 0.0, %v1469
      %1471 = vmatmul.f32.gmra.mxu0 %v901
      %v1472 = vpop.f32.mrf.mxu0
      %v1473 = vadd.f32 0.0, %v1472
      %1474 = vmatmul.f32.gmra.mxu0 %v903
      %v1475 = vpop.f32.mrf.mxu0
      %v1476 = vadd.f32 0.0, %v1475
      %1477 = vmatmul.f32.gmra.mxu0 %v905
      %v1478 = vpop.f32.mrf.mxu0
      %v1479 = vadd.f32 0.0, %v1478
      %1480 = vmatmul.f32.gmra.mxu0 %v907
      %v1481 = vpop.f32.mrf.mxu0
      %v1482 = vadd.f32 0.0, %v1481
      %1483 = vmatmul.f32.gmra.mxu0 %v909
      %v1484 = vpop.f32.mrf.mxu0
      %v1485 = vadd.f32 0.0, %v1484
      %1486 = vmatmul.f32.gmra.mxu0 %v911
      %v1487 = vpop.f32.mrf.mxu0
      %v1488 = vadd.f32 0.0, %v1487
      %1489 = vmatmul.f32.gmra.mxu0 %v913
      %v1490 = vpop.f32.mrf.mxu0
      %v1491 = vadd.f32 0.0, %v1490
      %1492 = vmatmul.f32.gmra.mxu0 %v915
      %v1493 = vpop.f32.mrf.mxu0
      %v1494 = vadd.f32 0.0, %v1493
      %1495 = vmatmul.f32.gmra.mxu0 %v1382
      %v1496 = vpop.f32.mrf.mxu0
      %v1497 = vadd.f32 0.0, %v1496
      %1498 = vmatmul.f32.gmra.mxu0 %v1384
      %v1499 = vpop.f32.mrf.mxu0
      %v1500 = vadd.f32 0.0, %v1499
      %1501 = vdwg.mxu0
      %v1502 = vadd.f32 %v1345, %v1407
      %v1503 = vadd.f32 %v1346, %v1410
      %v1504 = vadd.f32 %v1347, %v1413
      %v1505 = vadd.f32 %v1348, %v1416
      %v1506 = vadd.f32 %v1349, %v1419
      %v1507 = vadd.f32 %v1350, %v1422
      %v1508 = vadd.f32 %v1351, %v1425
      %v1509 = vadd.f32 %v1352, %v1428
      %v1510 = vadd.f32 %v1353, %v1431
      %v1511 = vadd.f32 %v1354, %v1434
      %v1512 = vadd.f32 %v1355, %v1437
      %v1513 = vadd.f32 %v1356, %v1440
      %v1514 = vadd.f32 %v1357, %v1443
      %v1515 = vadd.f32 %v1358, %v1446
      %v1516 = vadd.f32 %v1359, %v1449
      %v1517 = vadd.f32 %v1360, %v1452
      %v1518 = vadd.f32 %v1361, %v1455
      %v1519 = vadd.f32 %v1362, %v1458
      %v1520 = vadd.f32 %v1363, %v1461
      %v1521 = vadd.f32 %v1364, %v1464
      %v1522 = vadd.f32 %v1365, %v1467
      %v1523 = vadd.f32 %v1366, %v1470
      %v1524 = vadd.f32 %v1367, %v1473
      %v1525 = vadd.f32 %v1368, %v1476
      %v1526 = vadd.f32 %v1369, %v1479
      %v1527 = vadd.f32 %v1370, %v1482
      %v1528 = vadd.f32 %v1371, %v1485
      %v1529 = vadd.f32 %v1372, %v1488
      %v1530 = vadd.f32 %v1373, %v1491
      %v1531 = vadd.f32 %v1374, %v1494
      %v1532 = vadd.f32 %v1375, %v1497
      %v1533 = vadd.f32 %v1376, %v1500
      %v1535 = vsel %vm410, %v269, 0
      %v1538 = vsel %vm410, %v270, 0
      %v1541 = vsel %vm475, %v278, 0
      %1543 = vmatpush.msra.mxu0 0.0
      %1544 = vmatpush.msra.mxu0 0.0
      %1545 = vmatpush.msra.mxu0 0.0
      %1546 = vmatpush.msra.mxu0 0.0
      %1547 = vmatpush.msra.mxu0 0.0
      %1548 = vmatpush.msra.mxu0 0.0
      %1549 = vmatpush.msra.mxu0 0.0
      %1550 = vmatpush.msra.mxu0 0.0
      %1551 = vmatpush.msra.mxu0 0.0
      %1552 = vmatpush.msra.mxu0 0.0
      %1553 = vmatpush.msra.mxu0 0.0
      %1554 = vmatpush.msra.mxu0 0.0
      %1555 = vmatpush.msra.mxu0 0.0
      %1556 = vmatpush.msra.mxu0 0.0
      %1557 = vmatpush.msra.mxu0 0.0
      %1558 = vmatpush.msra.mxu0 %v1541
      %1559 = vmatmul.f32.gmra.mxu0 %v600
      %v1560 = vpop.f32.mrf.mxu0
      %v1561 = vadd.f32 0.0, %v1560
      %1562 = vmatmul.f32.gmra.mxu0 %v602
      %v1563 = vpop.f32.mrf.mxu0
      %v1564 = vadd.f32 0.0, %v1563
      %1565 = vmatmul.f32.gmra.mxu0 %v604
      %v1566 = vpop.f32.mrf.mxu0
      %v1567 = vadd.f32 0.0, %v1566
      %1568 = vmatmul.f32.gmra.mxu0 %v606
      %v1569 = vpop.f32.mrf.mxu0
      %v1570 = vadd.f32 0.0, %v1569
      %1571 = vmatmul.f32.gmra.mxu0 %v608
      %v1572 = vpop.f32.mrf.mxu0
      %v1573 = vadd.f32 0.0, %v1572
      %1574 = vmatmul.f32.gmra.mxu0 %v610
      %v1575 = vpop.f32.mrf.mxu0
      %v1576 = vadd.f32 0.0, %v1575
      %1577 = vmatmul.f32.gmra.mxu0 %v612
      %v1578 = vpop.f32.mrf.mxu0
      %v1579 = vadd.f32 0.0, %v1578
      %1580 = vmatmul.f32.gmra.mxu0 %v614
      %v1581 = vpop.f32.mrf.mxu0
      %v1582 = vadd.f32 0.0, %v1581
      %1583 = vmatmul.f32.gmra.mxu0 %v616
      %v1584 = vpop.f32.mrf.mxu0
      %v1585 = vadd.f32 0.0, %v1584
      %1586 = vmatmul.f32.gmra.mxu0 %v618
      %v1587 = vpop.f32.mrf.mxu0
      %v1588 = vadd.f32 0.0, %v1587
      %1589 = vmatmul.f32.gmra.mxu0 %v620
      %v1590 = vpop.f32.mrf.mxu0
      %v1591 = vadd.f32 0.0, %v1590
      %1592 = vmatmul.f32.gmra.mxu0 %v622
      %v1593 = vpop.f32.mrf.mxu0
      %v1594 = vadd.f32 0.0, %v1593
      %1595 = vmatmul.f32.gmra.mxu0 %v624
      %v1596 = vpop.f32.mrf.mxu0
      %v1597 = vadd.f32 0.0, %v1596
      %1598 = vmatmul.f32.gmra.mxu0 %v626
      %v1599 = vpop.f32.mrf.mxu0
      %v1600 = vadd.f32 0.0, %v1599
      %1601 = vmatmul.f32.gmra.mxu0 %v628
      %v1602 = vpop.f32.mrf.mxu0
      %v1603 = vadd.f32 0.0, %v1602
      %1604 = vmatmul.f32.gmra.mxu0 %v630
      %v1605 = vpop.f32.mrf.mxu0
      %v1606 = vadd.f32 0.0, %v1605
      %1607 = vmatmul.f32.gmra.mxu0 %v632
      %v1608 = vpop.f32.mrf.mxu0
      %v1609 = vadd.f32 0.0, %v1608
      %1610 = vmatmul.f32.gmra.mxu0 %v634
      %v1611 = vpop.f32.mrf.mxu0
      %v1612 = vadd.f32 0.0, %v1611
      %1613 = vmatmul.f32.gmra.mxu0 %v636
      %v1614 = vpop.f32.mrf.mxu0
      %v1615 = vadd.f32 0.0, %v1614
      %1616 = vmatmul.f32.gmra.mxu0 %v638
      %v1617 = vpop.f32.mrf.mxu0
      %v1618 = vadd.f32 0.0, %v1617
      %1619 = vmatmul.f32.gmra.mxu0 %v640
      %v1620 = vpop.f32.mrf.mxu0
      %v1621 = vadd.f32 0.0, %v1620
      %1622 = vmatmul.f32.gmra.mxu0 %v642
      %v1623 = vpop.f32.mrf.mxu0
      %v1624 = vadd.f32 0.0, %v1623
      %1625 = vmatmul.f32.gmra.mxu0 %v644
      %v1626 = vpop.f32.mrf.mxu0
      %v1627 = vadd.f32 0.0, %v1626
      %1628 = vmatmul.f32.gmra.mxu0 %v646
      %v1629 = vpop.f32.mrf.mxu0
      %v1630 = vadd.f32 0.0, %v1629
      %1631 = vmatmul.f32.gmra.mxu0 %v648
      %v1632 = vpop.f32.mrf.mxu0
      %v1633 = vadd.f32 0.0, %v1632
      %1634 = vmatmul.f32.gmra.mxu0 %v650
      %v1635 = vpop.f32.mrf.mxu0
      %v1636 = vadd.f32 0.0, %v1635
      %1637 = vmatmul.f32.gmra.mxu0 %v652
      %v1638 = vpop.f32.mrf.mxu0
      %v1639 = vadd.f32 0.0, %v1638
      %1640 = vmatmul.f32.gmra.mxu0 %v654
      %v1641 = vpop.f32.mrf.mxu0
      %v1642 = vadd.f32 0.0, %v1641
      %1643 = vmatmul.f32.gmra.mxu0 %v1066
      %v1644 = vpop.f32.mrf.mxu0
      %v1645 = vadd.f32 0.0, %v1644
      %1646 = vmatmul.f32.gmra.mxu0 %v1069
      %v1647 = vpop.f32.mrf.mxu0
      %v1648 = vadd.f32 0.0, %v1647
      %1649 = vmatmul.f32.gmra.mxu0 %v1535
      %v1650 = vpop.f32.mrf.mxu0
      %v1651 = vadd.f32 0.0, %v1650
      %1652 = vmatmul.f32.gmra.mxu0 %v1538
      %v1653 = vpop.f32.mrf.mxu0
      %v1654 = vadd.f32 0.0, %v1653
      %1655 = vdwg.mxu0
      %v1656 = vadd.f32 %v1502, %v1561
      %v1657 = vadd.f32 %v1503, %v1564
      %v1658 = vadd.f32 %v1504, %v1567
      %v1659 = vadd.f32 %v1505, %v1570
      %v1660 = vadd.f32 %v1506, %v1573
      %v1661 = vadd.f32 %v1507, %v1576
      %v1662 = vadd.f32 %v1508, %v1579
      %v1663 = vadd.f32 %v1509, %v1582
      %v1664 = vadd.f32 %v1510, %v1585
      %v1665 = vadd.f32 %v1511, %v1588
      %v1666 = vadd.f32 %v1512, %v1591
      %v1667 = vadd.f32 %v1513, %v1594
      %v1668 = vadd.f32 %v1514, %v1597
      %v1669 = vadd.f32 %v1515, %v1600
      %v1670 = vadd.f32 %v1516, %v1603
      %v1671 = vadd.f32 %v1517, %v1606
      %v1672 = vadd.f32 %v1518, %v1609
      %v1673 = vadd.f32 %v1519, %v1612
      %v1674 = vadd.f32 %v1520, %v1615
      %v1675 = vadd.f32 %v1521, %v1618
      %v1676 = vadd.f32 %v1522, %v1621
      %v1677 = vadd.f32 %v1523, %v1624
      %v1678 = vadd.f32 %v1524, %v1627
      %v1679 = vadd.f32 %v1525, %v1630
      %v1680 = vadd.f32 %v1526, %v1633
      %v1681 = vadd.f32 %v1527, %v1636
      %v1682 = vadd.f32 %v1528, %v1639
      %v1683 = vadd.f32 %v1529, %v1642
      %v1684 = vadd.f32 %v1530, %v1645
      %v1685 = vadd.f32 %v1531, %v1648
      %v1686 = vadd.f32 %v1532, %v1651
      %v1687 = vadd.f32 %v1533, %v1654
      %v1689 = vrot.slane %v269, 1
      %v1690 = vrot.slane %v270, 1
      %v1691 = vsel %vm329, %v1689, %v1690
      %v1692 = vrot.slane %v271, 1
      %v1693 = vsel %vm329, %v1690, %v1692
      %v1694 = vsel %vm410, %v1691, 0
      %v1696 = vsel %vm410, %v1693, 0
      %v1699 = vsel %vm475, %v279, 0
      %1701 = vmatpush.msra.mxu0 0.0
      %1702 = vmatpush.msra.mxu0 0.0
      %1703 = vmatpush.msra.mxu0 0.0
      %1704 = vmatpush.msra.mxu0 0.0
      %1705 = vmatpush.msra.mxu0 0.0
      %1706 = vmatpush.msra.mxu0 0.0
      %1707 = vmatpush.msra.mxu0 0.0
      %1708 = vmatpush.msra.mxu0 0.0
      %1709 = vmatpush.msra.mxu0 0.0
      %1710 = vmatpush.msra.mxu0 0.0
      %1711 = vmatpush.msra.mxu0 0.0
      %1712 = vmatpush.msra.mxu0 0.0
      %1713 = vmatpush.msra.mxu0 0.0
      %1714 = vmatpush.msra.mxu0 0.0
      %1715 = vmatpush.msra.mxu0 0.0
      %1716 = vmatpush.msra.mxu0 %v1699
      %1717 = vmatmul.f32.gmra.mxu0 %v419
      %v1718 = vpop.f32.mrf.mxu0
      %v1719 = vadd.f32 0.0, %v1718
      %1720 = vmatmul.f32.gmra.mxu0 %v421
      %v1721 = vpop.f32.mrf.mxu0
      %v1722 = vadd.f32 0.0, %v1721
      %1723 = vmatmul.f32.gmra.mxu0 %v423
      %v1724 = vpop.f32.mrf.mxu0
      %v1725 = vadd.f32 0.0, %v1724
      %1726 = vmatmul.f32.gmra.mxu0 %v425
      %v1727 = vpop.f32.mrf.mxu0
      %v1728 = vadd.f32 0.0, %v1727
      %1729 = vmatmul.f32.gmra.mxu0 %v427
      %v1730 = vpop.f32.mrf.mxu0
      %v1731 = vadd.f32 0.0, %v1730
      %1732 = vmatmul.f32.gmra.mxu0 %v429
      %v1733 = vpop.f32.mrf.mxu0
      %v1734 = vadd.f32 0.0, %v1733
      %1735 = vmatmul.f32.gmra.mxu0 %v431
      %v1736 = vpop.f32.mrf.mxu0
      %v1737 = vadd.f32 0.0, %v1736
      %1738 = vmatmul.f32.gmra.mxu0 %v433
      %v1739 = vpop.f32.mrf.mxu0
      %v1740 = vadd.f32 0.0, %v1739
      %1741 = vmatmul.f32.gmra.mxu0 %v435
      %v1742 = vpop.f32.mrf.mxu0
      %v1743 = vadd.f32 0.0, %v1742
      %1744 = vmatmul.f32.gmra.mxu0 %v437
      %v1745 = vpop.f32.mrf.mxu0
      %v1746 = vadd.f32 0.0, %v1745
      %1747 = vmatmul.f32.gmra.mxu0 %v439
      %v1748 = vpop.f32.mrf.mxu0
      %v1749 = vadd.f32 0.0, %v1748
      %1750 = vmatmul.f32.gmra.mxu0 %v441
      %v1751 = vpop.f32.mrf.mxu0
      %v1752 = vadd.f32 0.0, %v1751
      %1753 = vmatmul.f32.gmra.mxu0 %v443
      %v1754 = vpop.f32.mrf.mxu0
      %v1755 = vadd.f32 0.0, %v1754
      %1756 = vmatmul.f32.gmra.mxu0 %v445
      %v1757 = vpop.f32.mrf.mxu0
      %v1758 = vadd.f32 0.0, %v1757
      %1759 = vmatmul.f32.gmra.mxu0 %v447
      %v1760 = vpop.f32.mrf.mxu0
      %v1761 = vadd.f32 0.0, %v1760
      %1762 = vmatmul.f32.gmra.mxu0 %v449
      %v1763 = vpop.f32.mrf.mxu0
      %v1764 = vadd.f32 0.0, %v1763
      %1765 = vmatmul.f32.gmra.mxu0 %v451
      %v1766 = vpop.f32.mrf.mxu0
      %v1767 = vadd.f32 0.0, %v1766
      %1768 = vmatmul.f32.gmra.mxu0 %v453
      %v1769 = vpop.f32.mrf.mxu0
      %v1770 = vadd.f32 0.0, %v1769
      %1771 = vmatmul.f32.gmra.mxu0 %v455
      %v1772 = vpop.f32.mrf.mxu0
      %v1773 = vadd.f32 0.0, %v1772
      %1774 = vmatmul.f32.gmra.mxu0 %v457
      %v1775 = vpop.f32.mrf.mxu0
      %v1776 = vadd.f32 0.0, %v1775
      %1777 = vmatmul.f32.gmra.mxu0 %v459
      %v1778 = vpop.f32.mrf.mxu0
      %v1779 = vadd.f32 0.0, %v1778
      %1780 = vmatmul.f32.gmra.mxu0 %v461
      %v1781 = vpop.f32.mrf.mxu0
      %v1782 = vadd.f32 0.0, %v1781
      %1783 = vmatmul.f32.gmra.mxu0 %v463
      %v1784 = vpop.f32.mrf.mxu0
      %v1785 = vadd.f32 0.0, %v1784
      %1786 = vmatmul.f32.gmra.mxu0 %v465
      %v1787 = vpop.f32.mrf.mxu0
      %v1788 = vadd.f32 0.0, %v1787
      %1789 = vmatmul.f32.gmra.mxu0 %v467
      %v1790 = vpop.f32.mrf.mxu0
      %v1791 = vadd.f32 0.0, %v1790
      %1792 = vmatmul.f32.gmra.mxu0 %v469
      %v1793 = vpop.f32.mrf.mxu0
      %v1794 = vadd.f32 0.0, %v1793
      %1795 = vmatmul.f32.gmra.mxu0 %v471
      %v1796 = vpop.f32.mrf.mxu0
      %v1797 = vadd.f32 0.0, %v1796
      %1798 = vmatmul.f32.gmra.mxu0 %v473
      %v1799 = vpop.f32.mrf.mxu0
      %v1800 = vadd.f32 0.0, %v1799
      %1801 = vmatmul.f32.gmra.mxu0 %v1225
      %v1802 = vpop.f32.mrf.mxu0
      %v1803 = vadd.f32 0.0, %v1802
      %1804 = vmatmul.f32.gmra.mxu0 %v1227
      %v1805 = vpop.f32.mrf.mxu0
      %v1806 = vadd.f32 0.0, %v1805
      %1807 = vmatmul.f32.gmra.mxu0 %v1694
      %v1808 = vpop.f32.mrf.mxu0
      %v1809 = vadd.f32 0.0, %v1808
      %1810 = vmatmul.f32.gmra.mxu0 %v1696
      %v1811 = vpop.f32.mrf.mxu0
      %v1812 = vadd.f32 0.0, %v1811
      %1813 = vdwg.mxu0
      %v1814 = vadd.f32 %v1656, %v1719
      %v1815 = vadd.f32 %v1657, %v1722
      %v1816 = vadd.f32 %v1658, %v1725
      %v1817 = vadd.f32 %v1659, %v1728
      %v1818 = vadd.f32 %v1660, %v1731
      %v1819 = vadd.f32 %v1661, %v1734
      %v1820 = vadd.f32 %v1662, %v1737
      %v1821 = vadd.f32 %v1663, %v1740
      %v1822 = vadd.f32 %v1664, %v1743
      %v1823 = vadd.f32 %v1665, %v1746
      %v1824 = vadd.f32 %v1666, %v1749
      %v1825 = vadd.f32 %v1667, %v1752
      %v1826 = vadd.f32 %v1668, %v1755
      %v1827 = vadd.f32 %v1669, %v1758
      %v1828 = vadd.f32 %v1670, %v1761
      %v1829 = vadd.f32 %v1671, %v1764
      %v1830 = vadd.f32 %v1672, %v1767
      %v1831 = vadd.f32 %v1673, %v1770
      %v1832 = vadd.f32 %v1674, %v1773
      %v1833 = vadd.f32 %v1675, %v1776
      %v1834 = vadd.f32 %v1676, %v1779
      %v1835 = vadd.f32 %v1677, %v1782
      %v1836 = vadd.f32 %v1678, %v1785
      %v1837 = vadd.f32 %v1679, %v1788
      %v1838 = vadd.f32 %v1680, %v1791
      %v1839 = vadd.f32 %v1681, %v1794
      %v1840 = vadd.f32 %v1682, %v1797
      %v1841 = vadd.f32 %v1683, %v1800
      %v1842 = vadd.f32 %v1684, %v1803
      %v1843 = vadd.f32 %v1685, %v1806
      %v1844 = vadd.f32 %v1686, %v1809
      %v1845 = vadd.f32 %v1687, %v1812
      %v1846 = vrot.slane %v269, 2
      %v1847 = vrot.slane %v270, 2
      %v1848 = vsel %vm772, %v1846, %v1847
      %v1849 = vrot.slane %v271, 2
      %v1850 = vsel %vm772, %v1847, %v1849
      %v1851 = vsel %vm410, %v1848, 0
      %v1853 = vsel %vm410, %v1850, 0
      %v1856 = vsel %vm475, %v280, 0
      %1858 = vmatpush.msra.mxu0 0.0
      %1859 = vmatpush.msra.mxu0 0.0
      %1860 = vmatpush.msra.mxu0 0.0
      %1861 = vmatpush.msra.mxu0 0.0
      %1862 = vmatpush.msra.mxu0 0.0
      %1863 = vmatpush.msra.mxu0 0.0
      %1864 = vmatpush.msra.mxu0 0.0
      %1865 = vmatpush.msra.mxu0 0.0
      %1866 = vmatpush.msra.mxu0 0.0
      %1867 = vmatpush.msra.mxu0 0.0
      %1868 = vmatpush.msra.mxu0 0.0
      %1869 = vmatpush.msra.mxu0 0.0
      %1870 = vmatpush.msra.mxu0 0.0
      %1871 = vmatpush.msra.mxu0 0.0
      %1872 = vmatpush.msra.mxu0 0.0
      %1873 = vmatpush.msra.mxu0 %v1856
      %1874 = vmatmul.f32.gmra.mxu0 %v861
      %v1875 = vpop.f32.mrf.mxu0
      %v1876 = vadd.f32 0.0, %v1875
      %1877 = vmatmul.f32.gmra.mxu0 %v863
      %v1878 = vpop.f32.mrf.mxu0
      %v1879 = vadd.f32 0.0, %v1878
      %1880 = vmatmul.f32.gmra.mxu0 %v865
      %v1881 = vpop.f32.mrf.mxu0
      %v1882 = vadd.f32 0.0, %v1881
      %1883 = vmatmul.f32.gmra.mxu0 %v867
      %v1884 = vpop.f32.mrf.mxu0
      %v1885 = vadd.f32 0.0, %v1884
      %1886 = vmatmul.f32.gmra.mxu0 %v869
      %v1887 = vpop.f32.mrf.mxu0
      %v1888 = vadd.f32 0.0, %v1887
      %1889 = vmatmul.f32.gmra.mxu0 %v871
      %v1890 = vpop.f32.mrf.mxu0
      %v1891 = vadd.f32 0.0, %v1890
      %1892 = vmatmul.f32.gmra.mxu0 %v873
      %v1893 = vpop.f32.mrf.mxu0
      %v1894 = vadd.f32 0.0, %v1893
      %1895 = vmatmul.f32.gmra.mxu0 %v875
      %v1896 = vpop.f32.mrf.mxu0
      %v1897 = vadd.f32 0.0, %v1896
      %1898 = vmatmul.f32.gmra.mxu0 %v877
      %v1899 = vpop.f32.mrf.mxu0
      %v1900 = vadd.f32 0.0, %v1899
      %1901 = vmatmul.f32.gmra.mxu0 %v879
      %v1902 = vpop.f32.mrf.mxu0
      %v1903 = vadd.f32 0.0, %v1902
      %1904 = vmatmul.f32.gmra.mxu0 %v881
      %v1905 = vpop.f32.mrf.mxu0
      %v1906 = vadd.f32 0.0, %v1905
      %1907 = vmatmul.f32.gmra.mxu0 %v883
      %v1908 = vpop.f32.mrf.mxu0
      %v1909 = vadd.f32 0.0, %v1908
      %1910 = vmatmul.f32.gmra.mxu0 %v885
      %v1911 = vpop.f32.mrf.mxu0
      %v1912 = vadd.f32 0.0, %v1911
      %1913 = vmatmul.f32.gmra.mxu0 %v887
      %v1914 = vpop.f32.mrf.mxu0
      %v1915 = vadd.f32 0.0, %v1914
      %1916 = vmatmul.f32.gmra.mxu0 %v889
      %v1917 = vpop.f32.mrf.mxu0
      %v1918 = vadd.f32 0.0, %v1917
      %1919 = vmatmul.f32.gmra.mxu0 %v891
      %v1920 = vpop.f32.mrf.mxu0
      %v1921 = vadd.f32 0.0, %v1920
      %1922 = vmatmul.f32.gmra.mxu0 %v893
      %v1923 = vpop.f32.mrf.mxu0
      %v1924 = vadd.f32 0.0, %v1923
      %1925 = vmatmul.f32.gmra.mxu0 %v895
      %v1926 = vpop.f32.mrf.mxu0
      %v1927 = vadd.f32 0.0, %v1926
      %1928 = vmatmul.f32.gmra.mxu0 %v897
      %v1929 = vpop.f32.mrf.mxu0
      %v1930 = vadd.f32 0.0, %v1929
      %1931 = vmatmul.f32.gmra.mxu0 %v899
      %v1932 = vpop.f32.mrf.mxu0
      %v1933 = vadd.f32 0.0, %v1932
      %1934 = vmatmul.f32.gmra.mxu0 %v901
      %v1935 = vpop.f32.mrf.mxu0
      %v1936 = vadd.f32 0.0, %v1935
      %1937 = vmatmul.f32.gmra.mxu0 %v903
      %v1938 = vpop.f32.mrf.mxu0
      %v1939 = vadd.f32 0.0, %v1938
      %1940 = vmatmul.f32.gmra.mxu0 %v905
      %v1941 = vpop.f32.mrf.mxu0
      %v1942 = vadd.f32 0.0, %v1941
      %1943 = vmatmul.f32.gmra.mxu0 %v907
      %v1944 = vpop.f32.mrf.mxu0
      %v1945 = vadd.f32 0.0, %v1944
      %1946 = vmatmul.f32.gmra.mxu0 %v909
      %v1947 = vpop.f32.mrf.mxu0
      %v1948 = vadd.f32 0.0, %v1947
      %1949 = vmatmul.f32.gmra.mxu0 %v911
      %v1950 = vpop.f32.mrf.mxu0
      %v1951 = vadd.f32 0.0, %v1950
      %1952 = vmatmul.f32.gmra.mxu0 %v913
      %v1953 = vpop.f32.mrf.mxu0
      %v1954 = vadd.f32 0.0, %v1953
      %1955 = vmatmul.f32.gmra.mxu0 %v915
      %v1956 = vpop.f32.mrf.mxu0
      %v1957 = vadd.f32 0.0, %v1956
      %1958 = vmatmul.f32.gmra.mxu0 %v1382
      %v1959 = vpop.f32.mrf.mxu0
      %v1960 = vadd.f32 0.0, %v1959
      %1961 = vmatmul.f32.gmra.mxu0 %v1384
      %v1962 = vpop.f32.mrf.mxu0
      %v1963 = vadd.f32 0.0, %v1962
      %1964 = vmatmul.f32.gmra.mxu0 %v1851
      %v1965 = vpop.f32.mrf.mxu0
      %v1966 = vadd.f32 0.0, %v1965
      %1967 = vmatmul.f32.gmra.mxu0 %v1853
      %v1968 = vpop.f32.mrf.mxu0
      %v1969 = vadd.f32 0.0, %v1968
      %1970 = vdwg.mxu0
      %v1971 = vadd.f32 %v1814, %v1876
      %v1972 = vadd.f32 %v1815, %v1879
      %v1973 = vadd.f32 %v1816, %v1882
      %v1974 = vadd.f32 %v1817, %v1885
      %v1975 = vadd.f32 %v1818, %v1888
      %v1976 = vadd.f32 %v1819, %v1891
      %v1977 = vadd.f32 %v1820, %v1894
      %v1978 = vadd.f32 %v1821, %v1897
      %v1979 = vadd.f32 %v1822, %v1900
      %v1980 = vadd.f32 %v1823, %v1903
      %v1981 = vadd.f32 %v1824, %v1906
      %v1982 = vadd.f32 %v1825, %v1909
      %v1983 = vadd.f32 %v1826, %v1912
      %v1984 = vadd.f32 %v1827, %v1915
      %v1985 = vadd.f32 %v1828, %v1918
      %v1986 = vadd.f32 %v1829, %v1921
      %v1987 = vadd.f32 %v1830, %v1924
      %v1988 = vadd.f32 %v1831, %v1927
      %v1989 = vadd.f32 %v1832, %v1930
      %v1990 = vadd.f32 %v1833, %v1933
      %v1991 = vadd.f32 %v1834, %v1936
      %v1992 = vadd.f32 %v1835, %v1939
      %v1993 = vadd.f32 %v1836, %v1942
      %v1994 = vadd.f32 %v1837, %v1945
      %v1995 = vadd.f32 %v1838, %v1948
      %v1996 = vadd.f32 %v1839, %v1951
      %v1997 = vadd.f32 %v1840, %v1954
      %v1998 = vadd.f32 %v1841, %v1957
      %v1999 = vadd.f32 %v1842, %v1960
      %v2000 = vadd.f32 %v1843, %v1963
      %v2001 = vadd.f32 %v1844, %v1966
      %v2002 = vadd.f32 %v1845, %v1969
      %v2003 = vsel %vm410, %v1971, 0.0
      %v2004 = vsel %vm410, %v1972, 0.0
      %v2005 = vadd.f32 %v2003, %v2004
      %v2006 = vsel %vm410, %v1973, 0.0
      %v2007 = vadd.f32 %v2005, %v2006
      %v2008 = vsel %vm410, %v1974, 0.0
      %v2009 = vadd.f32 %v2007, %v2008
      %v2010 = vsel %vm410, %v1975, 0.0
      %v2011 = vadd.f32 %v2009, %v2010
      %v2012 = vsel %vm410, %v1976, 0.0
      %v2013 = vadd.f32 %v2011, %v2012
      %v2014 = vsel %vm410, %v1977, 0.0
      %v2015 = vadd.f32 %v2013, %v2014
      %v2016 = vsel %vm410, %v1978, 0.0
      %v2017 = vadd.f32 %v2015, %v2016
      %v2018 = vsel %vm410, %v1979, 0.0
      %v2019 = vadd.f32 %v2017, %v2018
      %v2020 = vsel %vm410, %v1980, 0.0
      %v2021 = vadd.f32 %v2019, %v2020
      %v2022 = vsel %vm410, %v1981, 0.0
      %v2023 = vadd.f32 %v2021, %v2022
      %v2024 = vsel %vm410, %v1982, 0.0
      %v2025 = vadd.f32 %v2023, %v2024
      %v2026 = vsel %vm410, %v1983, 0.0
      %v2027 = vadd.f32 %v2025, %v2026
      %v2028 = vsel %vm410, %v1984, 0.0
      %v2029 = vadd.f32 %v2027, %v2028
      %v2030 = vsel %vm410, %v1985, 0.0
      %v2031 = vadd.f32 %v2029, %v2030
      %v2032 = vsel %vm410, %v1986, 0.0
      %v2033 = vadd.f32 %v2031, %v2032
      %v2034 = vsel %vm410, %v1987, 0.0
      %v2035 = vadd.f32 %v2033, %v2034
      %v2036 = vsel %vm410, %v1988, 0.0
      %v2037 = vadd.f32 %v2035, %v2036
      %v2038 = vsel %vm410, %v1989, 0.0
      %v2039 = vadd.f32 %v2037, %v2038
      %v2040 = vsel %vm410, %v1990, 0.0
      %v2041 = vadd.f32 %v2039, %v2040
      %v2042 = vsel %vm410, %v1991, 0.0
      %v2043 = vadd.f32 %v2041, %v2042
      %v2044 = vsel %vm410, %v1992, 0.0
      %v2045 = vadd.f32 %v2043, %v2044
      %v2046 = vsel %vm410, %v1993, 0.0
      %v2047 = vadd.f32 %v2045, %v2046
      %v2048 = vsel %vm410, %v1994, 0.0
      %v2049 = vadd.f32 %v2047, %v2048
      %v2050 = vsel %vm410, %v1995, 0.0
      %v2051 = vadd.f32 %v2049, %v2050
      %v2052 = vsel %vm410, %v1996, 0.0
      %v2053 = vadd.f32 %v2051, %v2052
      %v2054 = vsel %vm410, %v1997, 0.0
      %v2055 = vadd.f32 %v2053, %v2054
      %v2056 = vsel %vm410, %v1998, 0.0
      %v2057 = vadd.f32 %v2055, %v2056
      %v2058 = vsel %vm410, %v1999, 0.0
      %v2059 = vadd.f32 %v2057, %v2058
      %v2060 = vsel %vm410, %v2000, 0.0
      %v2061 = vadd.f32 %v2059, %v2060
      %v2062 = vsel %vm410, %v2001, 0.0
      %v2063 = vadd.f32 %v2061, %v2062
      %v2064 = vsel %vm410, %v2002, 0.0
      %v2065 = vadd.f32 %v2063, %v2064
      %v2066 = vrot.slane %v2065, 4
      %v2067 = vadd.f32 %v2065, %v2066
      %v2068 = vrot.slane %v2067, 2
      %v2069 = vadd.f32 %v2067, %v2068
      %v2070 = vrot.slane %v2069, 1
      %v2071 = vadd.f32 %v2069, %v2070
      %v2072 = vrcp.pop 256.0
      %v2073 = vmul.f32 256.0, %v2072
      %v2074 = vsub.f32 1.0, %v2073
      %v2075 = vmul.f32 %v2072, %v2074
      %v2076 = vadd.f32 %v2072, %v2075
      %vm2077 = vweird.f32 %v2072
      %v2078 = vsel %vm2077, %v2072, %v2076
      %v2079 = vmul.f32 %v2071, %v2078
      %v2080 = vsub.f32 %v1971, %v2079
      %v2081 = vsub.f32 %v1972, %v2079
      %v2082 = vsub.f32 %v1973, %v2079
      %v2083 = vsub.f32 %v1974, %v2079
      %v2084 = vsub.f32 %v1975, %v2079
      %v2085 = vsub.f32 %v1976, %v2079
      %v2086 = vsub.f32 %v1977, %v2079
      %v2087 = vsub.f32 %v1978, %v2079
      %v2088 = vsub.f32 %v1979, %v2079
      %v2089 = vsub.f32 %v1980, %v2079
      %v2090 = vsub.f32 %v1981, %v2079
      %v2091 = vsub.f32 %v1982, %v2079
      %v2092 = vsub.f32 %v1983, %v2079
      %v2093 = vsub.f32 %v1984, %v2079
      %v2094 = vsub.f32 %v1985, %v2079
      %v2095 = vsub.f32 %v1986, %v2079
      %v2096 = vsub.f32 %v1987, %v2079
      %v2097 = vsub.f32 %v1988, %v2079
      %v2098 = vsub.f32 %v1989, %v2079
      %v2099 = vsub.f32 %v1990, %v2079
      %v2100 = vsub.f32 %v1991, %v2079
      %v2101 = vsub.f32 %v1992, %v2079
      %v2102 = vsub.f32 %v1993, %v2079
      %v2103 = vsub.f32 %v1994, %v2079
      %v2104 = vsub.f32 %v1995, %v2079
      %v2105 = vsub.f32 %v1996, %v2079
      %v2106 = vsub.f32 %v1997, %v2079
      %v2107 = vsub.f32 %v1998, %v2079
      %v2108 = vsub.f32 %v1999, %v2079
      %v2109 = vsub.f32 %v2000, %v2079
      %v2110 = vsub.f32 %v2001, %v2079
      %v2111 = vsub.f32 %v2002, %v2079
      %v2112 = vmul.f32 %v2080, %v2080
      %v2113 = vmul.f32 %v2081, %v2081
      %v2114 = vmul.f32 %v2082, %v2082
      %v2115 = vmul.f32 %v2083, %v2083
      %v2116 = vmul.f32 %v2084, %v2084
      %v2117 = vmul.f32 %v2085, %v2085
      %v2118 = vmul.f32 %v2086, %v2086
      %v2119 = vmul.f32 %v2087, %v2087
      %v2120 = vmul.f32 %v2088, %v2088
      %v2121 = vmul.f32 %v2089, %v2089
      %v2122 = vmul.f32 %v2090, %v2090
      %v2123 = vmul.f32 %v2091, %v2091
      %v2124 = vmul.f32 %v2092, %v2092
      %v2125 = vmul.f32 %v2093, %v2093
      %v2126 = vmul.f32 %v2094, %v2094
      %v2127 = vmul.f32 %v2095, %v2095
      %v2128 = vmul.f32 %v2096, %v2096
      %v2129 = vmul.f32 %v2097, %v2097
      %v2130 = vmul.f32 %v2098, %v2098
      %v2131 = vmul.f32 %v2099, %v2099
      %v2132 = vmul.f32 %v2100, %v2100
      %v2133 = vmul.f32 %v2101, %v2101
      %v2134 = vmul.f32 %v2102, %v2102
      %v2135 = vmul.f32 %v2103, %v2103
      %v2136 = vmul.f32 %v2104, %v2104
      %v2137 = vmul.f32 %v2105, %v2105
      %v2138 = vmul.f32 %v2106, %v2106
      %v2139 = vmul.f32 %v2107, %v2107
      %v2140 = vmul.f32 %v2108, %v2108
      %v2141 = vmul.f32 %v2109, %v2109
      %v2142 = vmul.f32 %v2110, %v2110
      %v2143 = vmul.f32 %v2111, %v2111
      %v2144 = vsel %vm410, %v2112, 0.0
      %v2145 = vsel %vm410, %v2113, 0.0
      %v2146 = vadd.f32 %v2144, %v2145
      %v2147 = vsel %vm410, %v2114, 0.0
      %v2148 = vadd.f32 %v2146, %v2147
      %v2149 = vsel %vm410, %v2115, 0.0
      %v2150 = vadd.f32 %v2148, %v2149
      %v2151 = vsel %vm410, %v2116, 0.0
      %v2152 = vadd.f32 %v2150, %v2151
      %v2153 = vsel %vm410, %v2117, 0.0
      %v2154 = vadd.f32 %v2152, %v2153
      %v2155 = vsel %vm410, %v2118, 0.0
      %v2156 = vadd.f32 %v2154, %v2155
      %v2157 = vsel %vm410, %v2119, 0.0
      %v2158 = vadd.f32 %v2156, %v2157
      %v2159 = vsel %vm410, %v2120, 0.0
      %v2160 = vadd.f32 %v2158, %v2159
      %v2161 = vsel %vm410, %v2121, 0.0
      %v2162 = vadd.f32 %v2160, %v2161
      %v2163 = vsel %vm410, %v2122, 0.0
      %v2164 = vadd.f32 %v2162, %v2163
      %v2165 = vsel %vm410, %v2123, 0.0
      %v2166 = vadd.f32 %v2164, %v2165
      %v2167 = vsel %vm410, %v2124, 0.0
      %v2168 = vadd.f32 %v2166, %v2167
      %v2169 = vsel %vm410, %v2125, 0.0
      %v2170 = vadd.f32 %v2168, %v2169
      %v2171 = vsel %vm410, %v2126, 0.0
      %v2172 = vadd.f32 %v2170, %v2171
      %v2173 = vsel %vm410, %v2127, 0.0
      %v2174 = vadd.f32 %v2172, %v2173
      %v2175 = vsel %vm410, %v2128, 0.0
      %v2176 = vadd.f32 %v2174, %v2175
      %v2177 = vsel %vm410, %v2129, 0.0
      %v2178 = vadd.f32 %v2176, %v2177
      %v2179 = vsel %vm410, %v2130, 0.0
      %v2180 = vadd.f32 %v2178, %v2179
      %v2181 = vsel %vm410, %v2131, 0.0
      %v2182 = vadd.f32 %v2180, %v2181
      %v2183 = vsel %vm410, %v2132, 0.0
      %v2184 = vadd.f32 %v2182, %v2183
      %v2185 = vsel %vm410, %v2133, 0.0
      %v2186 = vadd.f32 %v2184, %v2185
      %v2187 = vsel %vm410, %v2134, 0.0
      %v2188 = vadd.f32 %v2186, %v2187
      %v2189 = vsel %vm410, %v2135, 0.0
      %v2190 = vadd.f32 %v2188, %v2189
      %v2191 = vsel %vm410, %v2136, 0.0
      %v2192 = vadd.f32 %v2190, %v2191
      %v2193 = vsel %vm410, %v2137, 0.0
      %v2194 = vadd.f32 %v2192, %v2193
      %v2195 = vsel %vm410, %v2138, 0.0
      %v2196 = vadd.f32 %v2194, %v2195
      %v2197 = vsel %vm410, %v2139, 0.0
      %v2198 = vadd.f32 %v2196, %v2197
      %v2199 = vsel %vm410, %v2140, 0.0
      %v2200 = vadd.f32 %v2198, %v2199
      %v2201 = vsel %vm410, %v2141, 0.0
      %v2202 = vadd.f32 %v2200, %v2201
      %v2203 = vsel %vm410, %v2142, 0.0
      %v2204 = vadd.f32 %v2202, %v2203
      %v2205 = vsel %vm410, %v2143, 0.0
      %v2206 = vadd.f32 %v2204, %v2205
      %v2207 = vrot.slane %v2206, 4
      %v2208 = vadd.f32 %v2206, %v2207
      %v2209 = vrot.slane %v2208, 2
      %v2210 = vadd.f32 %v2208, %v2209
      %v2211 = vrot.slane %v2210, 1
      %v2212 = vadd.f32 %v2210, %v2211
      %v2213 = vmul.f32 %v2212, %v2078
      %v2214 = vadd.f32 %v2213, 1e-05
      %v2215 = vrsqrt.pop %v2214
      %v2216 = vmul.f32 %v2215, %v2214
      %v2217 = vmul.f32 %v2216, %v2215
      %v2218 = vmul.f32 0.5, %v2217
      %v2219 = vsub.f32 1.5, %v2218
      %v2220 = vmul.f32 %v2215, %v2219
      %vm2221 = vweird.f32 %v2214
      %vm2222 = vweird.f32 %v2215
      %vm2223 = vmor %vm2221, %vm2222
      %v2224 = vsel %vm2223, %v2215, %v2220
      %v2225 = vmul.f32 %v2080, %v2224
      %v2226 = vmul.f32 %v2081, %v2224
      %v2227 = vmul.f32 %v2082, %v2224
      %v2228 = vmul.f32 %v2083, %v2224
      %v2229 = vmul.f32 %v2084, %v2224
      %v2230 = vmul.f32 %v2085, %v2224
      %v2231 = vmul.f32 %v2086, %v2224
      %v2232 = vmul.f32 %v2087, %v2224
      %v2233 = vmul.f32 %v2088, %v2224
      %v2234 = vmul.f32 %v2089, %v2224
      %v2235 = vmul.f32 %v2090, %v2224
      %v2236 = vmul.f32 %v2091, %v2224
      %v2237 = vmul.f32 %v2092, %v2224
      %v2238 = vmul.f32 %v2093, %v2224
      %v2239 = vmul.f32 %v2094, %v2224
      %v2240 = vmul.f32 %v2095, %v2224
      %v2241 = vmul.f32 %v2096, %v2224
      %v2242 = vmul.f32 %v2097, %v2224
      %v2243 = vmul.f32 %v2098, %v2224
      %v2244 = vmul.f32 %v2099, %v2224
      %v2245 = vmul.f32 %v2100, %v2224
      %v2246 = vmul.f32 %v2101, %v2224
      %v2247 = vmul.f32 %v2102, %v2224
      %v2248 = vmul.f32 %v2103, %v2224
      %v2249 = vmul.f32 %v2104, %v2224
      %v2250 = vmul.f32 %v2105, %v2224
      %v2251 = vmul.f32 %v2106, %v2224
      %v2252 = vmul.f32 %v2107, %v2224
      %v2253 = vmul.f32 %v2108, %v2224
      %v2254 = vmul.f32 %v2109, %v2224
      %v2255 = vmul.f32 %v2110, %v2224
      %v2256 = vmul.f32 %v2111, %v2224
      %v2257 = vmax.f32 %v2225, 0.0
      %v2258 = vmax.f32 %v2226, 0.0
      %v2259 = vmax.f32 %v2227, 0.0
      %v2260 = vmax.f32 %v2228, 0.0
      %v2261 = vmax.f32 %v2229, 0.0
      %v2262 = vmax.f32 %v2230, 0.0
      %v2263 = vmax.f32 %v2231, 0.0
      %v2264 = vmax.f32 %v2232, 0.0
      %v2265 = vmax.f32 %v2233, 0.0
      %v2266 = vmax.f32 %v2234, 0.0
      %v2267 = vmax.f32 %v2235, 0.0
      %v2268 = vmax.f32 %v2236, 0.0
      %v2269 = vmax.f32 %v2237, 0.0
      %v2270 = vmax.f32 %v2238, 0.0
      %v2271 = vmax.f32 %v2239, 0.0
      %v2272 = vmax.f32 %v2240, 0.0
      %v2273 = vmax.f32 %v2241, 0.0
      %v2274 = vmax.f32 %v2242, 0.0
      %v2275 = vmax.f32 %v2243, 0.0
      %v2276 = vmax.f32 %v2244, 0.0
      %v2277 = vmax.f32 %v2245, 0.0
      %v2278 = vmax.f32 %v2246, 0.0
      %v2279 = vmax.f32 %v2247, 0.0
      %v2280 = vmax.f32 %v2248, 0.0
      %v2281 = vmax.f32 %v2249, 0.0
      %v2282 = vmax.f32 %v2250, 0.0
      %v2283 = vmax.f32 %v2251, 0.0
      %v2284 = vmax.f32 %v2252, 0.0
      %v2285 = vmax.f32 %v2253, 0.0
      %v2286 = vmax.f32 %v2254, 0.0
      %v2287 = vmax.f32 %v2255, 0.0
      %v2288 = vmax.f32 %v2256, 0.0
      %v2305 = vrot.slane %v2259, 1
      %v2306 = vrot.slane %v2257, 1
      %v2307 = vrot.slane %v2261, 1
      %v2308 = vrot.slane %v2263, 1
      %v2309 = vrot.slane %v2265, 1
      %v2310 = vrot.slane %v2267, 1
      %v2311 = vrot.slane %v2269, 1
      %v2312 = vrot.slane %v2271, 1
      %v2313 = vrot.slane %v2273, 1
      %v2314 = vrot.slane %v2275, 1
      %v2315 = vrot.slane %v2277, 1
      %v2316 = vrot.slane %v2279, 1
      %v2317 = vrot.slane %v2281, 1
      %v2318 = vrot.slane %v2283, 1
      %v2319 = vrot.slane %v2285, 1
      %v2320 = vrot.slane %v2287, 1
      %vm2353 = vcmask 1040384
      %v2354 = vrot.slane %v2259, 7
      %v2355 = vrot.slane %v2260, 7
      %v2356 = vsel %vm2353, %v2354, %v2355
      %v2357 = vrot.slane %v2257, 7
      %v2358 = vrot.slane %v2258, 7
      %v2359 = vsel %vm2353, %v2357, %v2358
      %v2360 = vrot.slane %v2261, 7
      %v2361 = vrot.slane %v2262, 7
      %v2362 = vsel %vm2353, %v2360, %v2361
      %v2363 = vrot.slane %v2263, 7
      %v2364 = vrot.slane %v2264, 7
      %v2365 = vsel %vm2353, %v2363, %v2364
      %v2366 = vrot.slane %v2265, 7
      %v2367 = vrot.slane %v2266, 7
      %v2368 = vsel %vm2353, %v2366, %v2367
      %v2369 = vrot.slane %v2267, 7
      %v2370 = vrot.slane %v2268, 7
      %v2371 = vsel %vm2353, %v2369, %v2370
      %v2372 = vrot.slane %v2269, 7
      %v2373 = vrot.slane %v2270, 7
      %v2374 = vsel %vm2353, %v2372, %v2373
      %v2375 = vrot.slane %v2271, 7
      %v2376 = vrot.slane %v2272, 7
      %v2377 = vsel %vm2353, %v2375, %v2376
      %v2378 = vrot.slane %v2273, 7
      %v2379 = vrot.slane %v2274, 7
      %v2380 = vsel %vm2353, %v2378, %v2379
      %v2381 = vrot.slane %v2275, 7
      %v2382 = vrot.slane %v2276, 7
      %v2383 = vsel %vm2353, %v2381, %v2382
      %v2384 = vrot.slane %v2277, 7
      %v2385 = vrot.slane %v2278, 7
      %v2386 = vsel %vm2353, %v2384, %v2385
      %v2387 = vrot.slane %v2279, 7
      %v2388 = vrot.slane %v2280, 7
      %v2389 = vsel %vm2353, %v2387, %v2388
      %v2390 = vrot.slane %v2281, 7
      %v2391 = vrot.slane %v2282, 7
      %v2392 = vsel %vm2353, %v2390, %v2391
      %v2393 = vrot.slane %v2283, 7
      %v2394 = vrot.slane %v2284, 7
      %v2395 = vsel %vm2353, %v2393, %v2394
      %v2396 = vrot.slane %v2285, 7
      %v2397 = vrot.slane %v2286, 7
      %v2398 = vsel %vm2353, %v2396, %v2397
      %v2399 = vrot.slane %v2287, 7
      %v2400 = vrot.slane %v2288, 7
      %v2401 = vsel %vm2353, %v2399, %v2400
      %v2434 = vrot.slane %v2260, 5
      %v2435 = vrot.slane %v2258, 5
      %v2436 = vrot.slane %v2262, 5
      %v2437 = vrot.slane %v2264, 5
      %v2438 = vrot.slane %v2266, 5
      %v2439 = vrot.slane %v2268, 5
      %v2440 = vrot.slane %v2270, 5
      %v2441 = vrot.slane %v2272, 5
      %v2442 = vrot.slane %v2274, 5
      %v2443 = vrot.slane %v2276, 5
      %v2444 = vrot.slane %v2278, 5
      %v2445 = vrot.slane %v2280, 5
      %v2446 = vrot.slane %v2282, 5
      %v2447 = vrot.slane %v2284, 5
      %v2448 = vrot.slane %v2286, 5
      %v2449 = vrot.slane %v2288, 5
      %v2466 = vsel %vm2353, %v2305, %v2354
      %v2467 = vsel %vm2353, %v2306, %v2357
      %v2468 = vsel %vm2353, %v2307, %v2360
      %v2469 = vsel %vm2353, %v2308, %v2363
      %v2470 = vsel %vm2353, %v2309, %v2366
      %v2471 = vsel %vm2353, %v2310, %v2369
      %v2472 = vsel %vm2353, %v2311, %v2372
      %v2473 = vsel %vm2353, %v2312, %v2375
      %v2474 = vsel %vm2353, %v2313, %v2378
      %v2475 = vsel %vm2353, %v2314, %v2381
      %v2476 = vsel %vm2353, %v2315, %v2384
      %v2477 = vsel %vm2353, %v2316, %v2387
      %v2478 = vsel %vm2353, %v2317, %v2390
      %v2479 = vsel %vm2353, %v2318, %v2393
      %v2480 = vsel %vm2353, %v2319, %v2396
      %v2481 = vsel %vm2353, %v2320, %v2399
      %v2482 = vsel %vm2353, %v2355, %v2434
      %v2483 = vsel %vm2353, %v2358, %v2435
      %v2484 = vsel %vm2353, %v2361, %v2436
      %v2485 = vsel %vm2353, %v2364, %v2437
      %v2486 = vsel %vm2353, %v2367, %v2438
      %v2487 = vsel %vm2353, %v2370, %v2439
      %v2488 = vsel %vm2353, %v2373, %v2440
      %v2489 = vsel %vm2353, %v2376, %v2441
      %v2490 = vsel %vm2353, %v2379, %v2442
      %v2491 = vsel %vm2353, %v2382, %v2443
      %v2492 = vsel %vm2353, %v2385, %v2444
      %v2493 = vsel %vm2353, %v2388, %v2445
      %v2494 = vsel %vm2353, %v2391, %v2446
      %v2495 = vsel %vm2353, %v2394, %v2447
      %v2496 = vsel %vm2353, %v2397, %v2448
      %v2497 = vsel %vm2353, %v2400, %v2449
      %v2498 = vld [vmem:[%s3] sm:$0xf]
      %v2499 = vld [vmem:[%s3 + $0x4] sm:$0xf]
      %v2500 = vld [vmem:[%s3 + $0x8] sm:$0xf]
      %v2501 = vld [vmem:[%s3 + $0xc] sm:$0xf]
      %v2502 = vld [vmem:[%s3 + $0x10] sm:$0xf]
      %v2503 = vld [vmem:[%s3 + $0x14] sm:$0xf]
      %v2504 = vld [vmem:[%s3 + $0x18] sm:$0xf]
      %v2505 = vld [vmem:[%s3 + $0x1c] sm:$0xf]
      %v2506 = vld [vmem:[%s3 + $0x20] sm:$0xf]
      %v2537 = vrot.slane %v2466, 1
      %v2538 = vrot.slane %v2356, 1
      %v2539 = vsel %vm329, %v2537, %v2538
      %v2540 = vrot.slane %v2482, 1
      %v2541 = vsel %vm329, %v2538, %v2540
      %v2542 = vrot.slane %v2467, 1
      %v2543 = vrot.slane %v2359, 1
      %v2544 = vsel %vm329, %v2542, %v2543
      %v2545 = vrot.slane %v2483, 1
      %v2546 = vsel %vm329, %v2543, %v2545
      %v2547 = vrot.slane %v2468, 1
      %v2548 = vrot.slane %v2362, 1
      %v2549 = vsel %vm329, %v2547, %v2548
      %v2550 = vrot.slane %v2484, 1
      %v2551 = vsel %vm329, %v2548, %v2550
      %v2552 = vrot.slane %v2469, 1
      %v2553 = vrot.slane %v2365, 1
      %v2554 = vsel %vm329, %v2552, %v2553
      %v2555 = vrot.slane %v2485, 1
      %v2556 = vsel %vm329, %v2553, %v2555
      %v2557 = vrot.slane %v2470, 1
      %v2558 = vrot.slane %v2368, 1
      %v2559 = vsel %vm329, %v2557, %v2558
      %v2560 = vrot.slane %v2486, 1
      %v2561 = vsel %vm329, %v2558, %v2560
      %v2562 = vrot.slane %v2471, 1
      %v2563 = vrot.slane %v2371, 1
      %v2564 = vsel %vm329, %v2562, %v2563
      %v2565 = vrot.slane %v2487, 1
      %v2566 = vsel %vm329, %v2563, %v2565
      %v2567 = vrot.slane %v2472, 1
      %v2568 = vrot.slane %v2374, 1
      %v2569 = vsel %vm329, %v2567, %v2568
      %v2570 = vrot.slane %v2488, 1
      %v2571 = vsel %vm329, %v2568, %v2570
      %v2572 = vrot.slane %v2473, 1
      %v2573 = vrot.slane %v2377, 1
      %v2574 = vsel %vm329, %v2572, %v2573
      %v2575 = vrot.slane %v2489, 1
      %v2576 = vsel %vm329, %v2573, %v2575
      %v2577 = vrot.slane %v2474, 1
      %v2578 = vrot.slane %v2380, 1
      %v2579 = vsel %vm329, %v2577, %v2578
      %v2580 = vrot.slane %v2490, 1
      %v2581 = vsel %vm329, %v2578, %v2580
      %v2582 = vrot.slane %v2475, 1
      %v2583 = vrot.slane %v2383, 1
      %v2584 = vsel %vm329, %v2582, %v2583
      %v2585 = vrot.slane %v2491, 1
      %v2586 = vsel %vm329, %v2583, %v2585
      %v2587 = vrot.slane %v2476, 1
      %v2588 = vrot.slane %v2386, 1
      %v2589 = vsel %vm329, %v2587, %v2588
      %v2590 = vrot.slane %v2492, 1
      %v2591 = vsel %vm329, %v2588, %v2590
      %v2592 = vrot.slane %v2477, 1
      %v2593 = vrot.slane %v2389, 1
      %v2594 = vsel %vm329, %v2592, %v2593
      %v2595 = vrot.slane %v2493, 1
      %v2596 = vsel %vm329, %v2593, %v2595
      %v2597 = vrot.slane %v2478, 1
      %v2598 = vrot.slane %v2392, 1
      %v2599 = vsel %vm329, %v2597, %v2598
      %v2600 = vrot.slane %v2494, 1
      %v2601 = vsel %vm329, %v2598, %v2600
      %v2602 = vrot.slane %v2479, 1
      %v2603 = vrot.slane %v2395, 1
      %v2604 = vsel %vm329, %v2602, %v2603
      %v2605 = vrot.slane %v2495, 1
      %v2606 = vsel %vm329, %v2603, %v2605
      %v2607 = vrot.slane %v2480, 1
      %v2608 = vrot.slane %v2398, 1
      %v2609 = vsel %vm329, %v2607, %v2608
      %v2610 = vrot.slane %v2496, 1
      %v2611 = vsel %vm329, %v2608, %v2610
      %v2613 = vsel %vm410, %v2499, 0
      %v2615 = vsel %vm410, %v2539, 0
      %v2617 = vsel %vm410, %v2541, 0
      %v2619 = vsel %vm410, %v2544, 0
      %v2621 = vsel %vm410, %v2546, 0
      %v2623 = vsel %vm410, %v2549, 0
      %v2625 = vsel %vm410, %v2551, 0
      %v2627 = vsel %vm410, %v2554, 0
      %v2629 = vsel %vm410, %v2556, 0
      %v2631 = vsel %vm410, %v2559, 0
      %v2633 = vsel %vm410, %v2561, 0
      %v2635 = vsel %vm410, %v2564, 0
      %v2637 = vsel %vm410, %v2566, 0
      %v2639 = vsel %vm410, %v2569, 0
      %v2641 = vsel %vm410, %v2571, 0
      %v2643 = vsel %vm410, %v2574, 0
      %v2645 = vsel %vm410, %v2576, 0
      %v2647 = vsel %vm410, %v2579, 0
      %v2649 = vsel %vm410, %v2581, 0
      %v2651 = vsel %vm410, %v2584, 0
      %v2653 = vsel %vm410, %v2586, 0
      %v2655 = vsel %vm410, %v2589, 0
      %v2657 = vsel %vm410, %v2591, 0
      %v2659 = vsel %vm410, %v2594, 0
      %v2661 = vsel %vm410, %v2596, 0
      %v2663 = vsel %vm410, %v2599, 0
      %v2665 = vsel %vm410, %v2601, 0
      %v2667 = vsel %vm410, %v2604, 0
      %v2669 = vsel %vm410, %v2606, 0
      %v2671 = vsel %vm410, %v2609, 0
      %v2673 = vsel %vm410, %v2611, 0
      %2675 = vmatpush.xpose.msra.mxu0 %v2641
      %2676 = vmatpush.xpose.msra.mxu0 %v2639
      %2677 = vmatpush.xpose.msra.mxu0 %v2637
      %2678 = vmatpush.xpose.msra.mxu0 %v2635
      %2679 = vmatpush.xpose.msra.mxu0 %v2633
      %2680 = vmatpush.xpose.msra.mxu0 %v2631
      %2681 = vmatpush.xpose.msra.mxu0 %v2629
      %2682 = vmatpush.xpose.msra.mxu0 %v2627
      %2683 = vmatpush.xpose.msra.mxu0 %v2625
      %2684 = vmatpush.xpose.msra.mxu0 %v2623
      %2685 = vmatpush.xpose.msra.mxu0 %v2617
      %2686 = vmatpush.xpose.msra.mxu0 %v2615
      %2687 = vmatpush.xpose.msra.mxu0 %v2621
      %2688 = vmatpush.xpose.msra.mxu0 %v2619
      %2689 = vmatpush.xpose.msra.mxu0 %v2617
      %2690 = vmatpush.xpose.msra.mxu0 %v2615
      %2691 = vmatmul.f32.gmra.mxu0 %v2613
      %v2692 = vpop.f32.mrf.mxu0
      %v2693 = vadd.f32 0.0, %v2692
      %2694 = vdwg.mxu0
      %2695 = vmatpush.xpose.msra.mxu0 %v2673
      %2696 = vmatpush.xpose.msra.mxu0 %v2671
      %2697 = vmatpush.xpose.msra.mxu0 %v2669
      %2698 = vmatpush.xpose.msra.mxu0 %v2667
      %2699 = vmatpush.xpose.msra.mxu0 %v2665
      %2700 = vmatpush.xpose.msra.mxu0 %v2663
      %2701 = vmatpush.xpose.msra.mxu0 %v2661
      %2702 = vmatpush.xpose.msra.mxu0 %v2659
      %2703 = vmatpush.xpose.msra.mxu0 %v2657
      %2704 = vmatpush.xpose.msra.mxu0 %v2655
      %2705 = vmatpush.xpose.msra.mxu0 %v2653
      %2706 = vmatpush.xpose.msra.mxu0 %v2651
      %2707 = vmatpush.xpose.msra.mxu0 %v2649
      %2708 = vmatpush.xpose.msra.mxu0 %v2647
      %2709 = vmatpush.xpose.msra.mxu0 %v2645
      %2710 = vmatpush.xpose.msra.mxu0 %v2643
      %2711 = vmatmul.f32.gmra.mxu0 %v2613
      %v2712 = vpop.f32.mrf.mxu0
      %v2713 = vadd.f32 0.0, %v2712
      %2714 = vdwg.mxu0
      %v2716 = vsel %vm410, %v2498, 0
      %v2718 = vsel %vm410, %v2466, 0
      %v2720 = vsel %vm410, %v2356, 0
      %v2722 = vsel %vm410, %v2467, 0
      %v2724 = vsel %vm410, %v2359, 0
      %v2726 = vsel %vm410, %v2468, 0
      %v2728 = vsel %vm410, %v2362, 0
      %v2730 = vsel %vm410, %v2469, 0
      %v2732 = vsel %vm410, %v2365, 0
      %v2734 = vsel %vm410, %v2470, 0
      %v2736 = vsel %vm410, %v2368, 0
      %v2738 = vsel %vm410, %v2471, 0
      %v2740 = vsel %vm410, %v2371, 0
      %v2742 = vsel %vm410, %v2472, 0
      %v2744 = vsel %vm410, %v2374, 0
      %v2746 = vsel %vm410, %v2473, 0
      %v2748 = vsel %vm410, %v2377, 0
      %v2750 = vsel %vm410, %v2474, 0
      %v2752 = vsel %vm410, %v2380, 0
      %v2754 = vsel %vm410, %v2475, 0
      %v2756 = vsel %vm410, %v2383, 0
      %v2758 = vsel %vm410, %v2476, 0
      %v2760 = vsel %vm410, %v2386, 0
      %v2762 = vsel %vm410, %v2477, 0
      %v2764 = vsel %vm410, %v2389, 0
      %v2766 = vsel %vm410, %v2478, 0
      %v2768 = vsel %vm410, %v2392, 0
      %v2770 = vsel %vm410, %v2479, 0
      %v2772 = vsel %vm410, %v2395, 0
      %v2774 = vsel %vm410, %v2480, 0
      %v2776 = vsel %vm410, %v2398, 0
      %2778 = vmatpush.xpose.msra.mxu0 %v2744
      %2779 = vmatpush.xpose.msra.mxu0 %v2742
      %2780 = vmatpush.xpose.msra.mxu0 %v2740
      %2781 = vmatpush.xpose.msra.mxu0 %v2738
      %2782 = vmatpush.xpose.msra.mxu0 %v2736
      %2783 = vmatpush.xpose.msra.mxu0 %v2734
      %2784 = vmatpush.xpose.msra.mxu0 %v2732
      %2785 = vmatpush.xpose.msra.mxu0 %v2730
      %2786 = vmatpush.xpose.msra.mxu0 %v2728
      %2787 = vmatpush.xpose.msra.mxu0 %v2726
      %2788 = vmatpush.xpose.msra.mxu0 %v2720
      %2789 = vmatpush.xpose.msra.mxu0 %v2718
      %2790 = vmatpush.xpose.msra.mxu0 %v2724
      %2791 = vmatpush.xpose.msra.mxu0 %v2722
      %2792 = vmatpush.xpose.msra.mxu0 %v2720
      %2793 = vmatpush.xpose.msra.mxu0 %v2718
      %2794 = vmatmul.f32.gmra.mxu0 %v2716
      %v2795 = vpop.f32.mrf.mxu0
      %v2796 = vadd.f32 %v2693, %v2795
      %2797 = vdwg.mxu0
      %2798 = vmatpush.xpose.msra.mxu0 %v2776
      %2799 = vmatpush.xpose.msra.mxu0 %v2774
      %2800 = vmatpush.xpose.msra.mxu0 %v2772
      %2801 = vmatpush.xpose.msra.mxu0 %v2770
      %2802 = vmatpush.xpose.msra.mxu0 %v2768
      %2803 = vmatpush.xpose.msra.mxu0 %v2766
      %2804 = vmatpush.xpose.msra.mxu0 %v2764
      %2805 = vmatpush.xpose.msra.mxu0 %v2762
      %2806 = vmatpush.xpose.msra.mxu0 %v2760
      %2807 = vmatpush.xpose.msra.mxu0 %v2758
      %2808 = vmatpush.xpose.msra.mxu0 %v2756
      %2809 = vmatpush.xpose.msra.mxu0 %v2754
      %2810 = vmatpush.xpose.msra.mxu0 %v2752
      %2811 = vmatpush.xpose.msra.mxu0 %v2750
      %2812 = vmatpush.xpose.msra.mxu0 %v2748
      %2813 = vmatpush.xpose.msra.mxu0 %v2746
      %2814 = vmatmul.f32.gmra.mxu0 %v2716
      %v2815 = vpop.f32.mrf.mxu0
      %v2816 = vadd.f32 %v2713, %v2815
      %2817 = vdwg.mxu0
      %v2818 = vrot.slane %v2466, 2
      %v2819 = vrot.slane %v2356, 2
      %v2820 = vsel %vm772, %v2818, %v2819
      %v2821 = vrot.slane %v2482, 2
      %v2822 = vsel %vm772, %v2819, %v2821
      %v2823 = vrot.slane %v2467, 2
      %v2824 = vrot.slane %v2359, 2
      %v2825 = vsel %vm772, %v2823, %v2824
      %v2826 = vrot.slane %v2483, 2
      %v2827 = vsel %vm772, %v2824, %v2826
      %v2828 = vrot.slane %v2468, 2
      %v2829 = vrot.slane %v2362, 2
      %v2830 = vsel %vm772, %v2828, %v2829
      %v2831 = vrot.slane %v2484, 2
      %v2832 = vsel %vm772, %v2829, %v2831
      %v2833 = vrot.slane %v2469, 2
      %v2834 = vrot.slane %v2365, 2
      %v2835 = vsel %vm772, %v2833, %v2834
      %v2836 = vrot.slane %v2485, 2
      %v2837 = vsel %vm772, %v2834, %v2836
      %v2838 = vrot.slane %v2470, 2
      %v2839 = vrot.slane %v2368, 2
      %v2840 = vsel %vm772, %v2838, %v2839
      %v2841 = vrot.slane %v2486, 2
      %v2842 = vsel %vm772, %v2839, %v2841
      %v2843 = vrot.slane %v2471, 2
      %v2844 = vrot.slane %v2371, 2
      %v2845 = vsel %vm772, %v2843, %v2844
      %v2846 = vrot.slane %v2487, 2
      %v2847 = vsel %vm772, %v2844, %v2846
      %v2848 = vrot.slane %v2472, 2
      %v2849 = vrot.slane %v2374, 2
      %v2850 = vsel %vm772, %v2848, %v2849
      %v2851 = vrot.slane %v2488, 2
      %v2852 = vsel %vm772, %v2849, %v2851
      %v2853 = vrot.slane %v2473, 2
      %v2854 = vrot.slane %v2377, 2
      %v2855 = vsel %vm772, %v2853, %v2854
      %v2856 = vrot.slane %v2489, 2
      %v2857 = vsel %vm772, %v2854, %v2856
      %v2858 = vrot.slane %v2474, 2
      %v2859 = vrot.slane %v2380, 2
      %v2860 = vsel %vm772, %v2858, %v2859
      %v2861 = vrot.slane %v2490, 2
      %v2862 = vsel %vm772, %v2859, %v2861
      %v2863 = vrot.slane %v2475, 2
      %v2864 = vrot.slane %v2383, 2
      %v2865 = vsel %vm772, %v2863, %v2864
      %v2866 = vrot.slane %v2491, 2
      %v2867 = vsel %vm772, %v2864, %v2866
      %v2868 = vrot.slane %v2476, 2
      %v2869 = vrot.slane %v2386, 2
      %v2870 = vsel %vm772, %v2868, %v2869
      %v2871 = vrot.slane %v2492, 2
      %v2872 = vsel %vm772, %v2869, %v2871
      %v2873 = vrot.slane %v2477, 2
      %v2874 = vrot.slane %v2389, 2
      %v2875 = vsel %vm772, %v2873, %v2874
      %v2876 = vrot.slane %v2493, 2
      %v2877 = vsel %vm772, %v2874, %v2876
      %v2878 = vrot.slane %v2478, 2
      %v2879 = vrot.slane %v2392, 2
      %v2880 = vsel %vm772, %v2878, %v2879
      %v2881 = vrot.slane %v2494, 2
      %v2882 = vsel %vm772, %v2879, %v2881
      %v2883 = vrot.slane %v2479, 2
      %v2884 = vrot.slane %v2395, 2
      %v2885 = vsel %vm772, %v2883, %v2884
      %v2886 = vrot.slane %v2495, 2
      %v2887 = vsel %vm772, %v2884, %v2886
      %v2888 = vrot.slane %v2480, 2
      %v2889 = vrot.slane %v2398, 2
      %v2890 = vsel %vm772, %v2888, %v2889
      %v2891 = vrot.slane %v2496, 2
      %v2892 = vsel %vm772, %v2889, %v2891
      %v2894 = vsel %vm410, %v2500, 0
      %v2896 = vsel %vm410, %v2820, 0
      %v2898 = vsel %vm410, %v2822, 0
      %v2900 = vsel %vm410, %v2825, 0
      %v2902 = vsel %vm410, %v2827, 0
      %v2904 = vsel %vm410, %v2830, 0
      %v2906 = vsel %vm410, %v2832, 0
      %v2908 = vsel %vm410, %v2835, 0
      %v2910 = vsel %vm410, %v2837, 0
      %v2912 = vsel %vm410, %v2840, 0
      %v2914 = vsel %vm410, %v2842, 0
      %v2916 = vsel %vm410, %v2845, 0
      %v2918 = vsel %vm410, %v2847, 0
      %v2920 = vsel %vm410, %v2850, 0
      %v2922 = vsel %vm410, %v2852, 0
      %v2924 = vsel %vm410, %v2855, 0
      %v2926 = vsel %vm410, %v2857, 0
      %v2928 = vsel %vm410, %v2860, 0
      %v2930 = vsel %vm410, %v2862, 0
      %v2932 = vsel %vm410, %v2865, 0
      %v2934 = vsel %vm410, %v2867, 0
      %v2936 = vsel %vm410, %v2870, 0
      %v2938 = vsel %vm410, %v2872, 0
      %v2940 = vsel %vm410, %v2875, 0
      %v2942 = vsel %vm410, %v2877, 0
      %v2944 = vsel %vm410, %v2880, 0
      %v2946 = vsel %vm410, %v2882, 0
      %v2948 = vsel %vm410, %v2885, 0
      %v2950 = vsel %vm410, %v2887, 0
      %v2952 = vsel %vm410, %v2890, 0
      %v2954 = vsel %vm410, %v2892, 0
      %2956 = vmatpush.xpose.msra.mxu0 %v2922
      %2957 = vmatpush.xpose.msra.mxu0 %v2920
      %2958 = vmatpush.xpose.msra.mxu0 %v2918
      %2959 = vmatpush.xpose.msra.mxu0 %v2916
      %2960 = vmatpush.xpose.msra.mxu0 %v2914
      %2961 = vmatpush.xpose.msra.mxu0 %v2912
      %2962 = vmatpush.xpose.msra.mxu0 %v2910
      %2963 = vmatpush.xpose.msra.mxu0 %v2908
      %2964 = vmatpush.xpose.msra.mxu0 %v2906
      %2965 = vmatpush.xpose.msra.mxu0 %v2904
      %2966 = vmatpush.xpose.msra.mxu0 %v2898
      %2967 = vmatpush.xpose.msra.mxu0 %v2896
      %2968 = vmatpush.xpose.msra.mxu0 %v2902
      %2969 = vmatpush.xpose.msra.mxu0 %v2900
      %2970 = vmatpush.xpose.msra.mxu0 %v2898
      %2971 = vmatpush.xpose.msra.mxu0 %v2896
      %2972 = vmatmul.f32.gmra.mxu0 %v2894
      %v2973 = vpop.f32.mrf.mxu0
      %v2974 = vadd.f32 0.0, %v2973
      %2975 = vdwg.mxu0
      %2976 = vmatpush.xpose.msra.mxu0 %v2954
      %2977 = vmatpush.xpose.msra.mxu0 %v2952
      %2978 = vmatpush.xpose.msra.mxu0 %v2950
      %2979 = vmatpush.xpose.msra.mxu0 %v2948
      %2980 = vmatpush.xpose.msra.mxu0 %v2946
      %2981 = vmatpush.xpose.msra.mxu0 %v2944
      %2982 = vmatpush.xpose.msra.mxu0 %v2942
      %2983 = vmatpush.xpose.msra.mxu0 %v2940
      %2984 = vmatpush.xpose.msra.mxu0 %v2938
      %2985 = vmatpush.xpose.msra.mxu0 %v2936
      %2986 = vmatpush.xpose.msra.mxu0 %v2934
      %2987 = vmatpush.xpose.msra.mxu0 %v2932
      %2988 = vmatpush.xpose.msra.mxu0 %v2930
      %2989 = vmatpush.xpose.msra.mxu0 %v2928
      %2990 = vmatpush.xpose.msra.mxu0 %v2926
      %2991 = vmatpush.xpose.msra.mxu0 %v2924
      %2992 = vmatmul.f32.gmra.mxu0 %v2894
      %v2993 = vpop.f32.mrf.mxu0
      %v2994 = vadd.f32 0.0, %v2993
      %2995 = vdwg.mxu0
      %v2996 = vadd.f32 %v2796, %v2974
      %v2997 = vadd.f32 %v2816, %v2994
      %v2999 = vsel %vm410, %v2501, 0
      %v3002 = vsel %vm410, %v2481, 0
      %v3004 = vsel %vm410, %v2401, 0
      %3006 = vmatpush.xpose.msra.mxu0 %v2748
      %3007 = vmatpush.xpose.msra.mxu0 %v2746
      %3008 = vmatpush.xpose.msra.mxu0 %v2744
      %3009 = vmatpush.xpose.msra.mxu0 %v2742
      %3010 = vmatpush.xpose.msra.mxu0 %v2740
      %3011 = vmatpush.xpose.msra.mxu0 %v2738
      %3012 = vmatpush.xpose.msra.mxu0 %v2736
      %3013 = vmatpush.xpose.msra.mxu0 %v2734
      %3014 = vmatpush.xpose.msra.mxu0 %v2732
      %3015 = vmatpush.xpose.msra.mxu0 %v2730
      %3016 = vmatpush.xpose.msra.mxu0 %v2728
      %3017 = vmatpush.xpose.msra.mxu0 %v2726
      %3018 = vmatpush.xpose.msra.mxu0 %v2720
      %3019 = vmatpush.xpose.msra.mxu0 %v2718
      %3020 = vmatpush.xpose.msra.mxu0 %v2724
      %3021 = vmatpush.xpose.msra.mxu0 %v2722
      %3022 = vmatmul.f32.gmra.mxu0 %v2999
      %v3023 = vpop.f32.mrf.mxu0
      %v3024 = vadd.f32 0.0, %v3023
      %3025 = vdwg.mxu0
      %3026 = vmatpush.xpose.msra.mxu0 %v3004
      %3027 = vmatpush.xpose.msra.mxu0 %v3002
      %3028 = vmatpush.xpose.msra.mxu0 %v2776
      %3029 = vmatpush.xpose.msra.mxu0 %v2774
      %3030 = vmatpush.xpose.msra.mxu0 %v2772
      %3031 = vmatpush.xpose.msra.mxu0 %v2770
      %3032 = vmatpush.xpose.msra.mxu0 %v2768
      %3033 = vmatpush.xpose.msra.mxu0 %v2766
      %3034 = vmatpush.xpose.msra.mxu0 %v2764
      %3035 = vmatpush.xpose.msra.mxu0 %v2762
      %3036 = vmatpush.xpose.msra.mxu0 %v2760
      %3037 = vmatpush.xpose.msra.mxu0 %v2758
      %3038 = vmatpush.xpose.msra.mxu0 %v2756
      %3039 = vmatpush.xpose.msra.mxu0 %v2754
      %3040 = vmatpush.xpose.msra.mxu0 %v2752
      %3041 = vmatpush.xpose.msra.mxu0 %v2750
      %3042 = vmatmul.f32.gmra.mxu0 %v2999
      %v3043 = vpop.f32.mrf.mxu0
      %v3044 = vadd.f32 0.0, %v3043
      %3045 = vdwg.mxu0
      %v3046 = vadd.f32 %v2996, %v3024
      %v3047 = vadd.f32 %v2997, %v3044
      %v3049 = vrot.slane %v2481, 1
      %v3050 = vrot.slane %v2401, 1
      %v3051 = vsel %vm329, %v3049, %v3050
      %v3052 = vrot.slane %v2497, 1
      %v3053 = vsel %vm329, %v3050, %v3052
      %v3055 = vsel %vm410, %v2502, 0
      %v3057 = vsel %vm410, %v3051, 0
      %v3059 = vsel %vm410, %v3053, 0
      %3061 = vmatpush.xpose.msra.mxu0 %v2645
      %3062 = vmatpush.xpose.msra.mxu0 %v2643
      %3063 = vmatpush.xpose.msra.mxu0 %v2641
      %3064 = vmatpush.xpose.msra.mxu0 %v2639
      %3065 = vmatpush.xpose.msra.mxu0 %v2637
      %3066 = vmatpush.xpose.msra.mxu0 %v2635
      %3067 = vmatpush.xpose.msra.mxu0 %v2633
      %3068 = vmatpush.xpose.msra.mxu0 %v2631
      %3069 = vmatpush.xpose.msra.mxu0 %v2629
      %3070 = vmatpush.xpose.msra.mxu0 %v2627
      %3071 = vmatpush.xpose.msra.mxu0 %v2625
      %3072 = vmatpush.xpose.msra.mxu0 %v2623
      %3073 = vmatpush.xpose.msra.mxu0 %v2617
      %3074 = vmatpush.xpose.msra.mxu0 %v2615
      %3075 = vmatpush.xpose.msra.mxu0 %v2621
      %3076 = vmatpush.xpose.msra.mxu0 %v2619
      %3077 = vmatmul.f32.gmra.mxu0 %v3055
      %v3078 = vpop.f32.mrf.mxu0
      %v3079 = vadd.f32 0.0, %v3078
      %3080 = vdwg.mxu0
      %3081 = vmatpush.xpose.msra.mxu0 %v3059
      %3082 = vmatpush.xpose.msra.mxu0 %v3057
      %3083 = vmatpush.xpose.msra.mxu0 %v2673
      %3084 = vmatpush.xpose.msra.mxu0 %v2671
      %3085 = vmatpush.xpose.msra.mxu0 %v2669
      %3086 = vmatpush.xpose.msra.mxu0 %v2667
      %3087 = vmatpush.xpose.msra.mxu0 %v2665
      %3088 = vmatpush.xpose.msra.mxu0 %v2663
      %3089 = vmatpush.xpose.msra.mxu0 %v2661
      %3090 = vmatpush.xpose.msra.mxu0 %v2659
      %3091 = vmatpush.xpose.msra.mxu0 %v2657
      %3092 = vmatpush.xpose.msra.mxu0 %v2655
      %3093 = vmatpush.xpose.msra.mxu0 %v2653
      %3094 = vmatpush.xpose.msra.mxu0 %v2651
      %3095 = vmatpush.xpose.msra.mxu0 %v2649
      %3096 = vmatpush.xpose.msra.mxu0 %v2647
      %3097 = vmatmul.f32.gmra.mxu0 %v3055
      %v3098 = vpop.f32.mrf.mxu0
      %v3099 = vadd.f32 0.0, %v3098
      %3100 = vdwg.mxu0
      %v3101 = vadd.f32 %v3046, %v3079
      %v3102 = vadd.f32 %v3047, %v3099
      %v3103 = vrot.slane %v2481, 2
      %v3104 = vrot.slane %v2401, 2
      %v3105 = vsel %vm772, %v3103, %v3104
      %v3106 = vrot.slane %v2497, 2
      %v3107 = vsel %vm772, %v3104, %v3106
      %v3109 = vsel %vm410, %v2503, 0
      %v3111 = vsel %vm410, %v3105, 0
      %v3113 = vsel %vm410, %v3107, 0
      %3115 = vmatpush.xpose.msra.mxu0 %v2926
      %3116 = vmatpush.xpose.msra.mxu0 %v2924
      %3117 = vmatpush.xpose.msra.mxu0 %v2922
      %3118 = vmatpush.xpose.msra.mxu0 %v2920
      %3119 = vmatpush.xpose.msra.mxu0 %v2918
      %3120 = vmatpush.xpose.msra.mxu0 %v2916
      %3121 = vmatpush.xpose.msra.mxu0 %v2914
      %3122 = vmatpush.xpose.msra.mxu0 %v2912
      %3123 = vmatpush.xpose.msra.mxu0 %v2910
      %3124 = vmatpush.xpose.msra.mxu0 %v2908
      %3125 = vmatpush.xpose.msra.mxu0 %v2906
      %3126 = vmatpush.xpose.msra.mxu0 %v2904
      %3127 = vmatpush.xpose.msra.mxu0 %v2898
      %3128 = vmatpush.xpose.msra.mxu0 %v2896
      %3129 = vmatpush.xpose.msra.mxu0 %v2902
      %3130 = vmatpush.xpose.msra.mxu0 %v2900
      %3131 = vmatmul.f32.gmra.mxu0 %v3109
      %v3132 = vpop.f32.mrf.mxu0
      %v3133 = vadd.f32 0.0, %v3132
      %3134 = vdwg.mxu0
      %3135 = vmatpush.xpose.msra.mxu0 %v3113
      %3136 = vmatpush.xpose.msra.mxu0 %v3111
      %3137 = vmatpush.xpose.msra.mxu0 %v2954
      %3138 = vmatpush.xpose.msra.mxu0 %v2952
      %3139 = vmatpush.xpose.msra.mxu0 %v2950
      %3140 = vmatpush.xpose.msra.mxu0 %v2948
      %3141 = vmatpush.xpose.msra.mxu0 %v2946
      %3142 = vmatpush.xpose.msra.mxu0 %v2944
      %3143 = vmatpush.xpose.msra.mxu0 %v2942
      %3144 = vmatpush.xpose.msra.mxu0 %v2940
      %3145 = vmatpush.xpose.msra.mxu0 %v2938
      %3146 = vmatpush.xpose.msra.mxu0 %v2936
      %3147 = vmatpush.xpose.msra.mxu0 %v2934
      %3148 = vmatpush.xpose.msra.mxu0 %v2932
      %3149 = vmatpush.xpose.msra.mxu0 %v2930
      %3150 = vmatpush.xpose.msra.mxu0 %v2928
      %3151 = vmatmul.f32.gmra.mxu0 %v3109
      %v3152 = vpop.f32.mrf.mxu0
      %v3153 = vadd.f32 0.0, %v3152
      %3154 = vdwg.mxu0
      %v3155 = vadd.f32 %v3101, %v3133
      %v3156 = vadd.f32 %v3102, %v3153
      %v3158 = vsel %vm410, %v2504, 0
      %3160 = vmatpush.xpose.msra.mxu0 %v2752
      %3161 = vmatpush.xpose.msra.mxu0 %v2750
      %3162 = vmatpush.xpose.msra.mxu0 %v2748
      %3163 = vmatpush.xpose.msra.mxu0 %v2746
      %3164 = vmatpush.xpose.msra.mxu0 %v2744
      %3165 = vmatpush.xpose.msra.mxu0 %v2742
      %3166 = vmatpush.xpose.msra.mxu0 %v2740
      %3167 = vmatpush.xpose.msra.mxu0 %v2738
      %3168 = vmatpush.xpose.msra.mxu0 %v2736
      %3169 = vmatpush.xpose.msra.mxu0 %v2734
      %3170 = vmatpush.xpose.msra.mxu0 %v2732
      %3171 = vmatpush.xpose.msra.mxu0 %v2730
      %3172 = vmatpush.xpose.msra.mxu0 %v2728
      %3173 = vmatpush.xpose.msra.mxu0 %v2726
      %3174 = vmatpush.xpose.msra.mxu0 %v2720
      %3175 = vmatpush.xpose.msra.mxu0 %v2718
      %3176 = vmatmul.f32.gmra.mxu0 %v3158
      %v3177 = vpop.f32.mrf.mxu0
      %v3178 = vadd.f32 0.0, %v3177
      %3179 = vdwg.mxu0
      %3180 = vmatpush.xpose.msra.mxu0 %v2776
      %3181 = vmatpush.xpose.msra.mxu0 %v2774
      %3182 = vmatpush.xpose.msra.mxu0 %v3004
      %3183 = vmatpush.xpose.msra.mxu0 %v3002
      %3184 = vmatpush.xpose.msra.mxu0 %v2776
      %3185 = vmatpush.xpose.msra.mxu0 %v2774
      %3186 = vmatpush.xpose.msra.mxu0 %v2772
      %3187 = vmatpush.xpose.msra.mxu0 %v2770
      %3188 = vmatpush.xpose.msra.mxu0 %v2768
      %3189 = vmatpush.xpose.msra.mxu0 %v2766
      %3190 = vmatpush.xpose.msra.mxu0 %v2764
      %3191 = vmatpush.xpose.msra.mxu0 %v2762
      %3192 = vmatpush.xpose.msra.mxu0 %v2760
      %3193 = vmatpush.xpose.msra.mxu0 %v2758
      %3194 = vmatpush.xpose.msra.mxu0 %v2756
      %3195 = vmatpush.xpose.msra.mxu0 %v2754
      %3196 = vmatmul.f32.gmra.mxu0 %v3158
      %v3197 = vpop.f32.mrf.mxu0
      %v3198 = vadd.f32 0.0, %v3197
      %3199 = vdwg.mxu0
      %v3200 = vadd.f32 %v3155, %v3178
      %v3201 = vadd.f32 %v3156, %v3198
      %v3203 = vsel %vm410, %v2505, 0
      %3205 = vmatpush.xpose.msra.mxu0 %v2649
      %3206 = vmatpush.xpose.msra.mxu0 %v2647
      %3207 = vmatpush.xpose.msra.mxu0 %v2645
      %3208 = vmatpush.xpose.msra.mxu0 %v2643
      %3209 = vmatpush.xpose.msra.mxu0 %v2641
      %3210 = vmatpush.xpose.msra.mxu0 %v2639
      %3211 = vmatpush.xpose.msra.mxu0 %v2637
      %3212 = vmatpush.xpose.msra.mxu0 %v2635
      %3213 = vmatpush.xpose.msra.mxu0 %v2633
      %3214 = vmatpush.xpose.msra.mxu0 %v2631
      %3215 = vmatpush.xpose.msra.mxu0 %v2629
      %3216 = vmatpush.xpose.msra.mxu0 %v2627
      %3217 = vmatpush.xpose.msra.mxu0 %v2625
      %3218 = vmatpush.xpose.msra.mxu0 %v2623
      %3219 = vmatpush.xpose.msra.mxu0 %v2617
      %3220 = vmatpush.xpose.msra.mxu0 %v2615
      %3221 = vmatmul.f32.gmra.mxu0 %v3203
      %v3222 = vpop.f32.mrf.mxu0
      %v3223 = vadd.f32 0.0, %v3222
      %3224 = vdwg.mxu0
      %3225 = vmatpush.xpose.msra.mxu0 %v2673
      %3226 = vmatpush.xpose.msra.mxu0 %v2671
      %3227 = vmatpush.xpose.msra.mxu0 %v3059
      %3228 = vmatpush.xpose.msra.mxu0 %v3057
      %3229 = vmatpush.xpose.msra.mxu0 %v2673
      %3230 = vmatpush.xpose.msra.mxu0 %v2671
      %3231 = vmatpush.xpose.msra.mxu0 %v2669
      %3232 = vmatpush.xpose.msra.mxu0 %v2667
      %3233 = vmatpush.xpose.msra.mxu0 %v2665
      %3234 = vmatpush.xpose.msra.mxu0 %v2663
      %3235 = vmatpush.xpose.msra.mxu0 %v2661
      %3236 = vmatpush.xpose.msra.mxu0 %v2659
      %3237 = vmatpush.xpose.msra.mxu0 %v2657
      %3238 = vmatpush.xpose.msra.mxu0 %v2655
      %3239 = vmatpush.xpose.msra.mxu0 %v2653
      %3240 = vmatpush.xpose.msra.mxu0 %v2651
      %3241 = vmatmul.f32.gmra.mxu0 %v3203
      %v3242 = vpop.f32.mrf.mxu0
      %v3243 = vadd.f32 0.0, %v3242
      %3244 = vdwg.mxu0
      %v3245 = vadd.f32 %v3200, %v3223
      %v3246 = vadd.f32 %v3201, %v3243
      %v3248 = vsel %vm410, %v2506, 0
      %3250 = vmatpush.xpose.msra.mxu0 %v2930
      %3251 = vmatpush.xpose.msra.mxu0 %v2928
      %3252 = vmatpush.xpose.msra.mxu0 %v2926
      %3253 = vmatpush.xpose.msra.mxu0 %v2924
      %3254 = vmatpush.xpose.msra.mxu0 %v2922
      %3255 = vmatpush.xpose.msra.mxu0 %v2920
      %3256 = vmatpush.xpose.msra.mxu0 %v2918
      %3257 = vmatpush.xpose.msra.mxu0 %v2916
      %3258 = vmatpush.xpose.msra.mxu0 %v2914
      %3259 = vmatpush.xpose.msra.mxu0 %v2912
      %3260 = vmatpush.xpose.msra.mxu0 %v2910
      %3261 = vmatpush.xpose.msra.mxu0 %v2908
      %3262 = vmatpush.xpose.msra.mxu0 %v2906
      %3263 = vmatpush.xpose.msra.mxu0 %v2904
      %3264 = vmatpush.xpose.msra.mxu0 %v2898
      %3265 = vmatpush.xpose.msra.mxu0 %v2896
      %3266 = vmatmul.f32.gmra.mxu0 %v3248
      %v3267 = vpop.f32.mrf.mxu0
      %v3268 = vadd.f32 0.0, %v3267
      %3269 = vdwg.mxu0
      %3270 = vmatpush.xpose.msra.mxu0 %v2954
      %3271 = vmatpush.xpose.msra.mxu0 %v2952
      %3272 = vmatpush.xpose.msra.mxu0 %v3113
      %3273 = vmatpush.xpose.msra.mxu0 %v3111
      %3274 = vmatpush.xpose.msra.mxu0 %v2954
      %3275 = vmatpush.xpose.msra.mxu0 %v2952
      %3276 = vmatpush.xpose.msra.mxu0 %v2950
      %3277 = vmatpush.xpose.msra.mxu0 %v2948
      %3278 = vmatpush.xpose.msra.mxu0 %v2946
      %3279 = vmatpush.xpose.msra.mxu0 %v2944
      %3280 = vmatpush.xpose.msra.mxu0 %v2942
      %3281 = vmatpush.xpose.msra.mxu0 %v2940
      %3282 = vmatpush.xpose.msra.mxu0 %v2938
      %3283 = vmatpush.xpose.msra.mxu0 %v2936
      %3284 = vmatpush.xpose.msra.mxu0 %v2934
      %3285 = vmatpush.xpose.msra.mxu0 %v2932
      %3286 = vmatmul.f32.gmra.mxu0 %v3248
      %v3287 = vpop.f32.mrf.mxu0
      %v3288 = vadd.f32 0.0, %v3287
      %3289 = vdwg.mxu0
      %v3290 = vadd.f32 %v3245, %v3268
      %v3291 = vadd.f32 %v3246, %v3288
      %v3292 = vsel %vm475, %v3290, 0.0
      %v3293 = vsel %vm475, %v3291, 0.0
      %v3294 = vadd.f32 %v3292, %v3293
      %3295 = vadd.xlane.f32.xlu0 %v3294
      %v3296 = vpop.xlane.xlu0 %3295
      %v3297 = vmul.f32 %v3296, %v2078
      %v3298 = vsub.f32 %v3290, %v3297
      %v3299 = vsub.f32 %v3291, %v3297
      %v3300 = vmul.f32 %v3298, %v3298
      %v3301 = vmul.f32 %v3299, %v3299
      %v3302 = vsel %vm475, %v3300, 0.0
      %v3303 = vsel %vm475, %v3301, 0.0
      %v3304 = vadd.f32 %v3302, %v3303
      %3305 = vadd.xlane.f32.xlu0 %v3304
      %v3306 = vpop.xlane.xlu0 %3305
      %v3307 = vmul.f32 %v3306, %v2078
      %v3308 = vadd.f32 %v3307, 1e-05
      %v3309 = vrsqrt.pop %v3308
      %v3310 = vmul.f32 %v3309, %v3308
      %v3311 = vmul.f32 %v3310, %v3309
      %v3312 = vmul.f32 0.5, %v3311
      %v3313 = vsub.f32 1.5, %v3312
      %v3314 = vmul.f32 %v3309, %v3313
      %vm3315 = vweird.f32 %v3308
      %vm3316 = vweird.f32 %v3309
      %vm3317 = vmor %vm3315, %vm3316
      %v3318 = vsel %vm3317, %v3309, %v3314
      %v3319 = vmul.f32 %v3298, %v3318
      %v3320 = vmul.f32 %v3299, %v3318
      %v3321 = vld [vmem:[%s212] sm:$0xff]
      %v3324 = vrot.slane %v3320, 4
      %v3325 = vsel %vm475, %v3319, %v3324
      %v3327 = vadd.f32 %v3321, %v3325
      %3328 = vst [vmem:[%s217] sm:$0xff] %v3327
      %p3329 = scmp.lt.s32.totalorder %s15, 1
      %s3330 = scalar_select %p3329, %s15, 1
      %s3331 = smul.addr %s3330, 2
      %s3332 = smul.addr %s3331, 4
      %s3333 = scalar_lea.vmem %s4, %s3332
      // Predicated region
      $region37: #{residual_block.1} parent=35 // pred_check
        %p3334 = pneg %p127
      $region38: #{residual_block.1} parent=35 // pred_check_branch
        %3336 = sbr.rel (%p3334) target = $region40
      $region39: #{residual_block.1} parent=35 // pred_region
        _
      $region40: #{residual_block.1} parent=35 // pred_fallthru
        _
    $region36: #{residual_block.1} parent=5 // pred_fallthru
      _
    %p3337 = scmp.le.s32.totalorder 2, %s10
    // Predicated region
    $region41: #{residual_block.1} parent=5 // pred_check
      %p3338 = pneg %p3337
    $region42: #{residual_block.1} parent=5 // pred_check_branch
      %3340 = sbr.rel (%p3338) target = $region44
    $region43: #{residual_block.1} parent=5 // pred_region
      %s3341 = ssub.s32 %s10, 2
      // Predicated region
      $region45: #{residual_block.1} parent=43 // pred_check
        %p3342 = pneg %p133
      $region46: #{residual_block.1} parent=43 // pred_check_branch
        %3344 = sbr.rel (%p3342) target = $region48
      $region47: #{residual_block.1} parent=43 // pred_region
        %p3345 = scmp.lt.s32.totalorder %s16, 1
        %s3346 = scalar_select %p3345, %s16, 1
        %s3347 = smul.addr %s3346, 2
        %s3348 = smul.addr %s3347, 4
        %s3349 = scalar_lea.vmem %s4, %s3348
      $region48: #{residual_block.1} parent=43 // pred_fallthru
        _
    $region44: #{residual_block.1} parent=5 // pred_fallthru
      _
  $region6: #{residual_block.1} parent=0 // loop_footer
    %s14 = sadd.s32 1, %s10
  $region7: #{residual_block.1} parent=0 // loop_footer_branch
    %9 = sbr.rel target = $region3
  $region8: #{residual_block.1} parent=0 // loop_exit
    _

</llo_original>
